<compile_context>
chip_gen: v7x
topology: tpu7x:2x2x1
jax: 0.10.0
libtpu: 0.0.40
codegen_flags: <defaults>
</compile_context>

<pallas_src>
from functools import partial

import numpy as np
import jax
import jax.numpy as jnp
from jax import lax
from jax.experimental import pallas as pl
from jax.experimental.pallas import tpu as pltpu


# ----------------------------------------------------------------------------- #
# Pallas kernel: full bidirectional LSTM stack (all layers), single invocation
# ----------------------------------------------------------------------------- #
def _bilstm_stack_kernel(x_ref, len_ref, wih_ref, bias_ref, whh_ref,
                         h0_ref, c0_ref, out_ref,
                         gxf_sc, gxb_sc, mid_sc, fout_sc, bout_sc, h_sc, c_sc):
    """Fused multi-layer fwd+bwd LSTM.

    x_ref   : (T, B, 2H)   time-major input, features zero-padded to 2H
    len_ref : (B, 1)       int32 valid lengths (0 for batch-padding rows)
    wih_ref : (L, 2H, 16H) per-layer input weights, cols [fwd fused 8H | bwd fused 8H]
                           fused 8H layout = [i_f,i_b,f_f,f_b,o_f,o_b,g_f,g_b]
                           (the other direction's sub-columns are zero-padded)
    bias_ref: (L, 1, 8H)   combined b_ih+b_hh for both directions, fused layout
    whh_ref : (L, 2H, 8H)  block-diagonal recurrent weights (bf16), fused layout
    h0/c0   : (L, B, 2H)   initial state, cols [0:H]=forward, [H:2H]=backward
    out_ref : (T, B, 2H)   per-timestep hidden state of the LAST layer (pad -> 0)
    """
    T, B, _ = x_ref.shape
    n_layers = whh_ref.shape[0]
    H2 = h0_ref.shape[-1]                 # 2H
    H = H2 // 2
    G = 8 * H                             # fused gate width

    lengths = len_ref[...]                                    # (B, 1) int32
    col = lax.broadcasted_iota(jnp.int32, (B, H2), 1)
    is_bwd = col >= H                                         # static column mask

    for layer in range(n_layers):
        src = x_ref if layer == 0 else mid_sc
        dst = out_ref if layer == n_layers - 1 else mid_sc
        wih = wih_ref[layer]                                  # (2H, 16H) f32
        bias = bias_ref[layer]                                # (1, 8H)
        w_bf = whh_ref[layer]                                 # (2H, 8H) bf16, loaded once
        # TODO(synk): latch w_bf in the MXU weight regs across the time loop via
        # pltpu.matmul_push_rhs / matmul_acc_lhs once that path is production-safe.

        # hoisted input projection for both directions (independent of the
        # recurrence, so these matmuls pipeline; no HBM round-trip for gx)
        for t in range(T):
            g_t = jnp.dot(src[t], wih, preferred_element_type=jnp.float32)  # (B,16H)
            gxf_sc[t] = g_t[:, :G] + bias
            gxb_sc[t] = g_t[:, G:]

        h_sc[...] = h0_ref[layer]
        c_sc[...] = c0_ref[layer]

        def step(s, carry):
            sb = T - 1 - s                    # time index of the backward direction
            h_prev = h_sc[...]
            c_prev = c_sc[...]
            # single MXU matmul per step: (B,2H) x (2H,8H), f32 accumulation
            gates = (gxf_sc[s] + gxb_sc[sb]
                     + jnp.dot(h_prev.astype(jnp.bfloat16), w_bf,
                               preferred_element_type=jnp.float32))          # (B, 8H)
            # [i,f,o | g] x [fwd,bwd]: one 96-lane sigmoid + one 32-lane tanh push
            sig = jax.nn.sigmoid(gates[:, :3 * H2])
            g_g = jnp.tanh(gates[:, 3 * H2:])
            i_g = sig[:, :H2]
            f_g = sig[:, H2:2 * H2]
            o_g = sig[:, 2 * H2:]

            c_new = f_g * c_prev + i_g * g_g
            h_new = o_g * jnp.tanh(c_new)

            # packed-sequence masking: fwd half valid iff s < len, bwd iff sb < len
            t_col = jnp.where(is_bwd, sb, s)
            m = t_col < lengths                                              # (B, 2H)
            h_sc[...] = jnp.where(m, h_new, h_prev)       # freeze state on padding
            c_sc[...] = jnp.where(m, c_new, c_prev)
            fout_sc[s] = jnp.where(m[:, :H], h_new[:, :H], 0.0)   # padded steps -> 0
            bout_sc[sb] = jnp.where(m[:, H:], h_new[:, H:], 0.0)
            return carry

        lax.fori_loop(0, T, step, 0, unroll=True)

        # assemble this layer's (T, B, 2H) output once (bulk, lane-contiguous store)
        dst[...] = jnp.concatenate([fout_sc[...], bout_sc[...]], axis=-1)


def bilstm_stack(x_tm, len_col, wih, bias, whh_bf16, h0c, c0c):
    """x_tm: (T, Bp, 2H) time-major, batch/feature padded.  Returns (T, Bp, 2H)."""
    T, Bp, IN = x_tm.shape
    n_layers, _, G2 = wih.shape
    G = G2 // 2
    H2 = h0c.shape[-1]
    H = H2 // 2

    flops = int(n_layers * T * (2 * Bp * IN * G2 + 2 * Bp * H2 * G))
    transcendentals = int(n_layers * T * Bp * 10 * H)
    bytes_accessed = int(x_tm.size * 4 + len_col.size * 4 + wih.size * 4
                         + bias.size * 4 + whh_bf16.size * 2
                         + h0c.size * 4 + c0c.size * 4 + T * Bp * H2 * 4)

    return pl.pallas_call(
        _bilstm_stack_kernel,
        out_shape=jax.ShapeDtypeStruct((T, Bp, H2), jnp.float32),
        grid=(1,),
        in_specs=[
            pl.BlockSpec((T, Bp, IN), lambda i: (0, 0, 0)),
            pl.BlockSpec((Bp, 1), lambda i: (0, 0)),
            pl.BlockSpec((n_layers, IN, G2), lambda i: (0, 0, 0)),
            pl.BlockSpec((n_layers, 1, G), lambda i: (0, 0, 0)),
            pl.BlockSpec((n_layers, H2, G), lambda i: (0, 0, 0)),
            pl.BlockSpec((n_layers, Bp, H2), lambda i: (0, 0, 0)),
            pl.BlockSpec((n_layers, Bp, H2), lambda i: (0, 0, 0)),
        ],
        out_specs=pl.BlockSpec((T, Bp, H2), lambda i: (0, 0, 0)),
        scratch_shapes=[
            pltpu.VMEM((T, Bp, G), jnp.float32),     # gx fwd
            pltpu.VMEM((T, Bp, G), jnp.float32),     # gx bwd
            pltpu.VMEM((T, Bp, H2), jnp.float32),    # inter-layer activations
            pltpu.VMEM((T, Bp, H), jnp.float32),     # fwd per-step outputs
            pltpu.VMEM((T, Bp, H), jnp.float32),     # bwd per-step outputs
            pltpu.VMEM((Bp, H2), jnp.float32),       # h state
            pltpu.VMEM((Bp, H2), jnp.float32),       # c state
        ],
        compiler_params=pltpu.CompilerParams(
            dimension_semantics=("arbitrary",)),     # recurrence -> sequential
        cost_estimate=pl.CostEstimate(flops=flops,
                                      transcendentals=transcendentals,
                                      bytes_accessed=bytes_accessed),
    )(x_tm, len_col, wih, bias, whh_bf16, h0c, c0c)


# ----------------------------------------------------------------------------- #
# Glue (plain JAX): batch padding, linear, CRF
# ----------------------------------------------------------------------------- #
def get_lstm_features(x_btf, lengths, h0, c0, params, cfg):
    B, T, F = x_btf.shape
    H = cfg["hidden_dim"] // 2
    H2 = 2 * H
    assert F <= H2, "features_number must be <= hidden_dim for the fused layout"
    Bp = max(8, -(-B // 8) * 8)                           # sublane-pad the batch

    fused = params["lstm_fused"]

    # time-major input, feature-padded to 2H so both layers share one input width
    x_tm = jnp.transpose(x_btf, (1, 0, 2))                             # (T, B, F)
    x_tm = jnp.pad(x_tm, ((0, 0), (0, Bp - B), (0, H2 - F)))           # (T, Bp, 2H)
    len_col = jnp.pad(lengths.astype(jnp.int32), (0, Bp - B))[:, None]  # (Bp, 1)

    # (layer, Bp, 2H) initial state, fwd|bwd concat, batch-padded
    h0c = jnp.pad(jnp.concatenate([h0[0::2], h0[1::2]], axis=-1),
                  ((0, 0), (0, Bp - B), (0, 0)))
    c0c = jnp.pad(jnp.concatenate([c0[0::2], c0[1::2]], axis=-1),
                  ((0, 0), (0, Bp - B), (0, 0)))

    out_tm = bilstm_stack(x_tm, len_col, fused["wih"], fused["bias"],
                          fused["whh"], h0c, c0c)                      # (T, Bp, 2H)
    out = jnp.transpose(out_tm[:, :B], (1, 0, 2))                      # (B, T, 2H)
    # TODO(synk): nn.LSTM inter-layer dropout (p=0.2) is a training-time stochastic
    # op; skipped here (eval-mode semantics).

    # final Linear: N=B*T=16, O=44 — a Pallas launch costs more than the matmul,
    # so let XLA fuse it.
    feat = (jnp.dot(out.reshape(B * T, cfg["hidden_dim"]), params["linear"]["w_t"])
            + params["linear"]["b"])
    return feat.reshape(B, T, cfg["label_number"], cfg["num_tags"])


def crf_log_likelihood(emissions, tags, mask, crf):
    """torchcrf semantics, reduction='sum'. emissions (B,L,K), tags (B,L), mask (B,L).
    Assumes mask[:, 0] is all True (lengths >= 1), as torchcrf requires."""
    start_t, end_t, trans = crf["start"], crf["end"], crf["trans"]
    B, L, K = emissions.shape
    em = jnp.transpose(emissions, (1, 0, 2))          # (L, B, K)
    tg = jnp.where(mask, tags, 0).T                   # (L, B)
    mk = mask.T                                       # (L, B)
    b_idx = jnp.arange(B)

    # numerator (gold path score)
    score0 = start_t[tg[0]] + em[0, b_idx, tg[0]]

    def num_step(carry, xs):
        score, prev_tag = carry
        e_t, tag_t, m_t = xs
        s = trans[prev_tag, tag_t] + e_t[b_idx, tag_t]
        score = score + s * m_t.astype(jnp.float32)
        prev_tag = jnp.where(m_t, tag_t, prev_tag)
        return (score, prev_tag), None

    (num, last_tag), _ = lax.scan(num_step, (score0, tg[0]), (em[1:], tg[1:], mk[1:]))
    num = num + end_t[last_tag]

    # denominator (log partition)
    alpha0 = start_t[None, :] + em[0]

    def den_step(alpha, xs):
        e_t, m_t = xs
        nxt = jax.scipy.special.logsumexp(
            alpha[:, :, None] + trans[None, :, :] + e_t[:, None, :], axis=1)
        return jnp.where(m_t[:, None], nxt, alpha), None

    alpha, _ = lax.scan(den_step, alpha0, (em[1:], mk[1:]))
    den = jax.scipy.special.logsumexp(alpha + end_t[None, :], axis=1)
    return jnp.sum(num - den)


def viterbi_forward(emissions, mask, crf):
    start_t, end_t, trans = crf["start"], crf["end"], crf["trans"]
    em = jnp.transpose(emissions, (1, 0, 2))
    mk = mask.T
    score0 = start_t[None, :] + em[0]

    def step(score, xs):
        e_t, m_t = xs
        nxt = score[:, :, None] + trans[None, :, :] + e_t[:, None, :]
        best = jnp.max(nxt, axis=1)
        idx = jnp.argmax(nxt, axis=1).astype(jnp.int32)
        return jnp.where(m_t[:, None], best, score), idx

    score, history = lax.scan(step, score0, (em[1:], mk[1:]))
    score = score + end_t[None, :]
    seq_ends = jnp.sum(mask.astype(jnp.int32), axis=1) - 1
    return score, history, seq_ends


def viterbi_decode(emissions, mask, crf):
    """Device-side Viterbi decode (masked backtrace via lax.scan); only the final
    (B, L) tag table + seq_ends are transferred to the host."""
    score, history, seq_ends = viterbi_forward(emissions, mask, crf)   # (L-1,B,K)
    best_last = jnp.argmax(score, axis=-1).astype(jnp.int32)           # (B,)

    def bt_step(cur, xs):
        hist_t, m_next = xs
        prev = jnp.take_along_axis(hist_t, cur[:, None], axis=1)[:, 0]
        new = jnp.where(m_next, prev, cur).astype(jnp.int32)
        return new, new

    hist_rev = history[::-1]
    mask_next_rev = mask[:, 1:].T[::-1]
    _, tags_rev = lax.scan(bt_step, best_last, (hist_rev, mask_next_rev))
    tags_body = tags_rev[::-1]
    full = jnp.concatenate([tags_body, best_last[None, :]], axis=0)    # (L, B)
    return full.T, seq_ends


# ----------------------------------------------------------------------------- #
# Parameters (deterministic synthetic init, shapes from the nn.Module __init__)
# ----------------------------------------------------------------------------- #
def init_params(key, hidden_dim, features_number, layer_num, label_number, num_tags):
    H = hidden_dim // 2
    H2 = 2 * H
    G = 8 * H
    gate_perm = np.array([0, 1, 3, 2])            # PyTorch [i,f,g,o] -> [i,f,o,g]
    k_lstm = 1.0 / np.sqrt(H)
    keys = jax.random.split(key, 8 * layer_num + 5)
    ki = 0

    wih_l, bias_l, whh_l = [], [], []
    for layer in range(layer_num):
        in_size = features_number if layer == 0 else hidden_dim
        assert in_size <= H2
        dirs = []
        for _direction in range(2):
            w_ih = jax.random.uniform(keys[ki], (4 * H, in_size), minval=-k_lstm, maxval=k_lstm); ki += 1
            w_hh = jax.random.uniform(keys[ki], (4 * H, H), minval=-k_lstm, maxval=k_lstm); ki += 1
            b_ih = jax.random.uniform(keys[ki], (4 * H,), minval=-k_lstm, maxval=k_lstm); ki += 1
            b_hh = jax.random.uniform(keys[ki], (4 * H,), minval=-k_lstm, maxval=k_lstm); ki += 1
            dirs.append((w_ih, w_hh, b_ih + b_hh))
        (wif, whf, bf), (wib, whb, bb) = dirs

        def ih_fused(w_t, d):
            """(in, 4H) PyTorch-transposed -> (2H, 8H) fused layout, other-direction
            sub-columns and pad-feature rows zeroed."""
            n_in = w_t.shape[0]
            w4 = w_t.reshape(n_in, 4, H)[:, gate_perm, :]
            z = jnp.zeros_like(w4)
            pair = (w4, z) if d == 0 else (z, w4)
            full = jnp.stack(pair, axis=2).reshape(n_in, G)
            return jnp.pad(full, ((0, H2 - n_in), (0, 0)))

        wih_l.append(jnp.concatenate([ih_fused(wif.T, 0), ih_fused(wib.T, 1)],
                                     axis=-1))                        # (2H, 16H)

        bf4 = bf.reshape(4, H)[gate_perm]
        bb4 = bb.reshape(4, H)[gate_perm]
        bias_l.append(jnp.stack([bf4, bb4], axis=1).reshape(1, G))    # (1, 8H)

        wf4 = whf.T.reshape(H, 4, H)[:, gate_perm, :]
        wb4 = whb.T.reshape(H, 4, H)[:, gate_perm, :]
        z = jnp.zeros_like(wf4)
        top = jnp.stack([wf4, z], axis=2).reshape(H, G)               # h_f rows
        bot = jnp.stack([z, wb4], axis=2).reshape(H, G)               # h_b rows
        whh_l.append(jnp.concatenate([top, bot], axis=0))             # (2H, 8H)

    params = {"lstm_fused": {
        "wih": jnp.stack(wih_l),                          # (L, 2H, 16H) f32
        "bias": jnp.stack(bias_l),                        # (L, 1, 8H)  f32
        "whh": jnp.stack(whh_l).astype(jnp.bfloat16),     # (L, 2H, 8H) bf16
    }}

    k_lin = 1.0 / np.sqrt(hidden_dim)
    w = jax.random.uniform(keys[ki], (label_number * num_tags, hidden_dim),
                           minval=-k_lin, maxval=k_lin); ki += 1
    b = jax.random.uniform(keys[ki], (label_number * num_tags,), minval=-k_lin, maxval=k_lin); ki += 1
    params["linear"] = {"w_t": w.T, "b": b}
    params["crf"] = {
        "start": jax.random.uniform(keys[ki], (num_tags,), minval=-0.1, maxval=0.1),
        "end": jax.random.uniform(keys[ki + 1], (num_tags,), minval=-0.1, maxval=0.1),
        "trans": jax.random.uniform(keys[ki + 2], (num_tags, num_tags), minval=-0.1, maxval=0.1),
    }
    return params


# ----------------------------------------------------------------------------- #
# Full forward (mirrors BiLSTM_CRF.forward); all device work is jitted
# ----------------------------------------------------------------------------- #
@partial(jax.jit, static_argnames=("features_number", "hidden_dim", "label_number",
                                   "num_tags", "batch_size"))
def _device_forward(x_bft, y_true, lengths, h0, c0, params, *,
                    features_number, hidden_dim, label_number, num_tags, batch_size):
    B = x_bft.shape[0]
    T = x_bft.shape[2]
    cfg = dict(features_number=features_number, hidden_dim=hidden_dim,
               label_number=label_number, num_tags=num_tags, batch_size=batch_size)

    # x.permute(0, 2, 1).reshape(B, T, F)
    x_btf = jnp.transpose(x_bft, (0, 2, 1)).reshape(B, T, features_number)

    feats = get_lstm_features(x_btf, lengths, h0, c0, params, cfg)   # (B,T,label,K)
    emissions = feats.reshape(B, -1, num_tags)                       # (B, T*label, K)
    tags = y_true.reshape(B, -1).astype(jnp.int32)
    mask = tags != -1

    llh = crf_log_likelihood(emissions, tags, mask, params["crf"])
    loss = -llh / batch_size

    decoded, seq_ends = viterbi_decode(emissions, mask, params["crf"])
    return loss, decoded, seq_ends


def forward(x_bft, y_true, batch_length, params, h0, c0, cfg):
    B = len(batch_length)
    assert x_bft.shape[0] == B and x_bft.shape[2] == int(max(batch_length))

    lengths = jnp.asarray(batch_length, jnp.int32)
    loss, decoded, seq_ends = _device_forward(
        x_bft, y_true, lengths, h0, c0, params,
        features_number=cfg["features_number"], hidden_dim=cfg["hidden_dim"],
        label_number=cfg["label_number"], num_tags=cfg["num_tags"],
        batch_size=cfg["batch_size"])

    # single device->host transfer; ragged Python-list outputs (API of crf.decode)
    decoded_np = np.asarray(decoded)
    ends_np = np.asarray(seq_ends)
    y_true_np = np.asarray(y_true)

    y_t, y_p, results = [], [], []
    for i in range(B):
        _tag = y_true_np[i][:batch_length[i]].reshape(-1).tolist()
        _out = decoded_np[i, :int(ends_np[i]) + 1].tolist()
        y_t.extend(_tag)
        y_p.extend(_out)
        results.append(_tag)
        results.append(_out)
    return y_t, y_p, results, loss, ''


# ----------------------------------------------------------------------------- #
if __name__ == "__main__":
    hidden_dim = 32
    features_number = 4
    layer_num = 2
    label_number = 4
    num_tags = 11
    B = 2
    T = 8
    batch_length = [8, 6]

    cfg = dict(features_number=features_number, hidden_dim=hidden_dim,
               label_number=label_number, num_tags=num_tags, batch_size=B)

    key = jax.random.PRNGKey(0)
    k_par, k_x, k_y, k_h, k_c = jax.random.split(key, 5)
    params = init_params(k_par, hidden_dim, features_number, layer_num, label_number, num_tags)

    # layout: x is (batch, features, seq) — same as the PyTorch module's input.
    x = jax.random.normal(k_x, (B, features_number, T), jnp.float32)

    y_true = jax.random.randint(k_y, (B, T, label_number), 0, num_tags)
    lengths = jnp.asarray(batch_length, jnp.int32)
    t_idx = jnp.arange(T)[None, :, None]
    y_true = jnp.where(t_idx < lengths[:, None, None], y_true, -1).astype(jnp.int32)

    H = hidden_dim // 2
    h0 = jax.random.normal(k_h, (layer_num * 2, B, H), jnp.float32)   # init_hidden()
    c0 = jax.random.normal(k_c, (layer_num * 2, B, H), jnp.float32)

    y_t, y_p, results, loss, _ = forward(x, y_true, batch_length, params, h0, c0, cfg)
    loss = jax.block_until_ready(loss)

    expected = sum(l * label_number for l in batch_length)
    assert len(y_t) == expected and len(y_p) == expected
    assert len(results) == 2 * B
    assert np.isfinite(float(loss))
    print("KERNEL_OK")
</pallas_src>

<mosaic_0001>
module attributes {stable_mosaic.version = 11 : i64} {
  func.func @_bilstm_stack_kernel(%arg0: i32, %arg1: memref<8x8x32xf32, #tpu.memory_space<vmem>>, %arg2: memref<8x1xi32, #tpu.memory_space<vmem>>, %arg3: memref<2x32x256xf32, #tpu.memory_space<vmem>>, %arg4: memref<2x1x128xf32, #tpu.memory_space<vmem>>, %arg5: memref<2x32x128xbf16, #tpu.memory_space<vmem>>, %arg6: memref<2x8x32xf32, #tpu.memory_space<vmem>>, %arg7: memref<2x8x32xf32, #tpu.memory_space<vmem>>, %arg8: memref<8x8x32xf32, #tpu.memory_space<vmem>>, %arg9: memref<8x8x128xf32, #tpu.memory_space<vmem>>, %arg10: memref<8x8x128xf32, #tpu.memory_space<vmem>>, %arg11: memref<8x8x32xf32, #tpu.memory_space<vmem>>, %arg12: memref<8x8x16xf32, #tpu.memory_space<vmem>>, %arg13: memref<8x8x16xf32, #tpu.memory_space<vmem>>, %arg14: memref<8x32xf32, #tpu.memory_space<vmem>>, %arg15: memref<8x32xf32, #tpu.memory_space<vmem>>) attributes {dimension_semantics = [#tpu.dimension_semantics<arbitrary>], iteration_bounds = array<i64: 1>, scalar_prefetch = 0 : i64, scratch_operands = 7 : i64, tpu.core_type = #tpu.core_type<tc>, window_params = [{pipeline_mode = #tpu.pipeline_mode<synchronous>, transform_indices = @transform_0, window_bounds = array<i64: 8, 8, 32>}, {pipeline_mode = #tpu.pipeline_mode<synchronous>, transform_indices = @transform_1, window_bounds = array<i64: 8, 1>}, {pipeline_mode = #tpu.pipeline_mode<synchronous>, transform_indices = @transform_2, window_bounds = array<i64: 2, 32, 256>}, {pipeline_mode = #tpu.pipeline_mode<synchronous>, transform_indices = @transform_3, window_bounds = array<i64: 2, 1, 128>}, {pipeline_mode = #tpu.pipeline_mode<synchronous>, transform_indices = @transform_4, window_bounds = array<i64: 2, 32, 128>}, {pipeline_mode = #tpu.pipeline_mode<synchronous>, transform_indices = @transform_5, window_bounds = array<i64: 2, 8, 32>}, {pipeline_mode = #tpu.pipeline_mode<synchronous>, transform_indices = @transform_6, window_bounds = array<i64: 2, 8, 32>}, {pipeline_mode = #tpu.pipeline_mode<synchronous>, transform_indices = @transform_7, window_bounds = array<i64: 8, 8, 32>}]} {
    %c0 = arith.constant 0 : index
    %c0_0 = arith.constant 0 : index
    %0 = vector.load %arg2[%c0, %c0_0] : memref<8x1xi32, #tpu.memory_space<vmem>>, vector<8x1xi32>
    %1 = tpu.iota {dimensions = array<i32: 1>} : vector<8x32xi32>
    %c16_i32 = arith.constant 16 : i32
    %2 = vector.broadcast %c16_i32 : i32 to vector<8x32xi32>
    %3 = arith.cmpi sge, %1, %2 : vector<8x32xi32>
    %c0_1 = arith.constant 0 : index
    %c0_2 = arith.constant 0 : index
    %c0_3 = arith.constant 0 : index
    %4 = vector.load %arg3[%c0_1, %c0_2, %c0_3] : memref<2x32x256xf32, #tpu.memory_space<vmem>>, vector<1x32x256xf32>
    %5 = vector.shape_cast %4 : vector<1x32x256xf32> to vector<32x256xf32>
    %c0_4 = arith.constant 0 : index
    %c0_5 = arith.constant 0 : index
    %c0_6 = arith.constant 0 : index
    %6 = vector.load %arg4[%c0_4, %c0_5, %c0_6] : memref<2x1x128xf32, #tpu.memory_space<vmem>>, vector<1x1x128xf32>
    %7 = vector.shape_cast %6 : vector<1x1x128xf32> to vector<1x128xf32>
    %c0_7 = arith.constant 0 : index
    %c0_8 = arith.constant 0 : index
    %c0_9 = arith.constant 0 : index
    %8 = vector.load %arg5[%c0_7, %c0_8, %c0_9] : memref<2x32x128xbf16, #tpu.memory_space<vmem>>, vector<1x32x128xbf16>
    %9 = vector.shape_cast %8 : vector<1x32x128xbf16> to vector<32x128xbf16>
    %c0_10 = arith.constant 0 : index
    %c0_11 = arith.constant 0 : index
    %c0_12 = arith.constant 0 : index
    %10 = vector.load %arg1[%c0_10, %c0_11, %c0_12] : memref<8x8x32xf32, #tpu.memory_space<vmem>>, vector<1x8x32xf32>
    %11 = vector.shape_cast %10 : vector<1x8x32xf32> to vector<8x32xf32>
    %cst = arith.constant dense<0.000000e+00> : vector<8x256xf32>
    %12 = tpu.matmul %11, %5, %cst {dimension_numbers = #tpu.dot_dimension_numbers<[1], [0], [0], [1], [0, 0, 1, 1], [], []>} : vector<8x32xf32>, vector<32x256xf32>, vector<8x256xf32> -> vector<8x256xf32>
    %13 = vector.extract_strided_slice %12 {offsets = [0, 0], sizes = [8, 128], strides = [1, 1]} : vector<8x256xf32> to vector<8x128xf32>
    %14 = vector.broadcast %7 : vector<1x128xf32> to vector<8x128xf32>
    %15 = arith.addf %13, %14 : vector<8x128xf32>
    %c0_13 = arith.constant 0 : index
    %c0_14 = arith.constant 0 : index
    %c0_15 = arith.constant 0 : index
    %16 = vector.load %arg9[%c0_13, %c0_14, %c0_15] : memref<8x8x128xf32, #tpu.memory_space<vmem>>, vector<1x8x128xf32>
    %17 = vector.shape_cast %16 : vector<1x8x128xf32> to vector<8x128xf32>
    %18 = vector.shape_cast %15 : vector<8x128xf32> to vector<1x8x128xf32>
    tpu.vector_store %arg9[%c0_13, %c0_14, %c0_15], %18 {strides = array<i32>} : memref<8x8x128xf32, #tpu.memory_space<vmem>>, vector<1x8x128xf32>,
    %19 = vector.extract_strided_slice %12 {offsets = [0, 128], sizes = [8, 128], strides = [1, 1]} : vector<8x256xf32> to vector<8x128xf32>
    %c0_16 = arith.constant 0 : index
    %c0_17 = arith.constant 0 : index
    %c0_18 = arith.constant 0 : index
    %20 = vector.load %arg10[%c0_16, %c0_17, %c0_18] : memref<8x8x128xf32, #tpu.memory_space<vmem>>, vector<1x8x128xf32>
    %21 = vector.shape_cast %20 : vector<1x8x128xf32> to vector<8x128xf32>
    %22 = vector.shape_cast %19 : vector<8x128xf32> to vector<1x8x128xf32>
    tpu.vector_store %arg10[%c0_16, %c0_17, %c0_18], %22 {strides = array<i32>} : memref<8x8x128xf32, #tpu.memory_space<vmem>>, vector<1x8x128xf32>,
    %c1 = arith.constant 1 : index
    %c0_19 = arith.constant 0 : index
    %c0_20 = arith.constant 0 : index
    %23 = vector.load %arg1[%c1, %c0_19, %c0_20] : memref<8x8x32xf32, #tpu.memory_space<vmem>>, vector<1x8x32xf32>
    %24 = vector.shape_cast %23 : vector<1x8x32xf32> to vector<8x32xf32>
    %cst_21 = arith.constant dense<0.000000e+00> : vector<8x256xf32>
    %25 = tpu.matmul %24, %5, %cst_21 {dimension_numbers = #tpu.dot_dimension_numbers<[1], [0], [0], [1], [0, 0, 1, 1], [], []>} : vector<8x32xf32>, vector<32x256xf32>, vector<8x256xf32> -> vector<8x256xf32>
    %26 = vector.extract_strided_slice %25 {offsets = [0, 0], sizes = [8, 128], strides = [1, 1]} : vector<8x256xf32> to vector<8x128xf32>
    %27 = vector.broadcast %7 : vector<1x128xf32> to vector<8x128xf32>
    %28 = arith.addf %26, %27 : vector<8x128xf32>
    %c1_22 = arith.constant 1 : index
    %c0_23 = arith.constant 0 : index
    %c0_24 = arith.constant 0 : index
    %29 = vector.load %arg9[%c1_22, %c0_23, %c0_24] : memref<8x8x128xf32, #tpu.memory_space<vmem>>, vector<1x8x128xf32>
    %30 = vector.shape_cast %29 : vector<1x8x128xf32> to vector<8x128xf32>
    %31 = vector.shape_cast %28 : vector<8x128xf32> to vector<1x8x128xf32>
    tpu.vector_store %arg9[%c1_22, %c0_23, %c0_24], %31 {strides = array<i32>} : memref<8x8x128xf32, #tpu.memory_space<vmem>>, vector<1x8x128xf32>,
    %32 = vector.extract_strided_slice %25 {offsets = [0, 128], sizes = [8, 128], strides = [1, 1]} : vector<8x256xf32> to vector<8x128xf32>
    %c1_25 = arith.constant 1 : index
    %c0_26 = arith.constant 0 : index
    %c0_27 = arith.constant 0 : index
    %33 = vector.load %arg10[%c1_25, %c0_26, %c0_27] : memref<8x8x128xf32, #tpu.memory_space<vmem>>, vector<1x8x128xf32>
    %34 = vector.shape_cast %33 : vector<1x8x128xf32> to vector<8x128xf32>
    %35 = vector.shape_cast %32 : vector<8x128xf32> to vector<1x8x128xf32>
    tpu.vector_store %arg10[%c1_25, %c0_26, %c0_27], %35 {strides = array<i32>} : memref<8x8x128xf32, #tpu.memory_space<vmem>>, vector<1x8x128xf32>,
    %c2 = arith.constant 2 : index
    %c0_28 = arith.constant 0 : index
    %c0_29 = arith.constant 0 : index
    %36 = vector.load %arg1[%c2, %c0_28, %c0_29] : memref<8x8x32xf32, #tpu.memory_space<vmem>>, vector<1x8x32xf32>
    %37 = vector.shape_cast %36 : vector<1x8x32xf32> to vector<8x32xf32>
    %cst_30 = arith.constant dense<0.000000e+00> : vector<8x256xf32>
    %38 = tpu.matmul %37, %5, %cst_30 {dimension_numbers = #tpu.dot_dimension_numbers<[1], [0], [0], [1], [0, 0, 1, 1], [], []>} : vector<8x32xf32>, vector<32x256xf32>, vector<8x256xf32> -> vector<8x256xf32>
    %39 = vector.extract_strided_slice %38 {offsets = [0, 0], sizes = [8, 128], strides = [1, 1]} : vector<8x256xf32> to vector<8x128xf32>
    %40 = vector.broadcast %7 : vector<1x128xf32> to vector<8x128xf32>
    %41 = arith.addf %39, %40 : vector<8x128xf32>
    %c2_31 = arith.constant 2 : index
    %c0_32 = arith.constant 0 : index
    %c0_33 = arith.constant 0 : index
    %42 = vector.load %arg9[%c2_31, %c0_32, %c0_33] : memref<8x8x128xf32, #tpu.memory_space<vmem>>, vector<1x8x128xf32>
    %43 = vector.shape_cast %42 : vector<1x8x128xf32> to vector<8x128xf32>
    %44 = vector.shape_cast %41 : vector<8x128xf32> to vector<1x8x128xf32>
    tpu.vector_store %arg9[%c2_31, %c0_32, %c0_33], %44 {strides = array<i32>} : memref<8x8x128xf32, #tpu.memory_space<vmem>>, vector<1x8x128xf32>,
    %45 = vector.extract_strided_slice %38 {offsets = [0, 128], sizes = [8, 128], strides = [1, 1]} : vector<8x256xf32> to vector<8x128xf32>
    %c2_34 = arith.constant 2 : index
    %c0_35 = arith.constant 0 : index
    %c0_36 = arith.constant 0 : index
    %46 = vector.load %arg10[%c2_34, %c0_35, %c0_36] : memref<8x8x128xf32, #tpu.memory_space<vmem>>, vector<1x8x128xf32>
    %47 = vector.shape_cast %46 : vector<1x8x128xf32> to vector<8x128xf32>
    %48 = vector.shape_cast %45 : vector<8x128xf32> to vector<1x8x128xf32>
    tpu.vector_store %arg10[%c2_34, %c0_35, %c0_36], %48 {strides = array<i32>} : memref<8x8x128xf32, #tpu.memory_space<vmem>>, vector<1x8x128xf32>,
    %c3 = arith.constant 3 : index
    %c0_37 = arith.constant 0 : index
    %c0_38 = arith.constant 0 : index
    %49 = vector.load %arg1[%c3, %c0_37, %c0_38] : memref<8x8x32xf32, #tpu.memory_space<vmem>>, vector<1x8x32xf32>
    %50 = vector.shape_cast %49 : vector<1x8x32xf32> to vector<8x32xf32>
    %cst_39 = arith.constant dense<0.000000e+00> : vector<8x256xf32>
    %51 = tpu.matmul %50, %5, %cst_39 {dimension_numbers = #tpu.dot_dimension_numbers<[1], [0], [0], [1], [0, 0, 1, 1], [], []>} : vector<8x32xf32>, vector<32x256xf32>, vector<8x256xf32> -> vector<8x256xf32>
    %52 = vector.extract_strided_slice %51 {offsets = [0, 0], sizes = [8, 128], strides = [1, 1]} : vector<8x256xf32> to vector<8x128xf32>
    %53 = vector.broadcast %7 : vector<1x128xf32> to vector<8x128xf32>
    %54 = arith.addf %52, %53 : vector<8x128xf32>
    %c3_40 = arith.constant 3 : index
    %c0_41 = arith.constant 0 : index
    %c0_42 = arith.constant 0 : index
    %55 = vector.load %arg9[%c3_40, %c0_41, %c0_42] : memref<8x8x128xf32, #tpu.memory_space<vmem>>, vector<1x8x128xf32>
    %56 = vector.shape_cast %55 : vector<1x8x128xf32> to vector<8x128xf32>
    %57 = vector.shape_cast %54 : vector<8x128xf32> to vector<1x8x128xf32>
    tpu.vector_store %arg9[%c3_40, %c0_41, %c0_42], %57 {strides = array<i32>} : memref<8x8x128xf32, #tpu.memory_space<vmem>>, vector<1x8x128xf32>,
    %58 = vector.extract_strided_slice %51 {offsets = [0, 128], sizes = [8, 128], strides = [1, 1]} : vector<8x256xf32> to vector<8x128xf32>
    %c3_43 = arith.constant 3 : index
    %c0_44 = arith.constant 0 : index
    %c0_45 = arith.constant 0 : index
    %59 = vector.load %arg10[%c3_43, %c0_44, %c0_45] : memref<8x8x128xf32, #tpu.memory_space<vmem>>, vector<1x8x128xf32>
    %60 = vector.shape_cast %59 : vector<1x8x128xf32> to vector<8x128xf32>
    %61 = vector.shape_cast %58 : vector<8x128xf32> to vector<1x8x128xf32>
    tpu.vector_store %arg10[%c3_43, %c0_44, %c0_45], %61 {strides = array<i32>} : memref<8x8x128xf32, #tpu.memory_space<vmem>>, vector<1x8x128xf32>,
    %c4 = arith.constant 4 : index
    %c0_46 = arith.constant 0 : index
    %c0_47 = arith.constant 0 : index
    %62 = vector.load %arg1[%c4, %c0_46, %c0_47] : memref<8x8x32xf32, #tpu.memory_space<vmem>>, vector<1x8x32xf32>
    %63 = vector.shape_cast %62 : vector<1x8x32xf32> to vector<8x32xf32>
    %cst_48 = arith.constant dense<0.000000e+00> : vector<8x256xf32>
    %64 = tpu.matmul %63, %5, %cst_48 {dimension_numbers = #tpu.dot_dimension_numbers<[1], [0], [0], [1], [0, 0, 1, 1], [], []>} : vector<8x32xf32>, vector<32x256xf32>, vector<8x256xf32> -> vector<8x256xf32>
    %65 = vector.extract_strided_slice %64 {offsets = [0, 0], sizes = [8, 128], strides = [1, 1]} : vector<8x256xf32> to vector<8x128xf32>
    %66 = vector.broadcast %7 : vector<1x128xf32> to vector<8x128xf32>
    %67 = arith.addf %65, %66 : vector<8x128xf32>
    %c4_49 = arith.constant 4 : index
    %c0_50 = arith.constant 0 : index
    %c0_51 = arith.constant 0 : index
    %68 = vector.load %arg9[%c4_49, %c0_50, %c0_51] : memref<8x8x128xf32, #tpu.memory_space<vmem>>, vector<1x8x128xf32>
    %69 = vector.shape_cast %68 : vector<1x8x128xf32> to vector<8x128xf32>
    %70 = vector.shape_cast %67 : vector<8x128xf32> to vector<1x8x128xf32>
    tpu.vector_store %arg9[%c4_49, %c0_50, %c0_51], %70 {strides = array<i32>} : memref<8x8x128xf32, #tpu.memory_space<vmem>>, vector<1x8x128xf32>,
    %71 = vector.extract_strided_slice %64 {offsets = [0, 128], sizes = [8, 128], strides = [1, 1]} : vector<8x256xf32> to vector<8x128xf32>
    %c4_52 = arith.constant 4 : index
    %c0_53 = arith.constant 0 : index
    %c0_54 = arith.constant 0 : index
    %72 = vector.load %arg10[%c4_52, %c0_53, %c0_54] : memref<8x8x128xf32, #tpu.memory_space<vmem>>, vector<1x8x128xf32>
    %73 = vector.shape_cast %72 : vector<1x8x128xf32> to vector<8x128xf32>
    %74 = vector.shape_cast %71 : vector<8x128xf32> to vector<1x8x128xf32>
    tpu.vector_store %arg10[%c4_52, %c0_53, %c0_54], %74 {strides = array<i32>} : memref<8x8x128xf32, #tpu.memory_space<vmem>>, vector<1x8x128xf32>,
    %c5 = arith.constant 5 : index
    %c0_55 = arith.constant 0 : index
    %c0_56 = arith.constant 0 : index
    %75 = vector.load %arg1[%c5, %c0_55, %c0_56] : memref<8x8x32xf32, #tpu.memory_space<vmem>>, vector<1x8x32xf32>
    %76 = vector.shape_cast %75 : vector<1x8x32xf32> to vector<8x32xf32>
    %cst_57 = arith.constant dense<0.000000e+00> : vector<8x256xf32>
    %77 = tpu.matmul %76, %5, %cst_57 {dimension_numbers = #tpu.dot_dimension_numbers<[1], [0], [0], [1], [0, 0, 1, 1], [], []>} : vector<8x32xf32>, vector<32x256xf32>, vector<8x256xf32> -> vector<8x256xf32>
    %78 = vector.extract_strided_slice %77 {offsets = [0, 0], sizes = [8, 128], strides = [1, 1]} : vector<8x256xf32> to vector<8x128xf32>
    %79 = vector.broadcast %7 : vector<1x128xf32> to vector<8x128xf32>
    %80 = arith.addf %78, %79 : vector<8x128xf32>
    %c5_58 = arith.constant 5 : index
    %c0_59 = arith.constant 0 : index
    %c0_60 = arith.constant 0 : index
    %81 = vector.load %arg9[%c5_58, %c0_59, %c0_60] : memref<8x8x128xf32, #tpu.memory_space<vmem>>, vector<1x8x128xf32>
    %82 = vector.shape_cast %81 : vector<1x8x128xf32> to vector<8x128xf32>
    %83 = vector.shape_cast %80 : vector<8x128xf32> to vector<1x8x128xf32>
    tpu.vector_store %arg9[%c5_58, %c0_59, %c0_60], %83 {strides = array<i32>} : memref<8x8x128xf32, #tpu.memory_space<vmem>>, vector<1x8x128xf32>,
    %84 = vector.extract_strided_slice %77 {offsets = [0, 128], sizes = [8, 128], strides = [1, 1]} : vector<8x256xf32> to vector<8x128xf32>
    %c5_61 = arith.constant 5 : index
    %c0_62 = arith.constant 0 : index
    %c0_63 = arith.constant 0 : index
    %85 = vector.load %arg10[%c5_61, %c0_62, %c0_63] : memref<8x8x128xf32, #tpu.memory_space<vmem>>, vector<1x8x128xf32>
    %86 = vector.shape_cast %85 : vector<1x8x128xf32> to vector<8x128xf32>
    %87 = vector.shape_cast %84 : vector<8x128xf32> to vector<1x8x128xf32>
    tpu.vector_store %arg10[%c5_61, %c0_62, %c0_63], %87 {strides = array<i32>} : memref<8x8x128xf32, #tpu.memory_space<vmem>>, vector<1x8x128xf32>,
    %c6 = arith.constant 6 : index
    %c0_64 = arith.constant 0 : index
    %c0_65 = arith.constant 0 : index
    %88 = vector.load %arg1[%c6, %c0_64, %c0_65] : memref<8x8x32xf32, #tpu.memory_space<vmem>>, vector<1x8x32xf32>
    %89 = vector.shape_cast %88 : vector<1x8x32xf32> to vector<8x32xf32>
    %cst_66 = arith.constant dense<0.000000e+00> : vector<8x256xf32>
    %90 = tpu.matmul %89, %5, %cst_66 {dimension_numbers = #tpu.dot_dimension_numbers<[1], [0], [0], [1], [0, 0, 1, 1], [], []>} : vector<8x32xf32>, vector<32x256xf32>, vector<8x256xf32> -> vector<8x256xf32>
    %91 = vector.extract_strided_slice %90 {offsets = [0, 0], sizes = [8, 128], strides = [1, 1]} : vector<8x256xf32> to vector<8x128xf32>
    %92 = vector.broadcast %7 : vector<1x128xf32> to vector<8x128xf32>
    %93 = arith.addf %91, %92 : vector<8x128xf32>
    %c6_67 = arith.constant 6 : index
    %c0_68 = arith.constant 0 : index
    %c0_69 = arith.constant 0 : index
    %94 = vector.load %arg9[%c6_67, %c0_68, %c0_69] : memref<8x8x128xf32, #tpu.memory_space<vmem>>, vector<1x8x128xf32>
    %95 = vector.shape_cast %94 : vector<1x8x128xf32> to vector<8x128xf32>
    %96 = vector.shape_cast %93 : vector<8x128xf32> to vector<1x8x128xf32>
    tpu.vector_store %arg9[%c6_67, %c0_68, %c0_69], %96 {strides = array<i32>} : memref<8x8x128xf32, #tpu.memory_space<vmem>>, vector<1x8x128xf32>,
    %97 = vector.extract_strided_slice %90 {offsets = [0, 128], sizes = [8, 128], strides = [1, 1]} : vector<8x256xf32> to vector<8x128xf32>
    %c6_70 = arith.constant 6 : index
    %c0_71 = arith.constant 0 : index
    %c0_72 = arith.constant 0 : index
    %98 = vector.load %arg10[%c6_70, %c0_71, %c0_72] : memref<8x8x128xf32, #tpu.memory_space<vmem>>, vector<1x8x128xf32>
    %99 = vector.shape_cast %98 : vector<1x8x128xf32> to vector<8x128xf32>
    %100 = vector.shape_cast %97 : vector<8x128xf32> to vector<1x8x128xf32>
    tpu.vector_store %arg10[%c6_70, %c0_71, %c0_72], %100 {strides = array<i32>} : memref<8x8x128xf32, #tpu.memory_space<vmem>>, vector<1x8x128xf32>,
    %c7 = arith.constant 7 : index
    %c0_73 = arith.constant 0 : index
    %c0_74 = arith.constant 0 : index
    %101 = vector.load %arg1[%c7, %c0_73, %c0_74] : memref<8x8x32xf32, #tpu.memory_space<vmem>>, vector<1x8x32xf32>
    %102 = vector.shape_cast %101 : vector<1x8x32xf32> to vector<8x32xf32>
    %cst_75 = arith.constant dense<0.000000e+00> : vector<8x256xf32>
    %103 = tpu.matmul %102, %5, %cst_75 {dimension_numbers = #tpu.dot_dimension_numbers<[1], [0], [0], [1], [0, 0, 1, 1], [], []>} : vector<8x32xf32>, vector<32x256xf32>, vector<8x256xf32> -> vector<8x256xf32>
    %104 = vector.extract_strided_slice %103 {offsets = [0, 0], sizes = [8, 128], strides = [1, 1]} : vector<8x256xf32> to vector<8x128xf32>
    %105 = vector.broadcast %7 : vector<1x128xf32> to vector<8x128xf32>
    %106 = arith.addf %104, %105 : vector<8x128xf32>
    %c7_76 = arith.constant 7 : index
    %c0_77 = arith.constant 0 : index
    %c0_78 = arith.constant 0 : index
    %107 = vector.load %arg9[%c7_76, %c0_77, %c0_78] : memref<8x8x128xf32, #tpu.memory_space<vmem>>, vector<1x8x128xf32>
    %108 = vector.shape_cast %107 : vector<1x8x128xf32> to vector<8x128xf32>
    %109 = vector.shape_cast %106 : vector<8x128xf32> to vector<1x8x128xf32>
    tpu.vector_store %arg9[%c7_76, %c0_77, %c0_78], %109 {strides = array<i32>} : memref<8x8x128xf32, #tpu.memory_space<vmem>>, vector<1x8x128xf32>,
    %110 = vector.extract_strided_slice %103 {offsets = [0, 128], sizes = [8, 128], strides = [1, 1]} : vector<8x256xf32> to vector<8x128xf32>
    %c7_79 = arith.constant 7 : index
    %c0_80 = arith.constant 0 : index
    %c0_81 = arith.constant 0 : index
    %111 = vector.load %arg10[%c7_79, %c0_80, %c0_81] : memref<8x8x128xf32, #tpu.memory_space<vmem>>, vector<1x8x128xf32>
    %112 = vector.shape_cast %111 : vector<1x8x128xf32> to vector<8x128xf32>
    %113 = vector.shape_cast %110 : vector<8x128xf32> to vector<1x8x128xf32>
    tpu.vector_store %arg10[%c7_79, %c0_80, %c0_81], %113 {strides = array<i32>} : memref<8x8x128xf32, #tpu.memory_space<vmem>>, vector<1x8x128xf32>,
    %c0_82 = arith.constant 0 : index
    %c0_83 = arith.constant 0 : index
    %c0_84 = arith.constant 0 : index
    %114 = vector.load %arg6[%c0_82, %c0_83, %c0_84] : memref<2x8x32xf32, #tpu.memory_space<vmem>>, vector<1x8x32xf32>
    %115 = vector.shape_cast %114 : vector<1x8x32xf32> to vector<8x32xf32>
    %c0_85 = arith.constant 0 : index
    %c0_86 = arith.constant 0 : index
    %116 = vector.load %arg14[%c0_85, %c0_86] : memref<8x32xf32, #tpu.memory_space<vmem>>, vector<8x32xf32>
    tpu.vector_store %arg14[%c0_85, %c0_86], %115 {strides = array<i32>} : memref<8x32xf32, #tpu.memory_space<vmem>>, vector<8x32xf32>,
    %c0_87 = arith.constant 0 : index
    %c0_88 = arith.constant 0 : index
    %c0_89 = arith.constant 0 : index
    %117 = vector.load %arg7[%c0_87, %c0_88, %c0_89] : memref<2x8x32xf32, #tpu.memory_space<vmem>>, vector<1x8x32xf32>
    %118 = vector.shape_cast %117 : vector<1x8x32xf32> to vector<8x32xf32>
    %c0_90 = arith.constant 0 : index
    %c0_91 = arith.constant 0 : index
    %119 = vector.load %arg15[%c0_90, %c0_91] : memref<8x32xf32, #tpu.memory_space<vmem>>, vector<8x32xf32>
    tpu.vector_store %arg15[%c0_90, %c0_91], %118 {strides = array<i32>} : memref<8x32xf32, #tpu.memory_space<vmem>>, vector<8x32xf32>,
    %c0_i32 = arith.constant 0 : i32
    %c7_i32 = arith.constant 7 : i32
    %120 = arith.subi %c7_i32, %c0_i32 : i32
    %c0_92 = arith.constant 0 : index
    %c0_93 = arith.constant 0 : index
    %121 = vector.load %arg14[%c0_92, %c0_93] : memref<8x32xf32, #tpu.memory_space<vmem>>, vector<8x32xf32>
    %c0_94 = arith.constant 0 : index
    %c0_95 = arith.constant 0 : index
    %122 = vector.load %arg15[%c0_94, %c0_95] : memref<8x32xf32, #tpu.memory_space<vmem>>, vector<8x32xf32>
    %123 = arith.index_cast %c0_i32 : i32 to index
    %c0_96 = arith.constant 0 : index
    %c0_97 = arith.constant 0 : index
    %124 = vector.load %arg9[%123, %c0_96, %c0_97] : memref<8x8x128xf32, #tpu.memory_space<vmem>>, vector<1x8x128xf32>
    %125 = vector.shape_cast %124 : vector<1x8x128xf32> to vector<8x128xf32>
    %126 = arith.index_cast %120 : i32 to index
    %c0_98 = arith.constant 0 : index
    %c0_99 = arith.constant 0 : index
    %127 = vector.load %arg10[%126, %c0_98, %c0_99] : memref<8x8x128xf32, #tpu.memory_space<vmem>>, vector<1x8x128xf32>
    %128 = vector.shape_cast %127 : vector<1x8x128xf32> to vector<8x128xf32>
    %129 = arith.addf %125, %128 : vector<8x128xf32>
    %130 = arith.truncf %121 : vector<8x32xf32> to vector<8x32xbf16>
    %cst_100 = arith.constant dense<0.000000e+00> : vector<8x128xf32>
    %131 = tpu.matmul %130, %9, %cst_100 {dimension_numbers = #tpu.dot_dimension_numbers<[1], [0], [0], [1], [0, 0, 1, 1], [], []>} : vector<8x32xbf16>, vector<32x128xbf16>, vector<8x128xf32> -> vector<8x128xf32>
    %132 = arith.addf %129, %131 : vector<8x128xf32>
    %133 = vector.extract_strided_slice %132 {offsets = [0, 0], sizes = [8, 96], strides = [1, 1]} : vector<8x128xf32> to vector<8x96xf32>
    %134 = arith.negf %133 : vector<8x96xf32>
    %135 = math.exp %134 : vector<8x96xf32>
    %cst_101 = arith.constant 1.000000e+00 : f32
    %136 = vector.broadcast %cst_101 : f32 to vector<8x96xf32>
    %137 = arith.addf %136, %135 : vector<8x96xf32>
    %138 = arith.divf %136, %137 : vector<8x96xf32>
    %139 = vector.extract_strided_slice %132 {offsets = [0, 96], sizes = [8, 32], strides = [1, 1]} : vector<8x128xf32> to vector<8x32xf32>
    %140 = math.tanh %139 : vector<8x32xf32>
    %141 = vector.extract_strided_slice %138 {offsets = [0, 0], sizes = [8, 32], strides = [1, 1]} : vector<8x96xf32> to vector<8x32xf32>
    %142 = vector.extract_strided_slice %138 {offsets = [0, 32], sizes = [8, 32], strides = [1, 1]} : vector<8x96xf32> to vector<8x32xf32>
    %143 = vector.extract_strided_slice %138 {offsets = [0, 64], sizes = [8, 32], strides = [1, 1]} : vector<8x96xf32> to vector<8x32xf32>
    %144 = arith.mulf %142, %122 : vector<8x32xf32>
    %145 = arith.mulf %141, %140 : vector<8x32xf32>
    %146 = arith.addf %144, %145 : vector<8x32xf32>
    %147 = math.tanh %146 : vector<8x32xf32>
    %148 = arith.mulf %143, %147 : vector<8x32xf32>
    %149 = vector.broadcast %120 : i32 to vector<8x32xi32>
    %150 = vector.broadcast %c0_i32 : i32 to vector<8x32xi32>
    %151 = arith.select %3, %149, %150 : vector<8x32xi1>, vector<8x32xi32>
    %152 = vector.broadcast %0 : vector<8x1xi32> to vector<8x32xi32>
    %153 = arith.cmpi slt, %151, %152 : vector<8x32xi32>
    %154 = arith.select %153, %148, %121 : vector<8x32xi1>, vector<8x32xf32>
    %c0_102 = arith.constant 0 : index
    %c0_103 = arith.constant 0 : index
    %155 = vector.load %arg14[%c0_102, %c0_103] : memref<8x32xf32, #tpu.memory_space<vmem>>, vector<8x32xf32>
    tpu.vector_store %arg14[%c0_102, %c0_103], %154 {strides = array<i32>} : memref<8x32xf32, #tpu.memory_space<vmem>>, vector<8x32xf32>,
    %156 = arith.select %153, %146, %122 : vector<8x32xi1>, vector<8x32xf32>
    %c0_104 = arith.constant 0 : index
    %c0_105 = arith.constant 0 : index
    %157 = vector.load %arg15[%c0_104, %c0_105] : memref<8x32xf32, #tpu.memory_space<vmem>>, vector<8x32xf32>
    tpu.vector_store %arg15[%c0_104, %c0_105], %156 {strides = array<i32>} : memref<8x32xf32, #tpu.memory_space<vmem>>, vector<8x32xf32>,
    %158 = vector.extract_strided_slice %153 {offsets = [0, 0], sizes = [8, 16], strides = [1, 1]} : vector<8x32xi1> to vector<8x16xi1>
    %159 = vector.extract_strided_slice %148 {offsets = [0, 0], sizes = [8, 16], strides = [1, 1]} : vector<8x32xf32> to vector<8x16xf32>
    %cst_106 = arith.constant 0.000000e+00 : f32
    %160 = vector.broadcast %cst_106 : f32 to vector<8x16xf32>
    %161 = arith.select %158, %159, %160 : vector<8x16xi1>, vector<8x16xf32>
    %162 = arith.index_cast %c0_i32 : i32 to index
    %c0_107 = arith.constant 0 : index
    %c0_108 = arith.constant 0 : index
    %163 = vector.load %arg12[%162, %c0_107, %c0_108] : memref<8x8x16xf32, #tpu.memory_space<vmem>>, vector<1x8x16xf32>
    %164 = vector.shape_cast %163 : vector<1x8x16xf32> to vector<8x16xf32>
    %165 = vector.shape_cast %161 : vector<8x16xf32> to vector<1x8x16xf32>
    tpu.vector_store %arg12[%162, %c0_107, %c0_108], %165 {strides = array<i32>} : memref<8x8x16xf32, #tpu.memory_space<vmem>>, vector<1x8x16xf32>,
    %166 = vector.extract_strided_slice %153 {offsets = [0, 16], sizes = [8, 16], strides = [1, 1]} : vector<8x32xi1> to vector<8x16xi1>
    %167 = vector.extract_strided_slice %148 {offsets = [0, 16], sizes = [8, 16], strides = [1, 1]} : vector<8x32xf32> to vector<8x16xf32>
    %cst_109 = arith.constant 0.000000e+00 : f32
    %168 = vector.broadcast %cst_109 : f32 to vector<8x16xf32>
    %169 = arith.select %166, %167, %168 : vector<8x16xi1>, vector<8x16xf32>
    %170 = arith.index_cast %120 : i32 to index
    %c0_110 = arith.constant 0 : index
    %c0_111 = arith.constant 0 : index
    %171 = vector.load %arg13[%170, %c0_110, %c0_111] : memref<8x8x16xf32, #tpu.memory_space<vmem>>, vector<1x8x16xf32>
    %172 = vector.shape_cast %171 : vector<1x8x16xf32> to vector<8x16xf32>
    %173 = vector.shape_cast %169 : vector<8x16xf32> to vector<1x8x16xf32>
    tpu.vector_store %arg13[%170, %c0_110, %c0_111], %173 {strides = array<i32>} : memref<8x8x16xf32, #tpu.memory_space<vmem>>, vector<1x8x16xf32>,
    %c1_i32 = arith.constant 1 : i32
    %c7_i32_112 = arith.constant 7 : i32
    %174 = arith.subi %c7_i32_112, %c1_i32 : i32
    %c0_113 = arith.constant 0 : index
    %c0_114 = arith.constant 0 : index
    %175 = vector.load %arg14[%c0_113, %c0_114] : memref<8x32xf32, #tpu.memory_space<vmem>>, vector<8x32xf32>
    %c0_115 = arith.constant 0 : index
    %c0_116 = arith.constant 0 : index
    %176 = vector.load %arg15[%c0_115, %c0_116] : memref<8x32xf32, #tpu.memory_space<vmem>>, vector<8x32xf32>
    %177 = arith.index_cast %c1_i32 : i32 to index
    %c0_117 = arith.constant 0 : index
    %c0_118 = arith.constant 0 : index
    %178 = vector.load %arg9[%177, %c0_117, %c0_118] : memref<8x8x128xf32, #tpu.memory_space<vmem>>, vector<1x8x128xf32>
    %179 = vector.shape_cast %178 : vector<1x8x128xf32> to vector<8x128xf32>
    %180 = arith.index_cast %174 : i32 to index
    %c0_119 = arith.constant 0 : index
    %c0_120 = arith.constant 0 : index
    %181 = vector.load %arg10[%180, %c0_119, %c0_120] : memref<8x8x128xf32, #tpu.memory_space<vmem>>, vector<1x8x128xf32>
    %182 = vector.shape_cast %181 : vector<1x8x128xf32> to vector<8x128xf32>
    %183 = arith.addf %179, %182 : vector<8x128xf32>
    %184 = arith.truncf %175 : vector<8x32xf32> to vector<8x32xbf16>
    %cst_121 = arith.constant dense<0.000000e+00> : vector<8x128xf32>
    %185 = tpu.matmul %184, %9, %cst_121 {dimension_numbers = #tpu.dot_dimension_numbers<[1], [0], [0], [1], [0, 0, 1, 1], [], []>} : vector<8x32xbf16>, vector<32x128xbf16>, vector<8x128xf32> -> vector<8x128xf32>
    %186 = arith.addf %183, %185 : vector<8x128xf32>
    %187 = vector.extract_strided_slice %186 {offsets = [0, 0], sizes = [8, 96], strides = [1, 1]} : vector<8x128xf32> to vector<8x96xf32>
    %188 = arith.negf %187 : vector<8x96xf32>
    %189 = math.exp %188 : vector<8x96xf32>
    %cst_122 = arith.constant 1.000000e+00 : f32
    %190 = vector.broadcast %cst_122 : f32 to vector<8x96xf32>
    %191 = arith.addf %190, %189 : vector<8x96xf32>
    %192 = arith.divf %190, %191 : vector<8x96xf32>
    %193 = vector.extract_strided_slice %186 {offsets = [0, 96], sizes = [8, 32], strides = [1, 1]} : vector<8x128xf32> to vector<8x32xf32>
    %194 = math.tanh %193 : vector<8x32xf32>
    %195 = vector.extract_strided_slice %192 {offsets = [0, 0], sizes = [8, 32], strides = [1, 1]} : vector<8x96xf32> to vector<8x32xf32>
    %196 = vector.extract_strided_slice %192 {offsets = [0, 32], sizes = [8, 32], strides = [1, 1]} : vector<8x96xf32> to vector<8x32xf32>
    %197 = vector.extract_strided_slice %192 {offsets = [0, 64], sizes = [8, 32], strides = [1, 1]} : vector<8x96xf32> to vector<8x32xf32>
    %198 = arith.mulf %196, %176 : vector<8x32xf32>
    %199 = arith.mulf %195, %194 : vector<8x32xf32>
    %200 = arith.addf %198, %199 : vector<8x32xf32>
    %201 = math.tanh %200 : vector<8x32xf32>
    %202 = arith.mulf %197, %201 : vector<8x32xf32>
    %203 = vector.broadcast %174 : i32 to vector<8x32xi32>
    %204 = vector.broadcast %c1_i32 : i32 to vector<8x32xi32>
    %205 = arith.select %3, %203, %204 : vector<8x32xi1>, vector<8x32xi32>
    %206 = vector.broadcast %0 : vector<8x1xi32> to vector<8x32xi32>
    %207 = arith.cmpi slt, %205, %206 : vector<8x32xi32>
    %208 = arith.select %207, %202, %175 : vector<8x32xi1>, vector<8x32xf32>
    %c0_123 = arith.constant 0 : index
    %c0_124 = arith.constant 0 : index
    %209 = vector.load %arg14[%c0_123, %c0_124] : memref<8x32xf32, #tpu.memory_space<vmem>>, vector<8x32xf32>
    tpu.vector_store %arg14[%c0_123, %c0_124], %208 {strides = array<i32>} : memref<8x32xf32, #tpu.memory_space<vmem>>, vector<8x32xf32>,
    %210 = arith.select %207, %200, %176 : vector<8x32xi1>, vector<8x32xf32>
    %c0_125 = arith.constant 0 : index
    %c0_126 = arith.constant 0 : index
    %211 = vector.load %arg15[%c0_125, %c0_126] : memref<8x32xf32, #tpu.memory_space<vmem>>, vector<8x32xf32>
    tpu.vector_store %arg15[%c0_125, %c0_126], %210 {strides = array<i32>} : memref<8x32xf32, #tpu.memory_space<vmem>>, vector<8x32xf32>,
    %212 = vector.extract_strided_slice %207 {offsets = [0, 0], sizes = [8, 16], strides = [1, 1]} : vector<8x32xi1> to vector<8x16xi1>
    %213 = vector.extract_strided_slice %202 {offsets = [0, 0], sizes = [8, 16], strides = [1, 1]} : vector<8x32xf32> to vector<8x16xf32>
    %cst_127 = arith.constant 0.000000e+00 : f32
    %214 = vector.broadcast %cst_127 : f32 to vector<8x16xf32>
    %215 = arith.select %212, %213, %214 : vector<8x16xi1>, vector<8x16xf32>
    %216 = arith.index_cast %c1_i32 : i32 to index
    %c0_128 = arith.constant 0 : index
    %c0_129 = arith.constant 0 : index
    %217 = vector.load %arg12[%216, %c0_128, %c0_129] : memref<8x8x16xf32, #tpu.memory_space<vmem>>, vector<1x8x16xf32>
    %218 = vector.shape_cast %217 : vector<1x8x16xf32> to vector<8x16xf32>
    %219 = vector.shape_cast %215 : vector<8x16xf32> to vector<1x8x16xf32>
    tpu.vector_store %arg12[%216, %c0_128, %c0_129], %219 {strides = array<i32>} : memref<8x8x16xf32, #tpu.memory_space<vmem>>, vector<1x8x16xf32>,
    %220 = vector.extract_strided_slice %207 {offsets = [0, 16], sizes = [8, 16], strides = [1, 1]} : vector<8x32xi1> to vector<8x16xi1>
    %221 = vector.extract_strided_slice %202 {offsets = [0, 16], sizes = [8, 16], strides = [1, 1]} : vector<8x32xf32> to vector<8x16xf32>
    %cst_130 = arith.constant 0.000000e+00 : f32
    %222 = vector.broadcast %cst_130 : f32 to vector<8x16xf32>
    %223 = arith.select %220, %221, %222 : vector<8x16xi1>, vector<8x16xf32>
    %224 = arith.index_cast %174 : i32 to index
    %c0_131 = arith.constant 0 : index
    %c0_132 = arith.constant 0 : index
    %225 = vector.load %arg13[%224, %c0_131, %c0_132] : memref<8x8x16xf32, #tpu.memory_space<vmem>>, vector<1x8x16xf32>
    %226 = vector.shape_cast %225 : vector<1x8x16xf32> to vector<8x16xf32>
    %227 = vector.shape_cast %223 : vector<8x16xf32> to vector<1x8x16xf32>
    tpu.vector_store %arg13[%224, %c0_131, %c0_132], %227 {strides = array<i32>} : memref<8x8x16xf32, #tpu.memory_space<vmem>>, vector<1x8x16xf32>,
    %c2_i32 = arith.constant 2 : i32
    %c7_i32_133 = arith.constant 7 : i32
    %228 = arith.subi %c7_i32_133, %c2_i32 : i32
    %c0_134 = arith.constant 0 : index
    %c0_135 = arith.constant 0 : index
    %229 = vector.load %arg14[%c0_134, %c0_135] : memref<8x32xf32, #tpu.memory_space<vmem>>, vector<8x32xf32>
    %c0_136 = arith.constant 0 : index
    %c0_137 = arith.constant 0 : index
    %230 = vector.load %arg15[%c0_136, %c0_137] : memref<8x32xf32, #tpu.memory_space<vmem>>, vector<8x32xf32>
    %231 = arith.index_cast %c2_i32 : i32 to index
    %c0_138 = arith.constant 0 : index
    %c0_139 = arith.constant 0 : index
    %232 = vector.load %arg9[%231, %c0_138, %c0_139] : memref<8x8x128xf32, #tpu.memory_space<vmem>>, vector<1x8x128xf32>
    %233 = vector.shape_cast %232 : vector<1x8x128xf32> to vector<8x128xf32>
    %234 = arith.index_cast %228 : i32 to index
    %c0_140 = arith.constant 0 : index
    %c0_141 = arith.constant 0 : index
    %235 = vector.load %arg10[%234, %c0_140, %c0_141] : memref<8x8x128xf32, #tpu.memory_space<vmem>>, vector<1x8x128xf32>
    %236 = vector.shape_cast %235 : vector<1x8x128xf32> to vector<8x128xf32>
    %237 = arith.addf %233, %236 : vector<8x128xf32>
    %238 = arith.truncf %229 : vector<8x32xf32> to vector<8x32xbf16>
    %cst_142 = arith.constant dense<0.000000e+00> : vector<8x128xf32>
    %239 = tpu.matmul %238, %9, %cst_142 {dimension_numbers = #tpu.dot_dimension_numbers<[1], [0], [0], [1], [0, 0, 1, 1], [], []>} : vector<8x32xbf16>, vector<32x128xbf16>, vector<8x128xf32> -> vector<8x128xf32>
    %240 = arith.addf %237, %239 : vector<8x128xf32>
    %241 = vector.extract_strided_slice %240 {offsets = [0, 0], sizes = [8, 96], strides = [1, 1]} : vector<8x128xf32> to vector<8x96xf32>
    %242 = arith.negf %241 : vector<8x96xf32>
    %243 = math.exp %242 : vector<8x96xf32>
    %cst_143 = arith.constant 1.000000e+00 : f32
    %244 = vector.broadcast %cst_143 : f32 to vector<8x96xf32>
    %245 = arith.addf %244, %243 : vector<8x96xf32>
    %246 = arith.divf %244, %245 : vector<8x96xf32>
    %247 = vector.extract_strided_slice %240 {offsets = [0, 96], sizes = [8, 32], strides = [1, 1]} : vector<8x128xf32> to vector<8x32xf32>
    %248 = math.tanh %247 : vector<8x32xf32>
    %249 = vector.extract_strided_slice %246 {offsets = [0, 0], sizes = [8, 32], strides = [1, 1]} : vector<8x96xf32> to vector<8x32xf32>
    %250 = vector.extract_strided_slice %246 {offsets = [0, 32], sizes = [8, 32], strides = [1, 1]} : vector<8x96xf32> to vector<8x32xf32>
    %251 = vector.extract_strided_slice %246 {offsets = [0, 64], sizes = [8, 32], strides = [1, 1]} : vector<8x96xf32> to vector<8x32xf32>
    %252 = arith.mulf %250, %230 : vector<8x32xf32>
    %253 = arith.mulf %249, %248 : vector<8x32xf32>
    %254 = arith.addf %252, %253 : vector<8x32xf32>
    %255 = math.tanh %254 : vector<8x32xf32>
    %256 = arith.mulf %251, %255 : vector<8x32xf32>
    %257 = vector.broadcast %228 : i32 to vector<8x32xi32>
    %258 = vector.broadcast %c2_i32 : i32 to vector<8x32xi32>
    %259 = arith.select %3, %257, %258 : vector<8x32xi1>, vector<8x32xi32>
    %260 = vector.broadcast %0 : vector<8x1xi32> to vector<8x32xi32>
    %261 = arith.cmpi slt, %259, %260 : vector<8x32xi32>
    %262 = arith.select %261, %256, %229 : vector<8x32xi1>, vector<8x32xf32>
    %c0_144 = arith.constant 0 : index
    %c0_145 = arith.constant 0 : index
    %263 = vector.load %arg14[%c0_144, %c0_145] : memref<8x32xf32, #tpu.memory_space<vmem>>, vector<8x32xf32>
    tpu.vector_store %arg14[%c0_144, %c0_145], %262 {strides = array<i32>} : memref<8x32xf32, #tpu.memory_space<vmem>>, vector<8x32xf32>,
    %264 = arith.select %261, %254, %230 : vector<8x32xi1>, vector<8x32xf32>
    %c0_146 = arith.constant 0 : index
    %c0_147 = arith.constant 0 : index
    %265 = vector.load %arg15[%c0_146, %c0_147] : memref<8x32xf32, #tpu.memory_space<vmem>>, vector<8x32xf32>
    tpu.vector_store %arg15[%c0_146, %c0_147], %264 {strides = array<i32>} : memref<8x32xf32, #tpu.memory_space<vmem>>, vector<8x32xf32>,
    %266 = vector.extract_strided_slice %261 {offsets = [0, 0], sizes = [8, 16], strides = [1, 1]} : vector<8x32xi1> to vector<8x16xi1>
    %267 = vector.extract_strided_slice %256 {offsets = [0, 0], sizes = [8, 16], strides = [1, 1]} : vector<8x32xf32> to vector<8x16xf32>
    %cst_148 = arith.constant 0.000000e+00 : f32
    %268 = vector.broadcast %cst_148 : f32 to vector<8x16xf32>
    %269 = arith.select %266, %267, %268 : vector<8x16xi1>, vector<8x16xf32>
    %270 = arith.index_cast %c2_i32 : i32 to index
    %c0_149 = arith.constant 0 : index
    %c0_150 = arith.constant 0 : index
    %271 = vector.load %arg12[%270, %c0_149, %c0_150] : memref<8x8x16xf32, #tpu.memory_space<vmem>>, vector<1x8x16xf32>
    %272 = vector.shape_cast %271 : vector<1x8x16xf32> to vector<8x16xf32>
    %273 = vector.shape_cast %269 : vector<8x16xf32> to vector<1x8x16xf32>
    tpu.vector_store %arg12[%270, %c0_149, %c0_150], %273 {strides = array<i32>} : memref<8x8x16xf32, #tpu.memory_space<vmem>>, vector<1x8x16xf32>,
    %274 = vector.extract_strided_slice %261 {offsets = [0, 16], sizes = [8, 16], strides = [1, 1]} : vector<8x32xi1> to vector<8x16xi1>
    %275 = vector.extract_strided_slice %256 {offsets = [0, 16], sizes = [8, 16], strides = [1, 1]} : vector<8x32xf32> to vector<8x16xf32>
    %cst_151 = arith.constant 0.000000e+00 : f32
    %276 = vector.broadcast %cst_151 : f32 to vector<8x16xf32>
    %277 = arith.select %274, %275, %276 : vector<8x16xi1>, vector<8x16xf32>
    %278 = arith.index_cast %228 : i32 to index
    %c0_152 = arith.constant 0 : index
    %c0_153 = arith.constant 0 : index
    %279 = vector.load %arg13[%278, %c0_152, %c0_153] : memref<8x8x16xf32, #tpu.memory_space<vmem>>, vector<1x8x16xf32>
    %280 = vector.shape_cast %279 : vector<1x8x16xf32> to vector<8x16xf32>
    %281 = vector.shape_cast %277 : vector<8x16xf32> to vector<1x8x16xf32>
    tpu.vector_store %arg13[%278, %c0_152, %c0_153], %281 {strides = array<i32>} : memref<8x8x16xf32, #tpu.memory_space<vmem>>, vector<1x8x16xf32>,
    %c3_i32 = arith.constant 3 : i32
    %c7_i32_154 = arith.constant 7 : i32
    %282 = arith.subi %c7_i32_154, %c3_i32 : i32
    %c0_155 = arith.constant 0 : index
    %c0_156 = arith.constant 0 : index
    %283 = vector.load %arg14[%c0_155, %c0_156] : memref<8x32xf32, #tpu.memory_space<vmem>>, vector<8x32xf32>
    %c0_157 = arith.constant 0 : index
    %c0_158 = arith.constant 0 : index
    %284 = vector.load %arg15[%c0_157, %c0_158] : memref<8x32xf32, #tpu.memory_space<vmem>>, vector<8x32xf32>
    %285 = arith.index_cast %c3_i32 : i32 to index
    %c0_159 = arith.constant 0 : index
    %c0_160 = arith.constant 0 : index
    %286 = vector.load %arg9[%285, %c0_159, %c0_160] : memref<8x8x128xf32, #tpu.memory_space<vmem>>, vector<1x8x128xf32>
    %287 = vector.shape_cast %286 : vector<1x8x128xf32> to vector<8x128xf32>
    %288 = arith.index_cast %282 : i32 to index
    %c0_161 = arith.constant 0 : index
    %c0_162 = arith.constant 0 : index
    %289 = vector.load %arg10[%288, %c0_161, %c0_162] : memref<8x8x128xf32, #tpu.memory_space<vmem>>, vector<1x8x128xf32>
    %290 = vector.shape_cast %289 : vector<1x8x128xf32> to vector<8x128xf32>
    %291 = arith.addf %287, %290 : vector<8x128xf32>
    %292 = arith.truncf %283 : vector<8x32xf32> to vector<8x32xbf16>
    %cst_163 = arith.constant dense<0.000000e+00> : vector<8x128xf32>
    %293 = tpu.matmul %292, %9, %cst_163 {dimension_numbers = #tpu.dot_dimension_numbers<[1], [0], [0], [1], [0, 0, 1, 1], [], []>} : vector<8x32xbf16>, vector<32x128xbf16>, vector<8x128xf32> -> vector<8x128xf32>
    %294 = arith.addf %291, %293 : vector<8x128xf32>
    %295 = vector.extract_strided_slice %294 {offsets = [0, 0], sizes = [8, 96], strides = [1, 1]} : vector<8x128xf32> to vector<8x96xf32>
    %296 = arith.negf %295 : vector<8x96xf32>
    %297 = math.exp %296 : vector<8x96xf32>
    %cst_164 = arith.constant 1.000000e+00 : f32
    %298 = vector.broadcast %cst_164 : f32 to vector<8x96xf32>
    %299 = arith.addf %298, %297 : vector<8x96xf32>
    %300 = arith.divf %298, %299 : vector<8x96xf32>
    %301 = vector.extract_strided_slice %294 {offsets = [0, 96], sizes = [8, 32], strides = [1, 1]} : vector<8x128xf32> to vector<8x32xf32>
    %302 = math.tanh %301 : vector<8x32xf32>
    %303 = vector.extract_strided_slice %300 {offsets = [0, 0], sizes = [8, 32], strides = [1, 1]} : vector<8x96xf32> to vector<8x32xf32>
    %304 = vector.extract_strided_slice %300 {offsets = [0, 32], sizes = [8, 32], strides = [1, 1]} : vector<8x96xf32> to vector<8x32xf32>
    %305 = vector.extract_strided_slice %300 {offsets = [0, 64], sizes = [8, 32], strides = [1, 1]} : vector<8x96xf32> to vector<8x32xf32>
    %306 = arith.mulf %304, %284 : vector<8x32xf32>
    %307 = arith.mulf %303, %302 : vector<8x32xf32>
    %308 = arith.addf %306, %307 : vector<8x32xf32>
    %309 = math.tanh %308 : vector<8x32xf32>
    %310 = arith.mulf %305, %309 : vector<8x32xf32>
    %311 = vector.broadcast %282 : i32 to vector<8x32xi32>
    %312 = vector.broadcast %c3_i32 : i32 to vector<8x32xi32>
    %313 = arith.select %3, %311, %312 : vector<8x32xi1>, vector<8x32xi32>
    %314 = vector.broadcast %0 : vector<8x1xi32> to vector<8x32xi32>
    %315 = arith.cmpi slt, %313, %314 : vector<8x32xi32>
    %316 = arith.select %315, %310, %283 : vector<8x32xi1>, vector<8x32xf32>
    %c0_165 = arith.constant 0 : index
    %c0_166 = arith.constant 0 : index
    %317 = vector.load %arg14[%c0_165, %c0_166] : memref<8x32xf32, #tpu.memory_space<vmem>>, vector<8x32xf32>
    tpu.vector_store %arg14[%c0_165, %c0_166], %316 {strides = array<i32>} : memref<8x32xf32, #tpu.memory_space<vmem>>, vector<8x32xf32>,
    %318 = arith.select %315, %308, %284 : vector<8x32xi1>, vector<8x32xf32>
    %c0_167 = arith.constant 0 : index
    %c0_168 = arith.constant 0 : index
    %319 = vector.load %arg15[%c0_167, %c0_168] : memref<8x32xf32, #tpu.memory_space<vmem>>, vector<8x32xf32>
    tpu.vector_store %arg15[%c0_167, %c0_168], %318 {strides = array<i32>} : memref<8x32xf32, #tpu.memory_space<vmem>>, vector<8x32xf32>,
    %320 = vector.extract_strided_slice %315 {offsets = [0, 0], sizes = [8, 16], strides = [1, 1]} : vector<8x32xi1> to vector<8x16xi1>
    %321 = vector.extract_strided_slice %310 {offsets = [0, 0], sizes = [8, 16], strides = [1, 1]} : vector<8x32xf32> to vector<8x16xf32>
    %cst_169 = arith.constant 0.000000e+00 : f32
    %322 = vector.broadcast %cst_169 : f32 to vector<8x16xf32>
    %323 = arith.select %320, %321, %322 : vector<8x16xi1>, vector<8x16xf32>
    %324 = arith.index_cast %c3_i32 : i32 to index
    %c0_170 = arith.constant 0 : index
    %c0_171 = arith.constant 0 : index
    %325 = vector.load %arg12[%324, %c0_170, %c0_171] : memref<8x8x16xf32, #tpu.memory_space<vmem>>, vector<1x8x16xf32>
    %326 = vector.shape_cast %325 : vector<1x8x16xf32> to vector<8x16xf32>
    %327 = vector.shape_cast %323 : vector<8x16xf32> to vector<1x8x16xf32>
    tpu.vector_store %arg12[%324, %c0_170, %c0_171], %327 {strides = array<i32>} : memref<8x8x16xf32, #tpu.memory_space<vmem>>, vector<1x8x16xf32>,
    %328 = vector.extract_strided_slice %315 {offsets = [0, 16], sizes = [8, 16], strides = [1, 1]} : vector<8x32xi1> to vector<8x16xi1>
    %329 = vector.extract_strided_slice %310 {offsets = [0, 16], sizes = [8, 16], strides = [1, 1]} : vector<8x32xf32> to vector<8x16xf32>
    %cst_172 = arith.constant 0.000000e+00 : f32
    %330 = vector.broadcast %cst_172 : f32 to vector<8x16xf32>
    %331 = arith.select %328, %329, %330 : vector<8x16xi1>, vector<8x16xf32>
    %332 = arith.index_cast %282 : i32 to index
    %c0_173 = arith.constant 0 : index
    %c0_174 = arith.constant 0 : index
    %333 = vector.load %arg13[%332, %c0_173, %c0_174] : memref<8x8x16xf32, #tpu.memory_space<vmem>>, vector<1x8x16xf32>
    %334 = vector.shape_cast %333 : vector<1x8x16xf32> to vector<8x16xf32>
    %335 = vector.shape_cast %331 : vector<8x16xf32> to vector<1x8x16xf32>
    tpu.vector_store %arg13[%332, %c0_173, %c0_174], %335 {strides = array<i32>} : memref<8x8x16xf32, #tpu.memory_space<vmem>>, vector<1x8x16xf32>,
    %c4_i32 = arith.constant 4 : i32
    %c7_i32_175 = arith.constant 7 : i32
    %336 = arith.subi %c7_i32_175, %c4_i32 : i32
    %c0_176 = arith.constant 0 : index
    %c0_177 = arith.constant 0 : index
    %337 = vector.load %arg14[%c0_176, %c0_177] : memref<8x32xf32, #tpu.memory_space<vmem>>, vector<8x32xf32>
    %c0_178 = arith.constant 0 : index
    %c0_179 = arith.constant 0 : index
    %338 = vector.load %arg15[%c0_178, %c0_179] : memref<8x32xf32, #tpu.memory_space<vmem>>, vector<8x32xf32>
    %339 = arith.index_cast %c4_i32 : i32 to index
    %c0_180 = arith.constant 0 : index
    %c0_181 = arith.constant 0 : index
    %340 = vector.load %arg9[%339, %c0_180, %c0_181] : memref<8x8x128xf32, #tpu.memory_space<vmem>>, vector<1x8x128xf32>
    %341 = vector.shape_cast %340 : vector<1x8x128xf32> to vector<8x128xf32>
    %342 = arith.index_cast %336 : i32 to index
    %c0_182 = arith.constant 0 : index
    %c0_183 = arith.constant 0 : index
    %343 = vector.load %arg10[%342, %c0_182, %c0_183] : memref<8x8x128xf32, #tpu.memory_space<vmem>>, vector<1x8x128xf32>
    %344 = vector.shape_cast %343 : vector<1x8x128xf32> to vector<8x128xf32>
    %345 = arith.addf %341, %344 : vector<8x128xf32>
    %346 = arith.truncf %337 : vector<8x32xf32> to vector<8x32xbf16>
    %cst_184 = arith.constant dense<0.000000e+00> : vector<8x128xf32>
    %347 = tpu.matmul %346, %9, %cst_184 {dimension_numbers = #tpu.dot_dimension_numbers<[1], [0], [0], [1], [0, 0, 1, 1], [], []>} : vector<8x32xbf16>, vector<32x128xbf16>, vector<8x128xf32> -> vector<8x128xf32>
    %348 = arith.addf %345, %347 : vector<8x128xf32>
    %349 = vector.extract_strided_slice %348 {offsets = [0, 0], sizes = [8, 96], strides = [1, 1]} : vector<8x128xf32> to vector<8x96xf32>
    %350 = arith.negf %349 : vector<8x96xf32>
    %351 = math.exp %350 : vector<8x96xf32>
    %cst_185 = arith.constant 1.000000e+00 : f32
    %352 = vector.broadcast %cst_185 : f32 to vector<8x96xf32>
    %353 = arith.addf %352, %351 : vector<8x96xf32>
    %354 = arith.divf %352, %353 : vector<8x96xf32>
    %355 = vector.extract_strided_slice %348 {offsets = [0, 96], sizes = [8, 32], strides = [1, 1]} : vector<8x128xf32> to vector<8x32xf32>
    %356 = math.tanh %355 : vector<8x32xf32>
    %357 = vector.extract_strided_slice %354 {offsets = [0, 0], sizes = [8, 32], strides = [1, 1]} : vector<8x96xf32> to vector<8x32xf32>
    %358 = vector.extract_strided_slice %354 {offsets = [0, 32], sizes = [8, 32], strides = [1, 1]} : vector<8x96xf32> to vector<8x32xf32>
    %359 = vector.extract_strided_slice %354 {offsets = [0, 64], sizes = [8, 32], strides = [1, 1]} : vector<8x96xf32> to vector<8x32xf32>
    %360 = arith.mulf %358, %338 : vector<8x32xf32>
    %361 = arith.mulf %357, %356 : vector<8x32xf32>
    %362 = arith.addf %360, %361 : vector<8x32xf32>
    %363 = math.tanh %362 : vector<8x32xf32>
    %364 = arith.mulf %359, %363 : vector<8x32xf32>
    %365 = vector.broadcast %336 : i32 to vector<8x32xi32>
    %366 = vector.broadcast %c4_i32 : i32 to vector<8x32xi32>
    %367 = arith.select %3, %365, %366 : vector<8x32xi1>, vector<8x32xi32>
    %368 = vector.broadcast %0 : vector<8x1xi32> to vector<8x32xi32>
    %369 = arith.cmpi slt, %367, %368 : vector<8x32xi32>
    %370 = arith.select %369, %364, %337 : vector<8x32xi1>, vector<8x32xf32>
    %c0_186 = arith.constant 0 : index
    %c0_187 = arith.constant 0 : index
    %371 = vector.load %arg14[%c0_186, %c0_187] : memref<8x32xf32, #tpu.memory_space<vmem>>, vector<8x32xf32>
    tpu.vector_store %arg14[%c0_186, %c0_187], %370 {strides = array<i32>} : memref<8x32xf32, #tpu.memory_space<vmem>>, vector<8x32xf32>,
    %372 = arith.select %369, %362, %338 : vector<8x32xi1>, vector<8x32xf32>
    %c0_188 = arith.constant 0 : index
    %c0_189 = arith.constant 0 : index
    %373 = vector.load %arg15[%c0_188, %c0_189] : memref<8x32xf32, #tpu.memory_space<vmem>>, vector<8x32xf32>
    tpu.vector_store %arg15[%c0_188, %c0_189], %372 {strides = array<i32>} : memref<8x32xf32, #tpu.memory_space<vmem>>, vector<8x32xf32>,
    %374 = vector.extract_strided_slice %369 {offsets = [0, 0], sizes = [8, 16], strides = [1, 1]} : vector<8x32xi1> to vector<8x16xi1>
    %375 = vector.extract_strided_slice %364 {offsets = [0, 0], sizes = [8, 16], strides = [1, 1]} : vector<8x32xf32> to vector<8x16xf32>
    %cst_190 = arith.constant 0.000000e+00 : f32
    %376 = vector.broadcast %cst_190 : f32 to vector<8x16xf32>
    %377 = arith.select %374, %375, %376 : vector<8x16xi1>, vector<8x16xf32>
    %378 = arith.index_cast %c4_i32 : i32 to index
    %c0_191 = arith.constant 0 : index
    %c0_192 = arith.constant 0 : index
    %379 = vector.load %arg12[%378, %c0_191, %c0_192] : memref<8x8x16xf32, #tpu.memory_space<vmem>>, vector<1x8x16xf32>
    %380 = vector.shape_cast %379 : vector<1x8x16xf32> to vector<8x16xf32>
    %381 = vector.shape_cast %377 : vector<8x16xf32> to vector<1x8x16xf32>
    tpu.vector_store %arg12[%378, %c0_191, %c0_192], %381 {strides = array<i32>} : memref<8x8x16xf32, #tpu.memory_space<vmem>>, vector<1x8x16xf32>,
    %382 = vector.extract_strided_slice %369 {offsets = [0, 16], sizes = [8, 16], strides = [1, 1]} : vector<8x32xi1> to vector<8x16xi1>
    %383 = vector.extract_strided_slice %364 {offsets = [0, 16], sizes = [8, 16], strides = [1, 1]} : vector<8x32xf32> to vector<8x16xf32>
    %cst_193 = arith.constant 0.000000e+00 : f32
    %384 = vector.broadcast %cst_193 : f32 to vector<8x16xf32>
    %385 = arith.select %382, %383, %384 : vector<8x16xi1>, vector<8x16xf32>
    %386 = arith.index_cast %336 : i32 to index
    %c0_194 = arith.constant 0 : index
    %c0_195 = arith.constant 0 : index
    %387 = vector.load %arg13[%386, %c0_194, %c0_195] : memref<8x8x16xf32, #tpu.memory_space<vmem>>, vector<1x8x16xf32>
    %388 = vector.shape_cast %387 : vector<1x8x16xf32> to vector<8x16xf32>
    %389 = vector.shape_cast %385 : vector<8x16xf32> to vector<1x8x16xf32>
    tpu.vector_store %arg13[%386, %c0_194, %c0_195], %389 {strides = array<i32>} : memref<8x8x16xf32, #tpu.memory_space<vmem>>, vector<1x8x16xf32>,
    %c5_i32 = arith.constant 5 : i32
    %c7_i32_196 = arith.constant 7 : i32
    %390 = arith.subi %c7_i32_196, %c5_i32 : i32
    %c0_197 = arith.constant 0 : index
    %c0_198 = arith.constant 0 : index
    %391 = vector.load %arg14[%c0_197, %c0_198] : memref<8x32xf32, #tpu.memory_space<vmem>>, vector<8x32xf32>
    %c0_199 = arith.constant 0 : index
    %c0_200 = arith.constant 0 : index
    %392 = vector.load %arg15[%c0_199, %c0_200] : memref<8x32xf32, #tpu.memory_space<vmem>>, vector<8x32xf32>
    %393 = arith.index_cast %c5_i32 : i32 to index
    %c0_201 = arith.constant 0 : index
    %c0_202 = arith.constant 0 : index
    %394 = vector.load %arg9[%393, %c0_201, %c0_202] : memref<8x8x128xf32, #tpu.memory_space<vmem>>, vector<1x8x128xf32>
    %395 = vector.shape_cast %394 : vector<1x8x128xf32> to vector<8x128xf32>
    %396 = arith.index_cast %390 : i32 to index
    %c0_203 = arith.constant 0 : index
    %c0_204 = arith.constant 0 : index
    %397 = vector.load %arg10[%396, %c0_203, %c0_204] : memref<8x8x128xf32, #tpu.memory_space<vmem>>, vector<1x8x128xf32>
    %398 = vector.shape_cast %397 : vector<1x8x128xf32> to vector<8x128xf32>
    %399 = arith.addf %395, %398 : vector<8x128xf32>
    %400 = arith.truncf %391 : vector<8x32xf32> to vector<8x32xbf16>
    %cst_205 = arith.constant dense<0.000000e+00> : vector<8x128xf32>
    %401 = tpu.matmul %400, %9, %cst_205 {dimension_numbers = #tpu.dot_dimension_numbers<[1], [0], [0], [1], [0, 0, 1, 1], [], []>} : vector<8x32xbf16>, vector<32x128xbf16>, vector<8x128xf32> -> vector<8x128xf32>
    %402 = arith.addf %399, %401 : vector<8x128xf32>
    %403 = vector.extract_strided_slice %402 {offsets = [0, 0], sizes = [8, 96], strides = [1, 1]} : vector<8x128xf32> to vector<8x96xf32>
    %404 = arith.negf %403 : vector<8x96xf32>
    %405 = math.exp %404 : vector<8x96xf32>
    %cst_206 = arith.constant 1.000000e+00 : f32
    %406 = vector.broadcast %cst_206 : f32 to vector<8x96xf32>
    %407 = arith.addf %406, %405 : vector<8x96xf32>
    %408 = arith.divf %406, %407 : vector<8x96xf32>
    %409 = vector.extract_strided_slice %402 {offsets = [0, 96], sizes = [8, 32], strides = [1, 1]} : vector<8x128xf32> to vector<8x32xf32>
    %410 = math.tanh %409 : vector<8x32xf32>
    %411 = vector.extract_strided_slice %408 {offsets = [0, 0], sizes = [8, 32], strides = [1, 1]} : vector<8x96xf32> to vector<8x32xf32>
    %412 = vector.extract_strided_slice %408 {offsets = [0, 32], sizes = [8, 32], strides = [1, 1]} : vector<8x96xf32> to vector<8x32xf32>
    %413 = vector.extract_strided_slice %408 {offsets = [0, 64], sizes = [8, 32], strides = [1, 1]} : vector<8x96xf32> to vector<8x32xf32>
    %414 = arith.mulf %412, %392 : vector<8x32xf32>
    %415 = arith.mulf %411, %410 : vector<8x32xf32>
    %416 = arith.addf %414, %415 : vector<8x32xf32>
    %417 = math.tanh %416 : vector<8x32xf32>
    %418 = arith.mulf %413, %417 : vector<8x32xf32>
    %419 = vector.broadcast %390 : i32 to vector<8x32xi32>
    %420 = vector.broadcast %c5_i32 : i32 to vector<8x32xi32>
    %421 = arith.select %3, %419, %420 : vector<8x32xi1>, vector<8x32xi32>
    %422 = vector.broadcast %0 : vector<8x1xi32> to vector<8x32xi32>
    %423 = arith.cmpi slt, %421, %422 : vector<8x32xi32>
    %424 = arith.select %423, %418, %391 : vector<8x32xi1>, vector<8x32xf32>
    %c0_207 = arith.constant 0 : index
    %c0_208 = arith.constant 0 : index
    %425 = vector.load %arg14[%c0_207, %c0_208] : memref<8x32xf32, #tpu.memory_space<vmem>>, vector<8x32xf32>
    tpu.vector_store %arg14[%c0_207, %c0_208], %424 {strides = array<i32>} : memref<8x32xf32, #tpu.memory_space<vmem>>, vector<8x32xf32>,
    %426 = arith.select %423, %416, %392 : vector<8x32xi1>, vector<8x32xf32>
    %c0_209 = arith.constant 0 : index
    %c0_210 = arith.constant 0 : index
    %427 = vector.load %arg15[%c0_209, %c0_210] : memref<8x32xf32, #tpu.memory_space<vmem>>, vector<8x32xf32>
    tpu.vector_store %arg15[%c0_209, %c0_210], %426 {strides = array<i32>} : memref<8x32xf32, #tpu.memory_space<vmem>>, vector<8x32xf32>,
    %428 = vector.extract_strided_slice %423 {offsets = [0, 0], sizes = [8, 16], strides = [1, 1]} : vector<8x32xi1> to vector<8x16xi1>
    %429 = vector.extract_strided_slice %418 {offsets = [0, 0], sizes = [8, 16], strides = [1, 1]} : vector<8x32xf32> to vector<8x16xf32>
    %cst_211 = arith.constant 0.000000e+00 : f32
    %430 = vector.broadcast %cst_211 : f32 to vector<8x16xf32>
    %431 = arith.select %428, %429, %430 : vector<8x16xi1>, vector<8x16xf32>
    %432 = arith.index_cast %c5_i32 : i32 to index
    %c0_212 = arith.constant 0 : index
    %c0_213 = arith.constant 0 : index
    %433 = vector.load %arg12[%432, %c0_212, %c0_213] : memref<8x8x16xf32, #tpu.memory_space<vmem>>, vector<1x8x16xf32>
    %434 = vector.shape_cast %433 : vector<1x8x16xf32> to vector<8x16xf32>
    %435 = vector.shape_cast %431 : vector<8x16xf32> to vector<1x8x16xf32>
    tpu.vector_store %arg12[%432, %c0_212, %c0_213], %435 {strides = array<i32>} : memref<8x8x16xf32, #tpu.memory_space<vmem>>, vector<1x8x16xf32>,
    %436 = vector.extract_strided_slice %423 {offsets = [0, 16], sizes = [8, 16], strides = [1, 1]} : vector<8x32xi1> to vector<8x16xi1>
    %437 = vector.extract_strided_slice %418 {offsets = [0, 16], sizes = [8, 16], strides = [1, 1]} : vector<8x32xf32> to vector<8x16xf32>
    %cst_214 = arith.constant 0.000000e+00 : f32
    %438 = vector.broadcast %cst_214 : f32 to vector<8x16xf32>
    %439 = arith.select %436, %437, %438 : vector<8x16xi1>, vector<8x16xf32>
    %440 = arith.index_cast %390 : i32 to index
    %c0_215 = arith.constant 0 : index
    %c0_216 = arith.constant 0 : index
    %441 = vector.load %arg13[%440, %c0_215, %c0_216] : memref<8x8x16xf32, #tpu.memory_space<vmem>>, vector<1x8x16xf32>
    %442 = vector.shape_cast %441 : vector<1x8x16xf32> to vector<8x16xf32>
    %443 = vector.shape_cast %439 : vector<8x16xf32> to vector<1x8x16xf32>
    tpu.vector_store %arg13[%440, %c0_215, %c0_216], %443 {strides = array<i32>} : memref<8x8x16xf32, #tpu.memory_space<vmem>>, vector<1x8x16xf32>,
    %c6_i32 = arith.constant 6 : i32
    %c7_i32_217 = arith.constant 7 : i32
    %444 = arith.subi %c7_i32_217, %c6_i32 : i32
    %c0_218 = arith.constant 0 : index
    %c0_219 = arith.constant 0 : index
    %445 = vector.load %arg14[%c0_218, %c0_219] : memref<8x32xf32, #tpu.memory_space<vmem>>, vector<8x32xf32>
    %c0_220 = arith.constant 0 : index
    %c0_221 = arith.constant 0 : index
    %446 = vector.load %arg15[%c0_220, %c0_221] : memref<8x32xf32, #tpu.memory_space<vmem>>, vector<8x32xf32>
    %447 = arith.index_cast %c6_i32 : i32 to index
    %c0_222 = arith.constant 0 : index
    %c0_223 = arith.constant 0 : index
    %448 = vector.load %arg9[%447, %c0_222, %c0_223] : memref<8x8x128xf32, #tpu.memory_space<vmem>>, vector<1x8x128xf32>
    %449 = vector.shape_cast %448 : vector<1x8x128xf32> to vector<8x128xf32>
    %450 = arith.index_cast %444 : i32 to index
    %c0_224 = arith.constant 0 : index
    %c0_225 = arith.constant 0 : index
    %451 = vector.load %arg10[%450, %c0_224, %c0_225] : memref<8x8x128xf32, #tpu.memory_space<vmem>>, vector<1x8x128xf32>
    %452 = vector.shape_cast %451 : vector<1x8x128xf32> to vector<8x128xf32>
    %453 = arith.addf %449, %452 : vector<8x128xf32>
    %454 = arith.truncf %445 : vector<8x32xf32> to vector<8x32xbf16>
    %cst_226 = arith.constant dense<0.000000e+00> : vector<8x128xf32>
    %455 = tpu.matmul %454, %9, %cst_226 {dimension_numbers = #tpu.dot_dimension_numbers<[1], [0], [0], [1], [0, 0, 1, 1], [], []>} : vector<8x32xbf16>, vector<32x128xbf16>, vector<8x128xf32> -> vector<8x128xf32>
    %456 = arith.addf %453, %455 : vector<8x128xf32>
    %457 = vector.extract_strided_slice %456 {offsets = [0, 0], sizes = [8, 96], strides = [1, 1]} : vector<8x128xf32> to vector<8x96xf32>
    %458 = arith.negf %457 : vector<8x96xf32>
    %459 = math.exp %458 : vector<8x96xf32>
    %cst_227 = arith.constant 1.000000e+00 : f32
    %460 = vector.broadcast %cst_227 : f32 to vector<8x96xf32>
    %461 = arith.addf %460, %459 : vector<8x96xf32>
    %462 = arith.divf %460, %461 : vector<8x96xf32>
    %463 = vector.extract_strided_slice %456 {offsets = [0, 96], sizes = [8, 32], strides = [1, 1]} : vector<8x128xf32> to vector<8x32xf32>
    %464 = math.tanh %463 : vector<8x32xf32>
    %465 = vector.extract_strided_slice %462 {offsets = [0, 0], sizes = [8, 32], strides = [1, 1]} : vector<8x96xf32> to vector<8x32xf32>
    %466 = vector.extract_strided_slice %462 {offsets = [0, 32], sizes = [8, 32], strides = [1, 1]} : vector<8x96xf32> to vector<8x32xf32>
    %467 = vector.extract_strided_slice %462 {offsets = [0, 64], sizes = [8, 32], strides = [1, 1]} : vector<8x96xf32> to vector<8x32xf32>
    %468 = arith.mulf %466, %446 : vector<8x32xf32>
    %469 = arith.mulf %465, %464 : vector<8x32xf32>
    %470 = arith.addf %468, %469 : vector<8x32xf32>
    %471 = math.tanh %470 : vector<8x32xf32>
    %472 = arith.mulf %467, %471 : vector<8x32xf32>
    %473 = vector.broadcast %444 : i32 to vector<8x32xi32>
    %474 = vector.broadcast %c6_i32 : i32 to vector<8x32xi32>
    %475 = arith.select %3, %473, %474 : vector<8x32xi1>, vector<8x32xi32>
    %476 = vector.broadcast %0 : vector<8x1xi32> to vector<8x32xi32>
    %477 = arith.cmpi slt, %475, %476 : vector<8x32xi32>
    %478 = arith.select %477, %472, %445 : vector<8x32xi1>, vector<8x32xf32>
    %c0_228 = arith.constant 0 : index
    %c0_229 = arith.constant 0 : index
    %479 = vector.load %arg14[%c0_228, %c0_229] : memref<8x32xf32, #tpu.memory_space<vmem>>, vector<8x32xf32>
    tpu.vector_store %arg14[%c0_228, %c0_229], %478 {strides = array<i32>} : memref<8x32xf32, #tpu.memory_space<vmem>>, vector<8x32xf32>,
    %480 = arith.select %477, %470, %446 : vector<8x32xi1>, vector<8x32xf32>
    %c0_230 = arith.constant 0 : index
    %c0_231 = arith.constant 0 : index
    %481 = vector.load %arg15[%c0_230, %c0_231] : memref<8x32xf32, #tpu.memory_space<vmem>>, vector<8x32xf32>
    tpu.vector_store %arg15[%c0_230, %c0_231], %480 {strides = array<i32>} : memref<8x32xf32, #tpu.memory_space<vmem>>, vector<8x32xf32>,
    %482 = vector.extract_strided_slice %477 {offsets = [0, 0], sizes = [8, 16], strides = [1, 1]} : vector<8x32xi1> to vector<8x16xi1>
    %483 = vector.extract_strided_slice %472 {offsets = [0, 0], sizes = [8, 16], strides = [1, 1]} : vector<8x32xf32> to vector<8x16xf32>
    %cst_232 = arith.constant 0.000000e+00 : f32
    %484 = vector.broadcast %cst_232 : f32 to vector<8x16xf32>
    %485 = arith.select %482, %483, %484 : vector<8x16xi1>, vector<8x16xf32>
    %486 = arith.index_cast %c6_i32 : i32 to index
    %c0_233 = arith.constant 0 : index
    %c0_234 = arith.constant 0 : index
    %487 = vector.load %arg12[%486, %c0_233, %c0_234] : memref<8x8x16xf32, #tpu.memory_space<vmem>>, vector<1x8x16xf32>
    %488 = vector.shape_cast %487 : vector<1x8x16xf32> to vector<8x16xf32>
    %489 = vector.shape_cast %485 : vector<8x16xf32> to vector<1x8x16xf32>
    tpu.vector_store %arg12[%486, %c0_233, %c0_234], %489 {strides = array<i32>} : memref<8x8x16xf32, #tpu.memory_space<vmem>>, vector<1x8x16xf32>,
    %490 = vector.extract_strided_slice %477 {offsets = [0, 16], sizes = [8, 16], strides = [1, 1]} : vector<8x32xi1> to vector<8x16xi1>
    %491 = vector.extract_strided_slice %472 {offsets = [0, 16], sizes = [8, 16], strides = [1, 1]} : vector<8x32xf32> to vector<8x16xf32>
    %cst_235 = arith.constant 0.000000e+00 : f32
    %492 = vector.broadcast %cst_235 : f32 to vector<8x16xf32>
    %493 = arith.select %490, %491, %492 : vector<8x16xi1>, vector<8x16xf32>
    %494 = arith.index_cast %444 : i32 to index
    %c0_236 = arith.constant 0 : index
    %c0_237 = arith.constant 0 : index
    %495 = vector.load %arg13[%494, %c0_236, %c0_237] : memref<8x8x16xf32, #tpu.memory_space<vmem>>, vector<1x8x16xf32>
    %496 = vector.shape_cast %495 : vector<1x8x16xf32> to vector<8x16xf32>
    %497 = vector.shape_cast %493 : vector<8x16xf32> to vector<1x8x16xf32>
    tpu.vector_store %arg13[%494, %c0_236, %c0_237], %497 {strides = array<i32>} : memref<8x8x16xf32, #tpu.memory_space<vmem>>, vector<1x8x16xf32>,
    %c7_i32_238 = arith.constant 7 : i32
    %c7_i32_239 = arith.constant 7 : i32
    %498 = arith.subi %c7_i32_239, %c7_i32_238 : i32
    %c0_240 = arith.constant 0 : index
    %c0_241 = arith.constant 0 : index
    %499 = vector.load %arg14[%c0_240, %c0_241] : memref<8x32xf32, #tpu.memory_space<vmem>>, vector<8x32xf32>
    %c0_242 = arith.constant 0 : index
    %c0_243 = arith.constant 0 : index
    %500 = vector.load %arg15[%c0_242, %c0_243] : memref<8x32xf32, #tpu.memory_space<vmem>>, vector<8x32xf32>
    %501 = arith.index_cast %c7_i32_238 : i32 to index
    %c0_244 = arith.constant 0 : index
    %c0_245 = arith.constant 0 : index
    %502 = vector.load %arg9[%501, %c0_244, %c0_245] : memref<8x8x128xf32, #tpu.memory_space<vmem>>, vector<1x8x128xf32>
    %503 = vector.shape_cast %502 : vector<1x8x128xf32> to vector<8x128xf32>
    %504 = arith.index_cast %498 : i32 to index
    %c0_246 = arith.constant 0 : index
    %c0_247 = arith.constant 0 : index
    %505 = vector.load %arg10[%504, %c0_246, %c0_247] : memref<8x8x128xf32, #tpu.memory_space<vmem>>, vector<1x8x128xf32>
    %506 = vector.shape_cast %505 : vector<1x8x128xf32> to vector<8x128xf32>
    %507 = arith.addf %503, %506 : vector<8x128xf32>
    %508 = arith.truncf %499 : vector<8x32xf32> to vector<8x32xbf16>
    %cst_248 = arith.constant dense<0.000000e+00> : vector<8x128xf32>
    %509 = tpu.matmul %508, %9, %cst_248 {dimension_numbers = #tpu.dot_dimension_numbers<[1], [0], [0], [1], [0, 0, 1, 1], [], []>} : vector<8x32xbf16>, vector<32x128xbf16>, vector<8x128xf32> -> vector<8x128xf32>
    %510 = arith.addf %507, %509 : vector<8x128xf32>
    %511 = vector.extract_strided_slice %510 {offsets = [0, 0], sizes = [8, 96], strides = [1, 1]} : vector<8x128xf32> to vector<8x96xf32>
    %512 = arith.negf %511 : vector<8x96xf32>
    %513 = math.exp %512 : vector<8x96xf32>
    %cst_249 = arith.constant 1.000000e+00 : f32
    %514 = vector.broadcast %cst_249 : f32 to vector<8x96xf32>
    %515 = arith.addf %514, %513 : vector<8x96xf32>
    %516 = arith.divf %514, %515 : vector<8x96xf32>
    %517 = vector.extract_strided_slice %510 {offsets = [0, 96], sizes = [8, 32], strides = [1, 1]} : vector<8x128xf32> to vector<8x32xf32>
    %518 = math.tanh %517 : vector<8x32xf32>
    %519 = vector.extract_strided_slice %516 {offsets = [0, 0], sizes = [8, 32], strides = [1, 1]} : vector<8x96xf32> to vector<8x32xf32>
    %520 = vector.extract_strided_slice %516 {offsets = [0, 32], sizes = [8, 32], strides = [1, 1]} : vector<8x96xf32> to vector<8x32xf32>
    %521 = vector.extract_strided_slice %516 {offsets = [0, 64], sizes = [8, 32], strides = [1, 1]} : vector<8x96xf32> to vector<8x32xf32>
    %522 = arith.mulf %520, %500 : vector<8x32xf32>
    %523 = arith.mulf %519, %518 : vector<8x32xf32>
    %524 = arith.addf %522, %523 : vector<8x32xf32>
    %525 = math.tanh %524 : vector<8x32xf32>
    %526 = arith.mulf %521, %525 : vector<8x32xf32>
    %527 = vector.broadcast %498 : i32 to vector<8x32xi32>
    %528 = vector.broadcast %c7_i32_238 : i32 to vector<8x32xi32>
    %529 = arith.select %3, %527, %528 : vector<8x32xi1>, vector<8x32xi32>
    %530 = vector.broadcast %0 : vector<8x1xi32> to vector<8x32xi32>
    %531 = arith.cmpi slt, %529, %530 : vector<8x32xi32>
    %532 = arith.select %531, %526, %499 : vector<8x32xi1>, vector<8x32xf32>
    %c0_250 = arith.constant 0 : index
    %c0_251 = arith.constant 0 : index
    %533 = vector.load %arg14[%c0_250, %c0_251] : memref<8x32xf32, #tpu.memory_space<vmem>>, vector<8x32xf32>
    tpu.vector_store %arg14[%c0_250, %c0_251], %532 {strides = array<i32>} : memref<8x32xf32, #tpu.memory_space<vmem>>, vector<8x32xf32>,
    %534 = arith.select %531, %524, %500 : vector<8x32xi1>, vector<8x32xf32>
    %c0_252 = arith.constant 0 : index
    %c0_253 = arith.constant 0 : index
    %535 = vector.load %arg15[%c0_252, %c0_253] : memref<8x32xf32, #tpu.memory_space<vmem>>, vector<8x32xf32>
    tpu.vector_store %arg15[%c0_252, %c0_253], %534 {strides = array<i32>} : memref<8x32xf32, #tpu.memory_space<vmem>>, vector<8x32xf32>,
    %536 = vector.extract_strided_slice %531 {offsets = [0, 0], sizes = [8, 16], strides = [1, 1]} : vector<8x32xi1> to vector<8x16xi1>
    %537 = vector.extract_strided_slice %526 {offsets = [0, 0], sizes = [8, 16], strides = [1, 1]} : vector<8x32xf32> to vector<8x16xf32>
    %cst_254 = arith.constant 0.000000e+00 : f32
    %538 = vector.broadcast %cst_254 : f32 to vector<8x16xf32>
    %539 = arith.select %536, %537, %538 : vector<8x16xi1>, vector<8x16xf32>
    %540 = arith.index_cast %c7_i32_238 : i32 to index
    %c0_255 = arith.constant 0 : index
    %c0_256 = arith.constant 0 : index
    %541 = vector.load %arg12[%540, %c0_255, %c0_256] : memref<8x8x16xf32, #tpu.memory_space<vmem>>, vector<1x8x16xf32>
    %542 = vector.shape_cast %541 : vector<1x8x16xf32> to vector<8x16xf32>
    %543 = vector.shape_cast %539 : vector<8x16xf32> to vector<1x8x16xf32>
    tpu.vector_store %arg12[%540, %c0_255, %c0_256], %543 {strides = array<i32>} : memref<8x8x16xf32, #tpu.memory_space<vmem>>, vector<1x8x16xf32>,
    %544 = vector.extract_strided_slice %531 {offsets = [0, 16], sizes = [8, 16], strides = [1, 1]} : vector<8x32xi1> to vector<8x16xi1>
    %545 = vector.extract_strided_slice %526 {offsets = [0, 16], sizes = [8, 16], strides = [1, 1]} : vector<8x32xf32> to vector<8x16xf32>
    %cst_257 = arith.constant 0.000000e+00 : f32
    %546 = vector.broadcast %cst_257 : f32 to vector<8x16xf32>
    %547 = arith.select %544, %545, %546 : vector<8x16xi1>, vector<8x16xf32>
    %548 = arith.index_cast %498 : i32 to index
    %c0_258 = arith.constant 0 : index
    %c0_259 = arith.constant 0 : index
    %549 = vector.load %arg13[%548, %c0_258, %c0_259] : memref<8x8x16xf32, #tpu.memory_space<vmem>>, vector<1x8x16xf32>
    %550 = vector.shape_cast %549 : vector<1x8x16xf32> to vector<8x16xf32>
    %551 = vector.shape_cast %547 : vector<8x16xf32> to vector<1x8x16xf32>
    tpu.vector_store %arg13[%548, %c0_258, %c0_259], %551 {strides = array<i32>} : memref<8x8x16xf32, #tpu.memory_space<vmem>>, vector<1x8x16xf32>,
    %c8_i32 = arith.constant 8 : i32
    %c0_260 = arith.constant 0 : index
    %c0_261 = arith.constant 0 : index
    %c0_262 = arith.constant 0 : index
    %552 = vector.load %arg12[%c0_260, %c0_261, %c0_262] : memref<8x8x16xf32, #tpu.memory_space<vmem>>, vector<8x8x16xf32>
    %c0_263 = arith.constant 0 : index
    %c0_264 = arith.constant 0 : index
    %c0_265 = arith.constant 0 : index
    %553 = vector.load %arg13[%c0_263, %c0_264, %c0_265] : memref<8x8x16xf32, #tpu.memory_space<vmem>>, vector<8x8x16xf32>
    %554 = tpu.concatenate %552, %553 in 2 : vector<8x8x16xf32>, vector<8x8x16xf32> -> vector<8x8x32xf32>
    %c0_266 = arith.constant 0 : index
    %c0_267 = arith.constant 0 : index
    %c0_268 = arith.constant 0 : index
    %555 = vector.load %arg11[%c0_266, %c0_267, %c0_268] : memref<8x8x32xf32, #tpu.memory_space<vmem>>, vector<8x8x32xf32>
    tpu.vector_store %arg11[%c0_266, %c0_267, %c0_268], %554 {strides = array<i32>} : memref<8x8x32xf32, #tpu.memory_space<vmem>>, vector<8x8x32xf32>,
    %c1_269 = arith.constant 1 : index
    %c0_270 = arith.constant 0 : index
    %c0_271 = arith.constant 0 : index
    %556 = vector.load %arg3[%c1_269, %c0_270, %c0_271] : memref<2x32x256xf32, #tpu.memory_space<vmem>>, vector<1x32x256xf32>
    %557 = vector.shape_cast %556 : vector<1x32x256xf32> to vector<32x256xf32>
    %c1_272 = arith.constant 1 : index
    %c0_273 = arith.constant 0 : index
    %c0_274 = arith.constant 0 : index
    %558 = vector.load %arg4[%c1_272, %c0_273, %c0_274] : memref<2x1x128xf32, #tpu.memory_space<vmem>>, vector<1x1x128xf32>
    %559 = vector.shape_cast %558 : vector<1x1x128xf32> to vector<1x128xf32>
    %c1_275 = arith.constant 1 : index
    %c0_276 = arith.constant 0 : index
    %c0_277 = arith.constant 0 : index
    %560 = vector.load %arg5[%c1_275, %c0_276, %c0_277] : memref<2x32x128xbf16, #tpu.memory_space<vmem>>, vector<1x32x128xbf16>
    %561 = vector.shape_cast %560 : vector<1x32x128xbf16> to vector<32x128xbf16>
    %c0_278 = arith.constant 0 : index
    %c0_279 = arith.constant 0 : index
    %c0_280 = arith.constant 0 : index
    %562 = vector.load %arg11[%c0_278, %c0_279, %c0_280] : memref<8x8x32xf32, #tpu.memory_space<vmem>>, vector<1x8x32xf32>
    %563 = vector.shape_cast %562 : vector<1x8x32xf32> to vector<8x32xf32>
    %cst_281 = arith.constant dense<0.000000e+00> : vector<8x256xf32>
    %564 = tpu.matmul %563, %557, %cst_281 {dimension_numbers = #tpu.dot_dimension_numbers<[1], [0], [0], [1], [0, 0, 1, 1], [], []>} : vector<8x32xf32>, vector<32x256xf32>, vector<8x256xf32> -> vector<8x256xf32>
    %565 = vector.extract_strided_slice %564 {offsets = [0, 0], sizes = [8, 128], strides = [1, 1]} : vector<8x256xf32> to vector<8x128xf32>
    %566 = vector.broadcast %559 : vector<1x128xf32> to vector<8x128xf32>
    %567 = arith.addf %565, %566 : vector<8x128xf32>
    %c0_282 = arith.constant 0 : index
    %c0_283 = arith.constant 0 : index
    %c0_284 = arith.constant 0 : index
    %568 = vector.load %arg9[%c0_282, %c0_283, %c0_284] : memref<8x8x128xf32, #tpu.memory_space<vmem>>, vector<1x8x128xf32>
    %569 = vector.shape_cast %568 : vector<1x8x128xf32> to vector<8x128xf32>
    %570 = vector.shape_cast %567 : vector<8x128xf32> to vector<1x8x128xf32>
    tpu.vector_store %arg9[%c0_282, %c0_283, %c0_284], %570 {strides = array<i32>} : memref<8x8x128xf32, #tpu.memory_space<vmem>>, vector<1x8x128xf32>,
    %571 = vector.extract_strided_slice %564 {offsets = [0, 128], sizes = [8, 128], strides = [1, 1]} : vector<8x256xf32> to vector<8x128xf32>
    %c0_285 = arith.constant 0 : index
    %c0_286 = arith.constant 0 : index
    %c0_287 = arith.constant 0 : index
    %572 = vector.load %arg10[%c0_285, %c0_286, %c0_287] : memref<8x8x128xf32, #tpu.memory_space<vmem>>, vector<1x8x128xf32>
    %573 = vector.shape_cast %572 : vector<1x8x128xf32> to vector<8x128xf32>
    %574 = vector.shape_cast %571 : vector<8x128xf32> to vector<1x8x128xf32>
    tpu.vector_store %arg10[%c0_285, %c0_286, %c0_287], %574 {strides = array<i32>} : memref<8x8x128xf32, #tpu.memory_space<vmem>>, vector<1x8x128xf32>,
    %c1_288 = arith.constant 1 : index
    %c0_289 = arith.constant 0 : index
    %c0_290 = arith.constant 0 : index
    %575 = vector.load %arg11[%c1_288, %c0_289, %c0_290] : memref<8x8x32xf32, #tpu.memory_space<vmem>>, vector<1x8x32xf32>
    %576 = vector.shape_cast %575 : vector<1x8x32xf32> to vector<8x32xf32>
    %cst_291 = arith.constant dense<0.000000e+00> : vector<8x256xf32>
    %577 = tpu.matmul %576, %557, %cst_291 {dimension_numbers = #tpu.dot_dimension_numbers<[1], [0], [0], [1], [0, 0, 1, 1], [], []>} : vector<8x32xf32>, vector<32x256xf32>, vector<8x256xf32> -> vector<8x256xf32>
    %578 = vector.extract_strided_slice %577 {offsets = [0, 0], sizes = [8, 128], strides = [1, 1]} : vector<8x256xf32> to vector<8x128xf32>
    %579 = vector.broadcast %559 : vector<1x128xf32> to vector<8x128xf32>
    %580 = arith.addf %578, %579 : vector<8x128xf32>
    %c1_292 = arith.constant 1 : index
    %c0_293 = arith.constant 0 : index
    %c0_294 = arith.constant 0 : index
    %581 = vector.load %arg9[%c1_292, %c0_293, %c0_294] : memref<8x8x128xf32, #tpu.memory_space<vmem>>, vector<1x8x128xf32>
    %582 = vector.shape_cast %581 : vector<1x8x128xf32> to vector<8x128xf32>
    %583 = vector.shape_cast %580 : vector<8x128xf32> to vector<1x8x128xf32>
    tpu.vector_store %arg9[%c1_292, %c0_293, %c0_294], %583 {strides = array<i32>} : memref<8x8x128xf32, #tpu.memory_space<vmem>>, vector<1x8x128xf32>,
    %584 = vector.extract_strided_slice %577 {offsets = [0, 128], sizes = [8, 128], strides = [1, 1]} : vector<8x256xf32> to vector<8x128xf32>
    %c1_295 = arith.constant 1 : index
    %c0_296 = arith.constant 0 : index
    %c0_297 = arith.constant 0 : index
    %585 = vector.load %arg10[%c1_295, %c0_296, %c0_297] : memref<8x8x128xf32, #tpu.memory_space<vmem>>, vector<1x8x128xf32>
    %586 = vector.shape_cast %585 : vector<1x8x128xf32> to vector<8x128xf32>
    %587 = vector.shape_cast %584 : vector<8x128xf32> to vector<1x8x128xf32>
    tpu.vector_store %arg10[%c1_295, %c0_296, %c0_297], %587 {strides = array<i32>} : memref<8x8x128xf32, #tpu.memory_space<vmem>>, vector<1x8x128xf32>,
    %c2_298 = arith.constant 2 : index
    %c0_299 = arith.constant 0 : index
    %c0_300 = arith.constant 0 : index
    %588 = vector.load %arg11[%c2_298, %c0_299, %c0_300] : memref<8x8x32xf32, #tpu.memory_space<vmem>>, vector<1x8x32xf32>
    %589 = vector.shape_cast %588 : vector<1x8x32xf32> to vector<8x32xf32>
    %cst_301 = arith.constant dense<0.000000e+00> : vector<8x256xf32>
    %590 = tpu.matmul %589, %557, %cst_301 {dimension_numbers = #tpu.dot_dimension_numbers<[1], [0], [0], [1], [0, 0, 1, 1], [], []>} : vector<8x32xf32>, vector<32x256xf32>, vector<8x256xf32> -> vector<8x256xf32>
    %591 = vector.extract_strided_slice %590 {offsets = [0, 0], sizes = [8, 128], strides = [1, 1]} : vector<8x256xf32> to vector<8x128xf32>
    %592 = vector.broadcast %559 : vector<1x128xf32> to vector<8x128xf32>
    %593 = arith.addf %591, %592 : vector<8x128xf32>
    %c2_302 = arith.constant 2 : index
    %c0_303 = arith.constant 0 : index
    %c0_304 = arith.constant 0 : index
    %594 = vector.load %arg9[%c2_302, %c0_303, %c0_304] : memref<8x8x128xf32, #tpu.memory_space<vmem>>, vector<1x8x128xf32>
    %595 = vector.shape_cast %594 : vector<1x8x128xf32> to vector<8x128xf32>
    %596 = vector.shape_cast %593 : vector<8x128xf32> to vector<1x8x128xf32>
    tpu.vector_store %arg9[%c2_302, %c0_303, %c0_304], %596 {strides = array<i32>} : memref<8x8x128xf32, #tpu.memory_space<vmem>>, vector<1x8x128xf32>,
    %597 = vector.extract_strided_slice %590 {offsets = [0, 128], sizes = [8, 128], strides = [1, 1]} : vector<8x256xf32> to vector<8x128xf32>
    %c2_305 = arith.constant 2 : index
    %c0_306 = arith.constant 0 : index
    %c0_307 = arith.constant 0 : index
    %598 = vector.load %arg10[%c2_305, %c0_306, %c0_307] : memref<8x8x128xf32, #tpu.memory_space<vmem>>, vector<1x8x128xf32>
    %599 = vector.shape_cast %598 : vector<1x8x128xf32> to vector<8x128xf32>
    %600 = vector.shape_cast %597 : vector<8x128xf32> to vector<1x8x128xf32>
    tpu.vector_store %arg10[%c2_305, %c0_306, %c0_307], %600 {strides = array<i32>} : memref<8x8x128xf32, #tpu.memory_space<vmem>>, vector<1x8x128xf32>,
    %c3_308 = arith.constant 3 : index
    %c0_309 = arith.constant 0 : index
    %c0_310 = arith.constant 0 : index
    %601 = vector.load %arg11[%c3_308, %c0_309, %c0_310] : memref<8x8x32xf32, #tpu.memory_space<vmem>>, vector<1x8x32xf32>
    %602 = vector.shape_cast %601 : vector<1x8x32xf32> to vector<8x32xf32>
    %cst_311 = arith.constant dense<0.000000e+00> : vector<8x256xf32>
    %603 = tpu.matmul %602, %557, %cst_311 {dimension_numbers = #tpu.dot_dimension_numbers<[1], [0], [0], [1], [0, 0, 1, 1], [], []>} : vector<8x32xf32>, vector<32x256xf32>, vector<8x256xf32> -> vector<8x256xf32>
    %604 = vector.extract_strided_slice %603 {offsets = [0, 0], sizes = [8, 128], strides = [1, 1]} : vector<8x256xf32> to vector<8x128xf32>
    %605 = vector.broadcast %559 : vector<1x128xf32> to vector<8x128xf32>
    %606 = arith.addf %604, %605 : vector<8x128xf32>
    %c3_312 = arith.constant 3 : index
    %c0_313 = arith.constant 0 : index
    %c0_314 = arith.constant 0 : index
    %607 = vector.load %arg9[%c3_312, %c0_313, %c0_314] : memref<8x8x128xf32, #tpu.memory_space<vmem>>, vector<1x8x128xf32>
    %608 = vector.shape_cast %607 : vector<1x8x128xf32> to vector<8x128xf32>
    %609 = vector.shape_cast %606 : vector<8x128xf32> to vector<1x8x128xf32>
    tpu.vector_store %arg9[%c3_312, %c0_313, %c0_314], %609 {strides = array<i32>} : memref<8x8x128xf32, #tpu.memory_space<vmem>>, vector<1x8x128xf32>,
    %610 = vector.extract_strided_slice %603 {offsets = [0, 128], sizes = [8, 128], strides = [1, 1]} : vector<8x256xf32> to vector<8x128xf32>
    %c3_315 = arith.constant 3 : index
    %c0_316 = arith.constant 0 : index
    %c0_317 = arith.constant 0 : index
    %611 = vector.load %arg10[%c3_315, %c0_316, %c0_317] : memref<8x8x128xf32, #tpu.memory_space<vmem>>, vector<1x8x128xf32>
    %612 = vector.shape_cast %611 : vector<1x8x128xf32> to vector<8x128xf32>
    %613 = vector.shape_cast %610 : vector<8x128xf32> to vector<1x8x128xf32>
    tpu.vector_store %arg10[%c3_315, %c0_316, %c0_317], %613 {strides = array<i32>} : memref<8x8x128xf32, #tpu.memory_space<vmem>>, vector<1x8x128xf32>,
    %c4_318 = arith.constant 4 : index
    %c0_319 = arith.constant 0 : index
    %c0_320 = arith.constant 0 : index
    %614 = vector.load %arg11[%c4_318, %c0_319, %c0_320] : memref<8x8x32xf32, #tpu.memory_space<vmem>>, vector<1x8x32xf32>
    %615 = vector.shape_cast %614 : vector<1x8x32xf32> to vector<8x32xf32>
    %cst_321 = arith.constant dense<0.000000e+00> : vector<8x256xf32>
    %616 = tpu.matmul %615, %557, %cst_321 {dimension_numbers = #tpu.dot_dimension_numbers<[1], [0], [0], [1], [0, 0, 1, 1], [], []>} : vector<8x32xf32>, vector<32x256xf32>, vector<8x256xf32> -> vector<8x256xf32>
    %617 = vector.extract_strided_slice %616 {offsets = [0, 0], sizes = [8, 128], strides = [1, 1]} : vector<8x256xf32> to vector<8x128xf32>
    %618 = vector.broadcast %559 : vector<1x128xf32> to vector<8x128xf32>
    %619 = arith.addf %617, %618 : vector<8x128xf32>
    %c4_322 = arith.constant 4 : index
    %c0_323 = arith.constant 0 : index
    %c0_324 = arith.constant 0 : index
    %620 = vector.load %arg9[%c4_322, %c0_323, %c0_324] : memref<8x8x128xf32, #tpu.memory_space<vmem>>, vector<1x8x128xf32>
    %621 = vector.shape_cast %620 : vector<1x8x128xf32> to vector<8x128xf32>
    %622 = vector.shape_cast %619 : vector<8x128xf32> to vector<1x8x128xf32>
    tpu.vector_store %arg9[%c4_322, %c0_323, %c0_324], %622 {strides = array<i32>} : memref<8x8x128xf32, #tpu.memory_space<vmem>>, vector<1x8x128xf32>,
    %623 = vector.extract_strided_slice %616 {offsets = [0, 128], sizes = [8, 128], strides = [1, 1]} : vector<8x256xf32> to vector<8x128xf32>
    %c4_325 = arith.constant 4 : index
    %c0_326 = arith.constant 0 : index
    %c0_327 = arith.constant 0 : index
    %624 = vector.load %arg10[%c4_325, %c0_326, %c0_327] : memref<8x8x128xf32, #tpu.memory_space<vmem>>, vector<1x8x128xf32>
    %625 = vector.shape_cast %624 : vector<1x8x128xf32> to vector<8x128xf32>
    %626 = vector.shape_cast %623 : vector<8x128xf32> to vector<1x8x128xf32>
    tpu.vector_store %arg10[%c4_325, %c0_326, %c0_327], %626 {strides = array<i32>} : memref<8x8x128xf32, #tpu.memory_space<vmem>>, vector<1x8x128xf32>,
    %c5_328 = arith.constant 5 : index
    %c0_329 = arith.constant 0 : index
    %c0_330 = arith.constant 0 : index
    %627 = vector.load %arg11[%c5_328, %c0_329, %c0_330] : memref<8x8x32xf32, #tpu.memory_space<vmem>>, vector<1x8x32xf32>
    %628 = vector.shape_cast %627 : vector<1x8x32xf32> to vector<8x32xf32>
    %cst_331 = arith.constant dense<0.000000e+00> : vector<8x256xf32>
    %629 = tpu.matmul %628, %557, %cst_331 {dimension_numbers = #tpu.dot_dimension_numbers<[1], [0], [0], [1], [0, 0, 1, 1], [], []>} : vector<8x32xf32>, vector<32x256xf32>, vector<8x256xf32> -> vector<8x256xf32>
    %630 = vector.extract_strided_slice %629 {offsets = [0, 0], sizes = [8, 128], strides = [1, 1]} : vector<8x256xf32> to vector<8x128xf32>
    %631 = vector.broadcast %559 : vector<1x128xf32> to vector<8x128xf32>
    %632 = arith.addf %630, %631 : vector<8x128xf32>
    %c5_332 = arith.constant 5 : index
    %c0_333 = arith.constant 0 : index
    %c0_334 = arith.constant 0 : index
    %633 = vector.load %arg9[%c5_332, %c0_333, %c0_334] : memref<8x8x128xf32, #tpu.memory_space<vmem>>, vector<1x8x128xf32>
    %634 = vector.shape_cast %633 : vector<1x8x128xf32> to vector<8x128xf32>
    %635 = vector.shape_cast %632 : vector<8x128xf32> to vector<1x8x128xf32>
    tpu.vector_store %arg9[%c5_332, %c0_333, %c0_334], %635 {strides = array<i32>} : memref<8x8x128xf32, #tpu.memory_space<vmem>>, vector<1x8x128xf32>,
    %636 = vector.extract_strided_slice %629 {offsets = [0, 128], sizes = [8, 128], strides = [1, 1]} : vector<8x256xf32> to vector<8x128xf32>
    %c5_335 = arith.constant 5 : index
    %c0_336 = arith.constant 0 : index
    %c0_337 = arith.constant 0 : index
    %637 = vector.load %arg10[%c5_335, %c0_336, %c0_337] : memref<8x8x128xf32, #tpu.memory_space<vmem>>, vector<1x8x128xf32>
    %638 = vector.shape_cast %637 : vector<1x8x128xf32> to vector<8x128xf32>
    %639 = vector.shape_cast %636 : vector<8x128xf32> to vector<1x8x128xf32>
    tpu.vector_store %arg10[%c5_335, %c0_336, %c0_337], %639 {strides = array<i32>} : memref<8x8x128xf32, #tpu.memory_space<vmem>>, vector<1x8x128xf32>,
    %c6_338 = arith.constant 6 : index
    %c0_339 = arith.constant 0 : index
    %c0_340 = arith.constant 0 : index
    %640 = vector.load %arg11[%c6_338, %c0_339, %c0_340] : memref<8x8x32xf32, #tpu.memory_space<vmem>>, vector<1x8x32xf32>
    %641 = vector.shape_cast %640 : vector<1x8x32xf32> to vector<8x32xf32>
    %cst_341 = arith.constant dense<0.000000e+00> : vector<8x256xf32>
    %642 = tpu.matmul %641, %557, %cst_341 {dimension_numbers = #tpu.dot_dimension_numbers<[1], [0], [0], [1], [0, 0, 1, 1], [], []>} : vector<8x32xf32>, vector<32x256xf32>, vector<8x256xf32> -> vector<8x256xf32>
    %643 = vector.extract_strided_slice %642 {offsets = [0, 0], sizes = [8, 128], strides = [1, 1]} : vector<8x256xf32> to vector<8x128xf32>
    %644 = vector.broadcast %559 : vector<1x128xf32> to vector<8x128xf32>
    %645 = arith.addf %643, %644 : vector<8x128xf32>
    %c6_342 = arith.constant 6 : index
    %c0_343 = arith.constant 0 : index
    %c0_344 = arith.constant 0 : index
    %646 = vector.load %arg9[%c6_342, %c0_343, %c0_344] : memref<8x8x128xf32, #tpu.memory_space<vmem>>, vector<1x8x128xf32>
    %647 = vector.shape_cast %646 : vector<1x8x128xf32> to vector<8x128xf32>
    %648 = vector.shape_cast %645 : vector<8x128xf32> to vector<1x8x128xf32>
    tpu.vector_store %arg9[%c6_342, %c0_343, %c0_344], %648 {strides = array<i32>} : memref<8x8x128xf32, #tpu.memory_space<vmem>>, vector<1x8x128xf32>,
    %649 = vector.extract_strided_slice %642 {offsets = [0, 128], sizes = [8, 128], strides = [1, 1]} : vector<8x256xf32> to vector<8x128xf32>
    %c6_345 = arith.constant 6 : index
    %c0_346 = arith.constant 0 : index
    %c0_347 = arith.constant 0 : index
    %650 = vector.load %arg10[%c6_345, %c0_346, %c0_347] : memref<8x8x128xf32, #tpu.memory_space<vmem>>, vector<1x8x128xf32>
    %651 = vector.shape_cast %650 : vector<1x8x128xf32> to vector<8x128xf32>
    %652 = vector.shape_cast %649 : vector<8x128xf32> to vector<1x8x128xf32>
    tpu.vector_store %arg10[%c6_345, %c0_346, %c0_347], %652 {strides = array<i32>} : memref<8x8x128xf32, #tpu.memory_space<vmem>>, vector<1x8x128xf32>,
    %c7_348 = arith.constant 7 : index
    %c0_349 = arith.constant 0 : index
    %c0_350 = arith.constant 0 : index
    %653 = vector.load %arg11[%c7_348, %c0_349, %c0_350] : memref<8x8x32xf32, #tpu.memory_space<vmem>>, vector<1x8x32xf32>
    %654 = vector.shape_cast %653 : vector<1x8x32xf32> to vector<8x32xf32>
    %cst_351 = arith.constant dense<0.000000e+00> : vector<8x256xf32>
    %655 = tpu.matmul %654, %557, %cst_351 {dimension_numbers = #tpu.dot_dimension_numbers<[1], [0], [0], [1], [0, 0, 1, 1], [], []>} : vector<8x32xf32>, vector<32x256xf32>, vector<8x256xf32> -> vector<8x256xf32>
    %656 = vector.extract_strided_slice %655 {offsets = [0, 0], sizes = [8, 128], strides = [1, 1]} : vector<8x256xf32> to vector<8x128xf32>
    %657 = vector.broadcast %559 : vector<1x128xf32> to vector<8x128xf32>
    %658 = arith.addf %656, %657 : vector<8x128xf32>
    %c7_352 = arith.constant 7 : index
    %c0_353 = arith.constant 0 : index
    %c0_354 = arith.constant 0 : index
    %659 = vector.load %arg9[%c7_352, %c0_353, %c0_354] : memref<8x8x128xf32, #tpu.memory_space<vmem>>, vector<1x8x128xf32>
    %660 = vector.shape_cast %659 : vector<1x8x128xf32> to vector<8x128xf32>
    %661 = vector.shape_cast %658 : vector<8x128xf32> to vector<1x8x128xf32>
    tpu.vector_store %arg9[%c7_352, %c0_353, %c0_354], %661 {strides = array<i32>} : memref<8x8x128xf32, #tpu.memory_space<vmem>>, vector<1x8x128xf32>,
    %662 = vector.extract_strided_slice %655 {offsets = [0, 128], sizes = [8, 128], strides = [1, 1]} : vector<8x256xf32> to vector<8x128xf32>
    %c7_355 = arith.constant 7 : index
    %c0_356 = arith.constant 0 : index
    %c0_357 = arith.constant 0 : index
    %663 = vector.load %arg10[%c7_355, %c0_356, %c0_357] : memref<8x8x128xf32, #tpu.memory_space<vmem>>, vector<1x8x128xf32>
    %664 = vector.shape_cast %663 : vector<1x8x128xf32> to vector<8x128xf32>
    %665 = vector.shape_cast %662 : vector<8x128xf32> to vector<1x8x128xf32>
    tpu.vector_store %arg10[%c7_355, %c0_356, %c0_357], %665 {strides = array<i32>} : memref<8x8x128xf32, #tpu.memory_space<vmem>>, vector<1x8x128xf32>,
    %c1_358 = arith.constant 1 : index
    %c0_359 = arith.constant 0 : index
    %c0_360 = arith.constant 0 : index
    %666 = vector.load %arg6[%c1_358, %c0_359, %c0_360] : memref<2x8x32xf32, #tpu.memory_space<vmem>>, vector<1x8x32xf32>
    %667 = vector.shape_cast %666 : vector<1x8x32xf32> to vector<8x32xf32>
    %c0_361 = arith.constant 0 : index
    %c0_362 = arith.constant 0 : index
    %668 = vector.load %arg14[%c0_361, %c0_362] : memref<8x32xf32, #tpu.memory_space<vmem>>, vector<8x32xf32>
    tpu.vector_store %arg14[%c0_361, %c0_362], %667 {strides = array<i32>} : memref<8x32xf32, #tpu.memory_space<vmem>>, vector<8x32xf32>,
    %c1_363 = arith.constant 1 : index
    %c0_364 = arith.constant 0 : index
    %c0_365 = arith.constant 0 : index
    %669 = vector.load %arg7[%c1_363, %c0_364, %c0_365] : memref<2x8x32xf32, #tpu.memory_space<vmem>>, vector<1x8x32xf32>
    %670 = vector.shape_cast %669 : vector<1x8x32xf32> to vector<8x32xf32>
    %c0_366 = arith.constant 0 : index
    %c0_367 = arith.constant 0 : index
    %671 = vector.load %arg15[%c0_366, %c0_367] : memref<8x32xf32, #tpu.memory_space<vmem>>, vector<8x32xf32>
    tpu.vector_store %arg15[%c0_366, %c0_367], %670 {strides = array<i32>} : memref<8x32xf32, #tpu.memory_space<vmem>>, vector<8x32xf32>,
    %c0_i32_368 = arith.constant 0 : i32
    %c7_i32_369 = arith.constant 7 : i32
    %672 = arith.subi %c7_i32_369, %c0_i32_368 : i32
    %c0_370 = arith.constant 0 : index
    %c0_371 = arith.constant 0 : index
    %673 = vector.load %arg14[%c0_370, %c0_371] : memref<8x32xf32, #tpu.memory_space<vmem>>, vector<8x32xf32>
    %c0_372 = arith.constant 0 : index
    %c0_373 = arith.constant 0 : index
    %674 = vector.load %arg15[%c0_372, %c0_373] : memref<8x32xf32, #tpu.memory_space<vmem>>, vector<8x32xf32>
    %675 = arith.index_cast %c0_i32_368 : i32 to index
    %c0_374 = arith.constant 0 : index
    %c0_375 = arith.constant 0 : index
    %676 = vector.load %arg9[%675, %c0_374, %c0_375] : memref<8x8x128xf32, #tpu.memory_space<vmem>>, vector<1x8x128xf32>
    %677 = vector.shape_cast %676 : vector<1x8x128xf32> to vector<8x128xf32>
    %678 = arith.index_cast %672 : i32 to index
    %c0_376 = arith.constant 0 : index
    %c0_377 = arith.constant 0 : index
    %679 = vector.load %arg10[%678, %c0_376, %c0_377] : memref<8x8x128xf32, #tpu.memory_space<vmem>>, vector<1x8x128xf32>
    %680 = vector.shape_cast %679 : vector<1x8x128xf32> to vector<8x128xf32>
    %681 = arith.addf %677, %680 : vector<8x128xf32>
    %682 = arith.truncf %673 : vector<8x32xf32> to vector<8x32xbf16>
    %cst_378 = arith.constant dense<0.000000e+00> : vector<8x128xf32>
    %683 = tpu.matmul %682, %561, %cst_378 {dimension_numbers = #tpu.dot_dimension_numbers<[1], [0], [0], [1], [0, 0, 1, 1], [], []>} : vector<8x32xbf16>, vector<32x128xbf16>, vector<8x128xf32> -> vector<8x128xf32>
    %684 = arith.addf %681, %683 : vector<8x128xf32>
    %685 = vector.extract_strided_slice %684 {offsets = [0, 0], sizes = [8, 96], strides = [1, 1]} : vector<8x128xf32> to vector<8x96xf32>
    %686 = arith.negf %685 : vector<8x96xf32>
    %687 = math.exp %686 : vector<8x96xf32>
    %cst_379 = arith.constant 1.000000e+00 : f32
    %688 = vector.broadcast %cst_379 : f32 to vector<8x96xf32>
    %689 = arith.addf %688, %687 : vector<8x96xf32>
    %690 = arith.divf %688, %689 : vector<8x96xf32>
    %691 = vector.extract_strided_slice %684 {offsets = [0, 96], sizes = [8, 32], strides = [1, 1]} : vector<8x128xf32> to vector<8x32xf32>
    %692 = math.tanh %691 : vector<8x32xf32>
    %693 = vector.extract_strided_slice %690 {offsets = [0, 0], sizes = [8, 32], strides = [1, 1]} : vector<8x96xf32> to vector<8x32xf32>
    %694 = vector.extract_strided_slice %690 {offsets = [0, 32], sizes = [8, 32], strides = [1, 1]} : vector<8x96xf32> to vector<8x32xf32>
    %695 = vector.extract_strided_slice %690 {offsets = [0, 64], sizes = [8, 32], strides = [1, 1]} : vector<8x96xf32> to vector<8x32xf32>
    %696 = arith.mulf %694, %674 : vector<8x32xf32>
    %697 = arith.mulf %693, %692 : vector<8x32xf32>
    %698 = arith.addf %696, %697 : vector<8x32xf32>
    %699 = math.tanh %698 : vector<8x32xf32>
    %700 = arith.mulf %695, %699 : vector<8x32xf32>
    %701 = vector.broadcast %672 : i32 to vector<8x32xi32>
    %702 = vector.broadcast %c0_i32_368 : i32 to vector<8x32xi32>
    %703 = arith.select %3, %701, %702 : vector<8x32xi1>, vector<8x32xi32>
    %704 = vector.broadcast %0 : vector<8x1xi32> to vector<8x32xi32>
    %705 = arith.cmpi slt, %703, %704 : vector<8x32xi32>
    %706 = arith.select %705, %700, %673 : vector<8x32xi1>, vector<8x32xf32>
    %c0_380 = arith.constant 0 : index
    %c0_381 = arith.constant 0 : index
    %707 = vector.load %arg14[%c0_380, %c0_381] : memref<8x32xf32, #tpu.memory_space<vmem>>, vector<8x32xf32>
    tpu.vector_store %arg14[%c0_380, %c0_381], %706 {strides = array<i32>} : memref<8x32xf32, #tpu.memory_space<vmem>>, vector<8x32xf32>,
    %708 = arith.select %705, %698, %674 : vector<8x32xi1>, vector<8x32xf32>
    %c0_382 = arith.constant 0 : index
    %c0_383 = arith.constant 0 : index
    %709 = vector.load %arg15[%c0_382, %c0_383] : memref<8x32xf32, #tpu.memory_space<vmem>>, vector<8x32xf32>
    tpu.vector_store %arg15[%c0_382, %c0_383], %708 {strides = array<i32>} : memref<8x32xf32, #tpu.memory_space<vmem>>, vector<8x32xf32>,
    %710 = vector.extract_strided_slice %705 {offsets = [0, 0], sizes = [8, 16], strides = [1, 1]} : vector<8x32xi1> to vector<8x16xi1>
    %711 = vector.extract_strided_slice %700 {offsets = [0, 0], sizes = [8, 16], strides = [1, 1]} : vector<8x32xf32> to vector<8x16xf32>
    %cst_384 = arith.constant 0.000000e+00 : f32
    %712 = vector.broadcast %cst_384 : f32 to vector<8x16xf32>
    %713 = arith.select %710, %711, %712 : vector<8x16xi1>, vector<8x16xf32>
    %714 = arith.index_cast %c0_i32_368 : i32 to index
    %c0_385 = arith.constant 0 : index
    %c0_386 = arith.constant 0 : index
    %715 = vector.load %arg12[%714, %c0_385, %c0_386] : memref<8x8x16xf32, #tpu.memory_space<vmem>>, vector<1x8x16xf32>
    %716 = vector.shape_cast %715 : vector<1x8x16xf32> to vector<8x16xf32>
    %717 = vector.shape_cast %713 : vector<8x16xf32> to vector<1x8x16xf32>
    tpu.vector_store %arg12[%714, %c0_385, %c0_386], %717 {strides = array<i32>} : memref<8x8x16xf32, #tpu.memory_space<vmem>>, vector<1x8x16xf32>,
    %718 = vector.extract_strided_slice %705 {offsets = [0, 16], sizes = [8, 16], strides = [1, 1]} : vector<8x32xi1> to vector<8x16xi1>
    %719 = vector.extract_strided_slice %700 {offsets = [0, 16], sizes = [8, 16], strides = [1, 1]} : vector<8x32xf32> to vector<8x16xf32>
    %cst_387 = arith.constant 0.000000e+00 : f32
    %720 = vector.broadcast %cst_387 : f32 to vector<8x16xf32>
    %721 = arith.select %718, %719, %720 : vector<8x16xi1>, vector<8x16xf32>
    %722 = arith.index_cast %672 : i32 to index
    %c0_388 = arith.constant 0 : index
    %c0_389 = arith.constant 0 : index
    %723 = vector.load %arg13[%722, %c0_388, %c0_389] : memref<8x8x16xf32, #tpu.memory_space<vmem>>, vector<1x8x16xf32>
    %724 = vector.shape_cast %723 : vector<1x8x16xf32> to vector<8x16xf32>
    %725 = vector.shape_cast %721 : vector<8x16xf32> to vector<1x8x16xf32>
    tpu.vector_store %arg13[%722, %c0_388, %c0_389], %725 {strides = array<i32>} : memref<8x8x16xf32, #tpu.memory_space<vmem>>, vector<1x8x16xf32>,
    %c1_i32_390 = arith.constant 1 : i32
    %c7_i32_391 = arith.constant 7 : i32
    %726 = arith.subi %c7_i32_391, %c1_i32_390 : i32
    %c0_392 = arith.constant 0 : index
    %c0_393 = arith.constant 0 : index
    %727 = vector.load %arg14[%c0_392, %c0_393] : memref<8x32xf32, #tpu.memory_space<vmem>>, vector<8x32xf32>
    %c0_394 = arith.constant 0 : index
    %c0_395 = arith.constant 0 : index
    %728 = vector.load %arg15[%c0_394, %c0_395] : memref<8x32xf32, #tpu.memory_space<vmem>>, vector<8x32xf32>
    %729 = arith.index_cast %c1_i32_390 : i32 to index
    %c0_396 = arith.constant 0 : index
    %c0_397 = arith.constant 0 : index
    %730 = vector.load %arg9[%729, %c0_396, %c0_397] : memref<8x8x128xf32, #tpu.memory_space<vmem>>, vector<1x8x128xf32>
    %731 = vector.shape_cast %730 : vector<1x8x128xf32> to vector<8x128xf32>
    %732 = arith.index_cast %726 : i32 to index
    %c0_398 = arith.constant 0 : index
    %c0_399 = arith.constant 0 : index
    %733 = vector.load %arg10[%732, %c0_398, %c0_399] : memref<8x8x128xf32, #tpu.memory_space<vmem>>, vector<1x8x128xf32>
    %734 = vector.shape_cast %733 : vector<1x8x128xf32> to vector<8x128xf32>
    %735 = arith.addf %731, %734 : vector<8x128xf32>
    %736 = arith.truncf %727 : vector<8x32xf32> to vector<8x32xbf16>
    %cst_400 = arith.constant dense<0.000000e+00> : vector<8x128xf32>
    %737 = tpu.matmul %736, %561, %cst_400 {dimension_numbers = #tpu.dot_dimension_numbers<[1], [0], [0], [1], [0, 0, 1, 1], [], []>} : vector<8x32xbf16>, vector<32x128xbf16>, vector<8x128xf32> -> vector<8x128xf32>
    %738 = arith.addf %735, %737 : vector<8x128xf32>
    %739 = vector.extract_strided_slice %738 {offsets = [0, 0], sizes = [8, 96], strides = [1, 1]} : vector<8x128xf32> to vector<8x96xf32>
    %740 = arith.negf %739 : vector<8x96xf32>
    %741 = math.exp %740 : vector<8x96xf32>
    %cst_401 = arith.constant 1.000000e+00 : f32
    %742 = vector.broadcast %cst_401 : f32 to vector<8x96xf32>
    %743 = arith.addf %742, %741 : vector<8x96xf32>
    %744 = arith.divf %742, %743 : vector<8x96xf32>
    %745 = vector.extract_strided_slice %738 {offsets = [0, 96], sizes = [8, 32], strides = [1, 1]} : vector<8x128xf32> to vector<8x32xf32>
    %746 = math.tanh %745 : vector<8x32xf32>
    %747 = vector.extract_strided_slice %744 {offsets = [0, 0], sizes = [8, 32], strides = [1, 1]} : vector<8x96xf32> to vector<8x32xf32>
    %748 = vector.extract_strided_slice %744 {offsets = [0, 32], sizes = [8, 32], strides = [1, 1]} : vector<8x96xf32> to vector<8x32xf32>
    %749 = vector.extract_strided_slice %744 {offsets = [0, 64], sizes = [8, 32], strides = [1, 1]} : vector<8x96xf32> to vector<8x32xf32>
    %750 = arith.mulf %748, %728 : vector<8x32xf32>
    %751 = arith.mulf %747, %746 : vector<8x32xf32>
    %752 = arith.addf %750, %751 : vector<8x32xf32>
    %753 = math.tanh %752 : vector<8x32xf32>
    %754 = arith.mulf %749, %753 : vector<8x32xf32>
    %755 = vector.broadcast %726 : i32 to vector<8x32xi32>
    %756 = vector.broadcast %c1_i32_390 : i32 to vector<8x32xi32>
    %757 = arith.select %3, %755, %756 : vector<8x32xi1>, vector<8x32xi32>
    %758 = vector.broadcast %0 : vector<8x1xi32> to vector<8x32xi32>
    %759 = arith.cmpi slt, %757, %758 : vector<8x32xi32>
    %760 = arith.select %759, %754, %727 : vector<8x32xi1>, vector<8x32xf32>
    %c0_402 = arith.constant 0 : index
    %c0_403 = arith.constant 0 : index
    %761 = vector.load %arg14[%c0_402, %c0_403] : memref<8x32xf32, #tpu.memory_space<vmem>>, vector<8x32xf32>
    tpu.vector_store %arg14[%c0_402, %c0_403], %760 {strides = array<i32>} : memref<8x32xf32, #tpu.memory_space<vmem>>, vector<8x32xf32>,
    %762 = arith.select %759, %752, %728 : vector<8x32xi1>, vector<8x32xf32>
    %c0_404 = arith.constant 0 : index
    %c0_405 = arith.constant 0 : index
    %763 = vector.load %arg15[%c0_404, %c0_405] : memref<8x32xf32, #tpu.memory_space<vmem>>, vector<8x32xf32>
    tpu.vector_store %arg15[%c0_404, %c0_405], %762 {strides = array<i32>} : memref<8x32xf32, #tpu.memory_space<vmem>>, vector<8x32xf32>,
    %764 = vector.extract_strided_slice %759 {offsets = [0, 0], sizes = [8, 16], strides = [1, 1]} : vector<8x32xi1> to vector<8x16xi1>
    %765 = vector.extract_strided_slice %754 {offsets = [0, 0], sizes = [8, 16], strides = [1, 1]} : vector<8x32xf32> to vector<8x16xf32>
    %cst_406 = arith.constant 0.000000e+00 : f32
    %766 = vector.broadcast %cst_406 : f32 to vector<8x16xf32>
    %767 = arith.select %764, %765, %766 : vector<8x16xi1>, vector<8x16xf32>
    %768 = arith.index_cast %c1_i32_390 : i32 to index
    %c0_407 = arith.constant 0 : index
    %c0_408 = arith.constant 0 : index
    %769 = vector.load %arg12[%768, %c0_407, %c0_408] : memref<8x8x16xf32, #tpu.memory_space<vmem>>, vector<1x8x16xf32>
    %770 = vector.shape_cast %769 : vector<1x8x16xf32> to vector<8x16xf32>
    %771 = vector.shape_cast %767 : vector<8x16xf32> to vector<1x8x16xf32>
    tpu.vector_store %arg12[%768, %c0_407, %c0_408], %771 {strides = array<i32>} : memref<8x8x16xf32, #tpu.memory_space<vmem>>, vector<1x8x16xf32>,
    %772 = vector.extract_strided_slice %759 {offsets = [0, 16], sizes = [8, 16], strides = [1, 1]} : vector<8x32xi1> to vector<8x16xi1>
    %773 = vector.extract_strided_slice %754 {offsets = [0, 16], sizes = [8, 16], strides = [1, 1]} : vector<8x32xf32> to vector<8x16xf32>
    %cst_409 = arith.constant 0.000000e+00 : f32
    %774 = vector.broadcast %cst_409 : f32 to vector<8x16xf32>
    %775 = arith.select %772, %773, %774 : vector<8x16xi1>, vector<8x16xf32>
    %776 = arith.index_cast %726 : i32 to index
    %c0_410 = arith.constant 0 : index
    %c0_411 = arith.constant 0 : index
    %777 = vector.load %arg13[%776, %c0_410, %c0_411] : memref<8x8x16xf32, #tpu.memory_space<vmem>>, vector<1x8x16xf32>
    %778 = vector.shape_cast %777 : vector<1x8x16xf32> to vector<8x16xf32>
    %779 = vector.shape_cast %775 : vector<8x16xf32> to vector<1x8x16xf32>
    tpu.vector_store %arg13[%776, %c0_410, %c0_411], %779 {strides = array<i32>} : memref<8x8x16xf32, #tpu.memory_space<vmem>>, vector<1x8x16xf32>,
    %c2_i32_412 = arith.constant 2 : i32
    %c7_i32_413 = arith.constant 7 : i32
    %780 = arith.subi %c7_i32_413, %c2_i32_412 : i32
    %c0_414 = arith.constant 0 : index
    %c0_415 = arith.constant 0 : index
    %781 = vector.load %arg14[%c0_414, %c0_415] : memref<8x32xf32, #tpu.memory_space<vmem>>, vector<8x32xf32>
    %c0_416 = arith.constant 0 : index
    %c0_417 = arith.constant 0 : index
    %782 = vector.load %arg15[%c0_416, %c0_417] : memref<8x32xf32, #tpu.memory_space<vmem>>, vector<8x32xf32>
    %783 = arith.index_cast %c2_i32_412 : i32 to index
    %c0_418 = arith.constant 0 : index
    %c0_419 = arith.constant 0 : index
    %784 = vector.load %arg9[%783, %c0_418, %c0_419] : memref<8x8x128xf32, #tpu.memory_space<vmem>>, vector<1x8x128xf32>
    %785 = vector.shape_cast %784 : vector<1x8x128xf32> to vector<8x128xf32>
    %786 = arith.index_cast %780 : i32 to index
    %c0_420 = arith.constant 0 : index
    %c0_421 = arith.constant 0 : index
    %787 = vector.load %arg10[%786, %c0_420, %c0_421] : memref<8x8x128xf32, #tpu.memory_space<vmem>>, vector<1x8x128xf32>
    %788 = vector.shape_cast %787 : vector<1x8x128xf32> to vector<8x128xf32>
    %789 = arith.addf %785, %788 : vector<8x128xf32>
    %790 = arith.truncf %781 : vector<8x32xf32> to vector<8x32xbf16>
    %cst_422 = arith.constant dense<0.000000e+00> : vector<8x128xf32>
    %791 = tpu.matmul %790, %561, %cst_422 {dimension_numbers = #tpu.dot_dimension_numbers<[1], [0], [0], [1], [0, 0, 1, 1], [], []>} : vector<8x32xbf16>, vector<32x128xbf16>, vector<8x128xf32> -> vector<8x128xf32>
    %792 = arith.addf %789, %791 : vector<8x128xf32>
    %793 = vector.extract_strided_slice %792 {offsets = [0, 0], sizes = [8, 96], strides = [1, 1]} : vector<8x128xf32> to vector<8x96xf32>
    %794 = arith.negf %793 : vector<8x96xf32>
    %795 = math.exp %794 : vector<8x96xf32>
    %cst_423 = arith.constant 1.000000e+00 : f32
    %796 = vector.broadcast %cst_423 : f32 to vector<8x96xf32>
    %797 = arith.addf %796, %795 : vector<8x96xf32>
    %798 = arith.divf %796, %797 : vector<8x96xf32>
    %799 = vector.extract_strided_slice %792 {offsets = [0, 96], sizes = [8, 32], strides = [1, 1]} : vector<8x128xf32> to vector<8x32xf32>
    %800 = math.tanh %799 : vector<8x32xf32>
    %801 = vector.extract_strided_slice %798 {offsets = [0, 0], sizes = [8, 32], strides = [1, 1]} : vector<8x96xf32> to vector<8x32xf32>
    %802 = vector.extract_strided_slice %798 {offsets = [0, 32], sizes = [8, 32], strides = [1, 1]} : vector<8x96xf32> to vector<8x32xf32>
    %803 = vector.extract_strided_slice %798 {offsets = [0, 64], sizes = [8, 32], strides = [1, 1]} : vector<8x96xf32> to vector<8x32xf32>
    %804 = arith.mulf %802, %782 : vector<8x32xf32>
    %805 = arith.mulf %801, %800 : vector<8x32xf32>
    %806 = arith.addf %804, %805 : vector<8x32xf32>
    %807 = math.tanh %806 : vector<8x32xf32>
    %808 = arith.mulf %803, %807 : vector<8x32xf32>
    %809 = vector.broadcast %780 : i32 to vector<8x32xi32>
    %810 = vector.broadcast %c2_i32_412 : i32 to vector<8x32xi32>
    %811 = arith.select %3, %809, %810 : vector<8x32xi1>, vector<8x32xi32>
    %812 = vector.broadcast %0 : vector<8x1xi32> to vector<8x32xi32>
    %813 = arith.cmpi slt, %811, %812 : vector<8x32xi32>
    %814 = arith.select %813, %808, %781 : vector<8x32xi1>, vector<8x32xf32>
    %c0_424 = arith.constant 0 : index
    %c0_425 = arith.constant 0 : index
    %815 = vector.load %arg14[%c0_424, %c0_425] : memref<8x32xf32, #tpu.memory_space<vmem>>, vector<8x32xf32>
    tpu.vector_store %arg14[%c0_424, %c0_425], %814 {strides = array<i32>} : memref<8x32xf32, #tpu.memory_space<vmem>>, vector<8x32xf32>,
    %816 = arith.select %813, %806, %782 : vector<8x32xi1>, vector<8x32xf32>
    %c0_426 = arith.constant 0 : index
    %c0_427 = arith.constant 0 : index
    %817 = vector.load %arg15[%c0_426, %c0_427] : memref<8x32xf32, #tpu.memory_space<vmem>>, vector<8x32xf32>
    tpu.vector_store %arg15[%c0_426, %c0_427], %816 {strides = array<i32>} : memref<8x32xf32, #tpu.memory_space<vmem>>, vector<8x32xf32>,
    %818 = vector.extract_strided_slice %813 {offsets = [0, 0], sizes = [8, 16], strides = [1, 1]} : vector<8x32xi1> to vector<8x16xi1>
    %819 = vector.extract_strided_slice %808 {offsets = [0, 0], sizes = [8, 16], strides = [1, 1]} : vector<8x32xf32> to vector<8x16xf32>
    %cst_428 = arith.constant 0.000000e+00 : f32
    %820 = vector.broadcast %cst_428 : f32 to vector<8x16xf32>
    %821 = arith.select %818, %819, %820 : vector<8x16xi1>, vector<8x16xf32>
    %822 = arith.index_cast %c2_i32_412 : i32 to index
    %c0_429 = arith.constant 0 : index
    %c0_430 = arith.constant 0 : index
    %823 = vector.load %arg12[%822, %c0_429, %c0_430] : memref<8x8x16xf32, #tpu.memory_space<vmem>>, vector<1x8x16xf32>
    %824 = vector.shape_cast %823 : vector<1x8x16xf32> to vector<8x16xf32>
    %825 = vector.shape_cast %821 : vector<8x16xf32> to vector<1x8x16xf32>
    tpu.vector_store %arg12[%822, %c0_429, %c0_430], %825 {strides = array<i32>} : memref<8x8x16xf32, #tpu.memory_space<vmem>>, vector<1x8x16xf32>,
    %826 = vector.extract_strided_slice %813 {offsets = [0, 16], sizes = [8, 16], strides = [1, 1]} : vector<8x32xi1> to vector<8x16xi1>
    %827 = vector.extract_strided_slice %808 {offsets = [0, 16], sizes = [8, 16], strides = [1, 1]} : vector<8x32xf32> to vector<8x16xf32>
    %cst_431 = arith.constant 0.000000e+00 : f32
    %828 = vector.broadcast %cst_431 : f32 to vector<8x16xf32>
    %829 = arith.select %826, %827, %828 : vector<8x16xi1>, vector<8x16xf32>
    %830 = arith.index_cast %780 : i32 to index
    %c0_432 = arith.constant 0 : index
    %c0_433 = arith.constant 0 : index
    %831 = vector.load %arg13[%830, %c0_432, %c0_433] : memref<8x8x16xf32, #tpu.memory_space<vmem>>, vector<1x8x16xf32>
    %832 = vector.shape_cast %831 : vector<1x8x16xf32> to vector<8x16xf32>
    %833 = vector.shape_cast %829 : vector<8x16xf32> to vector<1x8x16xf32>
    tpu.vector_store %arg13[%830, %c0_432, %c0_433], %833 {strides = array<i32>} : memref<8x8x16xf32, #tpu.memory_space<vmem>>, vector<1x8x16xf32>,
    %c3_i32_434 = arith.constant 3 : i32
    %c7_i32_435 = arith.constant 7 : i32
    %834 = arith.subi %c7_i32_435, %c3_i32_434 : i32
    %c0_436 = arith.constant 0 : index
    %c0_437 = arith.constant 0 : index
    %835 = vector.load %arg14[%c0_436, %c0_437] : memref<8x32xf32, #tpu.memory_space<vmem>>, vector<8x32xf32>
    %c0_438 = arith.constant 0 : index
    %c0_439 = arith.constant 0 : index
    %836 = vector.load %arg15[%c0_438, %c0_439] : memref<8x32xf32, #tpu.memory_space<vmem>>, vector<8x32xf32>
    %837 = arith.index_cast %c3_i32_434 : i32 to index
    %c0_440 = arith.constant 0 : index
    %c0_441 = arith.constant 0 : index
    %838 = vector.load %arg9[%837, %c0_440, %c0_441] : memref<8x8x128xf32, #tpu.memory_space<vmem>>, vector<1x8x128xf32>
    %839 = vector.shape_cast %838 : vector<1x8x128xf32> to vector<8x128xf32>
    %840 = arith.index_cast %834 : i32 to index
    %c0_442 = arith.constant 0 : index
    %c0_443 = arith.constant 0 : index
    %841 = vector.load %arg10[%840, %c0_442, %c0_443] : memref<8x8x128xf32, #tpu.memory_space<vmem>>, vector<1x8x128xf32>
    %842 = vector.shape_cast %841 : vector<1x8x128xf32> to vector<8x128xf32>
    %843 = arith.addf %839, %842 : vector<8x128xf32>
    %844 = arith.truncf %835 : vector<8x32xf32> to vector<8x32xbf16>
    %cst_444 = arith.constant dense<0.000000e+00> : vector<8x128xf32>
    %845 = tpu.matmul %844, %561, %cst_444 {dimension_numbers = #tpu.dot_dimension_numbers<[1], [0], [0], [1], [0, 0, 1, 1], [], []>} : vector<8x32xbf16>, vector<32x128xbf16>, vector<8x128xf32> -> vector<8x128xf32>
    %846 = arith.addf %843, %845 : vector<8x128xf32>
    %847 = vector.extract_strided_slice %846 {offsets = [0, 0], sizes = [8, 96], strides = [1, 1]} : vector<8x128xf32> to vector<8x96xf32>
    %848 = arith.negf %847 : vector<8x96xf32>
    %849 = math.exp %848 : vector<8x96xf32>
    %cst_445 = arith.constant 1.000000e+00 : f32
    %850 = vector.broadcast %cst_445 : f32 to vector<8x96xf32>
    %851 = arith.addf %850, %849 : vector<8x96xf32>
    %852 = arith.divf %850, %851 : vector<8x96xf32>
    %853 = vector.extract_strided_slice %846 {offsets = [0, 96], sizes = [8, 32], strides = [1, 1]} : vector<8x128xf32> to vector<8x32xf32>
    %854 = math.tanh %853 : vector<8x32xf32>
    %855 = vector.extract_strided_slice %852 {offsets = [0, 0], sizes = [8, 32], strides = [1, 1]} : vector<8x96xf32> to vector<8x32xf32>
    %856 = vector.extract_strided_slice %852 {offsets = [0, 32], sizes = [8, 32], strides = [1, 1]} : vector<8x96xf32> to vector<8x32xf32>
    %857 = vector.extract_strided_slice %852 {offsets = [0, 64], sizes = [8, 32], strides = [1, 1]} : vector<8x96xf32> to vector<8x32xf32>
    %858 = arith.mulf %856, %836 : vector<8x32xf32>
    %859 = arith.mulf %855, %854 : vector<8x32xf32>
    %860 = arith.addf %858, %859 : vector<8x32xf32>
    %861 = math.tanh %860 : vector<8x32xf32>
    %862 = arith.mulf %857, %861 : vector<8x32xf32>
    %863 = vector.broadcast %834 : i32 to vector<8x32xi32>
    %864 = vector.broadcast %c3_i32_434 : i32 to vector<8x32xi32>
    %865 = arith.select %3, %863, %864 : vector<8x32xi1>, vector<8x32xi32>
    %866 = vector.broadcast %0 : vector<8x1xi32> to vector<8x32xi32>
    %867 = arith.cmpi slt, %865, %866 : vector<8x32xi32>
    %868 = arith.select %867, %862, %835 : vector<8x32xi1>, vector<8x32xf32>
    %c0_446 = arith.constant 0 : index
    %c0_447 = arith.constant 0 : index
    %869 = vector.load %arg14[%c0_446, %c0_447] : memref<8x32xf32, #tpu.memory_space<vmem>>, vector<8x32xf32>
    tpu.vector_store %arg14[%c0_446, %c0_447], %868 {strides = array<i32>} : memref<8x32xf32, #tpu.memory_space<vmem>>, vector<8x32xf32>,
    %870 = arith.select %867, %860, %836 : vector<8x32xi1>, vector<8x32xf32>
    %c0_448 = arith.constant 0 : index
    %c0_449 = arith.constant 0 : index
    %871 = vector.load %arg15[%c0_448, %c0_449] : memref<8x32xf32, #tpu.memory_space<vmem>>, vector<8x32xf32>
    tpu.vector_store %arg15[%c0_448, %c0_449], %870 {strides = array<i32>} : memref<8x32xf32, #tpu.memory_space<vmem>>, vector<8x32xf32>,
    %872 = vector.extract_strided_slice %867 {offsets = [0, 0], sizes = [8, 16], strides = [1, 1]} : vector<8x32xi1> to vector<8x16xi1>
    %873 = vector.extract_strided_slice %862 {offsets = [0, 0], sizes = [8, 16], strides = [1, 1]} : vector<8x32xf32> to vector<8x16xf32>
    %cst_450 = arith.constant 0.000000e+00 : f32
    %874 = vector.broadcast %cst_450 : f32 to vector<8x16xf32>
    %875 = arith.select %872, %873, %874 : vector<8x16xi1>, vector<8x16xf32>
    %876 = arith.index_cast %c3_i32_434 : i32 to index
    %c0_451 = arith.constant 0 : index
    %c0_452 = arith.constant 0 : index
    %877 = vector.load %arg12[%876, %c0_451, %c0_452] : memref<8x8x16xf32, #tpu.memory_space<vmem>>, vector<1x8x16xf32>
    %878 = vector.shape_cast %877 : vector<1x8x16xf32> to vector<8x16xf32>
    %879 = vector.shape_cast %875 : vector<8x16xf32> to vector<1x8x16xf32>
    tpu.vector_store %arg12[%876, %c0_451, %c0_452], %879 {strides = array<i32>} : memref<8x8x16xf32, #tpu.memory_space<vmem>>, vector<1x8x16xf32>,
    %880 = vector.extract_strided_slice %867 {offsets = [0, 16], sizes = [8, 16], strides = [1, 1]} : vector<8x32xi1> to vector<8x16xi1>
    %881 = vector.extract_strided_slice %862 {offsets = [0, 16], sizes = [8, 16], strides = [1, 1]} : vector<8x32xf32> to vector<8x16xf32>
    %cst_453 = arith.constant 0.000000e+00 : f32
    %882 = vector.broadcast %cst_453 : f32 to vector<8x16xf32>
    %883 = arith.select %880, %881, %882 : vector<8x16xi1>, vector<8x16xf32>
    %884 = arith.index_cast %834 : i32 to index
    %c0_454 = arith.constant 0 : index
    %c0_455 = arith.constant 0 : index
    %885 = vector.load %arg13[%884, %c0_454, %c0_455] : memref<8x8x16xf32, #tpu.memory_space<vmem>>, vector<1x8x16xf32>
    %886 = vector.shape_cast %885 : vector<1x8x16xf32> to vector<8x16xf32>
    %887 = vector.shape_cast %883 : vector<8x16xf32> to vector<1x8x16xf32>
    tpu.vector_store %arg13[%884, %c0_454, %c0_455], %887 {strides = array<i32>} : memref<8x8x16xf32, #tpu.memory_space<vmem>>, vector<1x8x16xf32>,
    %c4_i32_456 = arith.constant 4 : i32
    %c7_i32_457 = arith.constant 7 : i32
    %888 = arith.subi %c7_i32_457, %c4_i32_456 : i32
    %c0_458 = arith.constant 0 : index
    %c0_459 = arith.constant 0 : index
    %889 = vector.load %arg14[%c0_458, %c0_459] : memref<8x32xf32, #tpu.memory_space<vmem>>, vector<8x32xf32>
    %c0_460 = arith.constant 0 : index
    %c0_461 = arith.constant 0 : index
    %890 = vector.load %arg15[%c0_460, %c0_461] : memref<8x32xf32, #tpu.memory_space<vmem>>, vector<8x32xf32>
    %891 = arith.index_cast %c4_i32_456 : i32 to index
    %c0_462 = arith.constant 0 : index
    %c0_463 = arith.constant 0 : index
    %892 = vector.load %arg9[%891, %c0_462, %c0_463] : memref<8x8x128xf32, #tpu.memory_space<vmem>>, vector<1x8x128xf32>
    %893 = vector.shape_cast %892 : vector<1x8x128xf32> to vector<8x128xf32>
    %894 = arith.index_cast %888 : i32 to index
    %c0_464 = arith.constant 0 : index
    %c0_465 = arith.constant 0 : index
    %895 = vector.load %arg10[%894, %c0_464, %c0_465] : memref<8x8x128xf32, #tpu.memory_space<vmem>>, vector<1x8x128xf32>
    %896 = vector.shape_cast %895 : vector<1x8x128xf32> to vector<8x128xf32>
    %897 = arith.addf %893, %896 : vector<8x128xf32>
    %898 = arith.truncf %889 : vector<8x32xf32> to vector<8x32xbf16>
    %cst_466 = arith.constant dense<0.000000e+00> : vector<8x128xf32>
    %899 = tpu.matmul %898, %561, %cst_466 {dimension_numbers = #tpu.dot_dimension_numbers<[1], [0], [0], [1], [0, 0, 1, 1], [], []>} : vector<8x32xbf16>, vector<32x128xbf16>, vector<8x128xf32> -> vector<8x128xf32>
    %900 = arith.addf %897, %899 : vector<8x128xf32>
    %901 = vector.extract_strided_slice %900 {offsets = [0, 0], sizes = [8, 96], strides = [1, 1]} : vector<8x128xf32> to vector<8x96xf32>
    %902 = arith.negf %901 : vector<8x96xf32>
    %903 = math.exp %902 : vector<8x96xf32>
    %cst_467 = arith.constant 1.000000e+00 : f32
    %904 = vector.broadcast %cst_467 : f32 to vector<8x96xf32>
    %905 = arith.addf %904, %903 : vector<8x96xf32>
    %906 = arith.divf %904, %905 : vector<8x96xf32>
    %907 = vector.extract_strided_slice %900 {offsets = [0, 96], sizes = [8, 32], strides = [1, 1]} : vector<8x128xf32> to vector<8x32xf32>
    %908 = math.tanh %907 : vector<8x32xf32>
    %909 = vector.extract_strided_slice %906 {offsets = [0, 0], sizes = [8, 32], strides = [1, 1]} : vector<8x96xf32> to vector<8x32xf32>
    %910 = vector.extract_strided_slice %906 {offsets = [0, 32], sizes = [8, 32], strides = [1, 1]} : vector<8x96xf32> to vector<8x32xf32>
    %911 = vector.extract_strided_slice %906 {offsets = [0, 64], sizes = [8, 32], strides = [1, 1]} : vector<8x96xf32> to vector<8x32xf32>
    %912 = arith.mulf %910, %890 : vector<8x32xf32>
    %913 = arith.mulf %909, %908 : vector<8x32xf32>
    %914 = arith.addf %912, %913 : vector<8x32xf32>
    %915 = math.tanh %914 : vector<8x32xf32>
    %916 = arith.mulf %911, %915 : vector<8x32xf32>
    %917 = vector.broadcast %888 : i32 to vector<8x32xi32>
    %918 = vector.broadcast %c4_i32_456 : i32 to vector<8x32xi32>
    %919 = arith.select %3, %917, %918 : vector<8x32xi1>, vector<8x32xi32>
    %920 = vector.broadcast %0 : vector<8x1xi32> to vector<8x32xi32>
    %921 = arith.cmpi slt, %919, %920 : vector<8x32xi32>
    %922 = arith.select %921, %916, %889 : vector<8x32xi1>, vector<8x32xf32>
    %c0_468 = arith.constant 0 : index
    %c0_469 = arith.constant 0 : index
    %923 = vector.load %arg14[%c0_468, %c0_469] : memref<8x32xf32, #tpu.memory_space<vmem>>, vector<8x32xf32>
    tpu.vector_store %arg14[%c0_468, %c0_469], %922 {strides = array<i32>} : memref<8x32xf32, #tpu.memory_space<vmem>>, vector<8x32xf32>,
    %924 = arith.select %921, %914, %890 : vector<8x32xi1>, vector<8x32xf32>
    %c0_470 = arith.constant 0 : index
    %c0_471 = arith.constant 0 : index
    %925 = vector.load %arg15[%c0_470, %c0_471] : memref<8x32xf32, #tpu.memory_space<vmem>>, vector<8x32xf32>
    tpu.vector_store %arg15[%c0_470, %c0_471], %924 {strides = array<i32>} : memref<8x32xf32, #tpu.memory_space<vmem>>, vector<8x32xf32>,
    %926 = vector.extract_strided_slice %921 {offsets = [0, 0], sizes = [8, 16], strides = [1, 1]} : vector<8x32xi1> to vector<8x16xi1>
    %927 = vector.extract_strided_slice %916 {offsets = [0, 0], sizes = [8, 16], strides = [1, 1]} : vector<8x32xf32> to vector<8x16xf32>
    %cst_472 = arith.constant 0.000000e+00 : f32
    %928 = vector.broadcast %cst_472 : f32 to vector<8x16xf32>
    %929 = arith.select %926, %927, %928 : vector<8x16xi1>, vector<8x16xf32>
    %930 = arith.index_cast %c4_i32_456 : i32 to index
    %c0_473 = arith.constant 0 : index
    %c0_474 = arith.constant 0 : index
    %931 = vector.load %arg12[%930, %c0_473, %c0_474] : memref<8x8x16xf32, #tpu.memory_space<vmem>>, vector<1x8x16xf32>
    %932 = vector.shape_cast %931 : vector<1x8x16xf32> to vector<8x16xf32>
    %933 = vector.shape_cast %929 : vector<8x16xf32> to vector<1x8x16xf32>
    tpu.vector_store %arg12[%930, %c0_473, %c0_474], %933 {strides = array<i32>} : memref<8x8x16xf32, #tpu.memory_space<vmem>>, vector<1x8x16xf32>,
    %934 = vector.extract_strided_slice %921 {offsets = [0, 16], sizes = [8, 16], strides = [1, 1]} : vector<8x32xi1> to vector<8x16xi1>
    %935 = vector.extract_strided_slice %916 {offsets = [0, 16], sizes = [8, 16], strides = [1, 1]} : vector<8x32xf32> to vector<8x16xf32>
    %cst_475 = arith.constant 0.000000e+00 : f32
    %936 = vector.broadcast %cst_475 : f32 to vector<8x16xf32>
    %937 = arith.select %934, %935, %936 : vector<8x16xi1>, vector<8x16xf32>
    %938 = arith.index_cast %888 : i32 to index
    %c0_476 = arith.constant 0 : index
    %c0_477 = arith.constant 0 : index
    %939 = vector.load %arg13[%938, %c0_476, %c0_477] : memref<8x8x16xf32, #tpu.memory_space<vmem>>, vector<1x8x16xf32>
    %940 = vector.shape_cast %939 : vector<1x8x16xf32> to vector<8x16xf32>
    %941 = vector.shape_cast %937 : vector<8x16xf32> to vector<1x8x16xf32>
    tpu.vector_store %arg13[%938, %c0_476, %c0_477], %941 {strides = array<i32>} : memref<8x8x16xf32, #tpu.memory_space<vmem>>, vector<1x8x16xf32>,
    %c5_i32_478 = arith.constant 5 : i32
    %c7_i32_479 = arith.constant 7 : i32
    %942 = arith.subi %c7_i32_479, %c5_i32_478 : i32
    %c0_480 = arith.constant 0 : index
    %c0_481 = arith.constant 0 : index
    %943 = vector.load %arg14[%c0_480, %c0_481] : memref<8x32xf32, #tpu.memory_space<vmem>>, vector<8x32xf32>
    %c0_482 = arith.constant 0 : index
    %c0_483 = arith.constant 0 : index
    %944 = vector.load %arg15[%c0_482, %c0_483] : memref<8x32xf32, #tpu.memory_space<vmem>>, vector<8x32xf32>
    %945 = arith.index_cast %c5_i32_478 : i32 to index
    %c0_484 = arith.constant 0 : index
    %c0_485 = arith.constant 0 : index
    %946 = vector.load %arg9[%945, %c0_484, %c0_485] : memref<8x8x128xf32, #tpu.memory_space<vmem>>, vector<1x8x128xf32>
    %947 = vector.shape_cast %946 : vector<1x8x128xf32> to vector<8x128xf32>
    %948 = arith.index_cast %942 : i32 to index
    %c0_486 = arith.constant 0 : index
    %c0_487 = arith.constant 0 : index
    %949 = vector.load %arg10[%948, %c0_486, %c0_487] : memref<8x8x128xf32, #tpu.memory_space<vmem>>, vector<1x8x128xf32>
    %950 = vector.shape_cast %949 : vector<1x8x128xf32> to vector<8x128xf32>
    %951 = arith.addf %947, %950 : vector<8x128xf32>
    %952 = arith.truncf %943 : vector<8x32xf32> to vector<8x32xbf16>
    %cst_488 = arith.constant dense<0.000000e+00> : vector<8x128xf32>
    %953 = tpu.matmul %952, %561, %cst_488 {dimension_numbers = #tpu.dot_dimension_numbers<[1], [0], [0], [1], [0, 0, 1, 1], [], []>} : vector<8x32xbf16>, vector<32x128xbf16>, vector<8x128xf32> -> vector<8x128xf32>
    %954 = arith.addf %951, %953 : vector<8x128xf32>
    %955 = vector.extract_strided_slice %954 {offsets = [0, 0], sizes = [8, 96], strides = [1, 1]} : vector<8x128xf32> to vector<8x96xf32>
    %956 = arith.negf %955 : vector<8x96xf32>
    %957 = math.exp %956 : vector<8x96xf32>
    %cst_489 = arith.constant 1.000000e+00 : f32
    %958 = vector.broadcast %cst_489 : f32 to vector<8x96xf32>
    %959 = arith.addf %958, %957 : vector<8x96xf32>
    %960 = arith.divf %958, %959 : vector<8x96xf32>
    %961 = vector.extract_strided_slice %954 {offsets = [0, 96], sizes = [8, 32], strides = [1, 1]} : vector<8x128xf32> to vector<8x32xf32>
    %962 = math.tanh %961 : vector<8x32xf32>
    %963 = vector.extract_strided_slice %960 {offsets = [0, 0], sizes = [8, 32], strides = [1, 1]} : vector<8x96xf32> to vector<8x32xf32>
    %964 = vector.extract_strided_slice %960 {offsets = [0, 32], sizes = [8, 32], strides = [1, 1]} : vector<8x96xf32> to vector<8x32xf32>
    %965 = vector.extract_strided_slice %960 {offsets = [0, 64], sizes = [8, 32], strides = [1, 1]} : vector<8x96xf32> to vector<8x32xf32>
    %966 = arith.mulf %964, %944 : vector<8x32xf32>
    %967 = arith.mulf %963, %962 : vector<8x32xf32>
    %968 = arith.addf %966, %967 : vector<8x32xf32>
    %969 = math.tanh %968 : vector<8x32xf32>
    %970 = arith.mulf %965, %969 : vector<8x32xf32>
    %971 = vector.broadcast %942 : i32 to vector<8x32xi32>
    %972 = vector.broadcast %c5_i32_478 : i32 to vector<8x32xi32>
    %973 = arith.select %3, %971, %972 : vector<8x32xi1>, vector<8x32xi32>
    %974 = vector.broadcast %0 : vector<8x1xi32> to vector<8x32xi32>
    %975 = arith.cmpi slt, %973, %974 : vector<8x32xi32>
    %976 = arith.select %975, %970, %943 : vector<8x32xi1>, vector<8x32xf32>
    %c0_490 = arith.constant 0 : index
    %c0_491 = arith.constant 0 : index
    %977 = vector.load %arg14[%c0_490, %c0_491] : memref<8x32xf32, #tpu.memory_space<vmem>>, vector<8x32xf32>
    tpu.vector_store %arg14[%c0_490, %c0_491], %976 {strides = array<i32>} : memref<8x32xf32, #tpu.memory_space<vmem>>, vector<8x32xf32>,
    %978 = arith.select %975, %968, %944 : vector<8x32xi1>, vector<8x32xf32>
    %c0_492 = arith.constant 0 : index
    %c0_493 = arith.constant 0 : index
    %979 = vector.load %arg15[%c0_492, %c0_493] : memref<8x32xf32, #tpu.memory_space<vmem>>, vector<8x32xf32>
    tpu.vector_store %arg15[%c0_492, %c0_493], %978 {strides = array<i32>} : memref<8x32xf32, #tpu.memory_space<vmem>>, vector<8x32xf32>,
    %980 = vector.extract_strided_slice %975 {offsets = [0, 0], sizes = [8, 16], strides = [1, 1]} : vector<8x32xi1> to vector<8x16xi1>
    %981 = vector.extract_strided_slice %970 {offsets = [0, 0], sizes = [8, 16], strides = [1, 1]} : vector<8x32xf32> to vector<8x16xf32>
    %cst_494 = arith.constant 0.000000e+00 : f32
    %982 = vector.broadcast %cst_494 : f32 to vector<8x16xf32>
    %983 = arith.select %980, %981, %982 : vector<8x16xi1>, vector<8x16xf32>
    %984 = arith.index_cast %c5_i32_478 : i32 to index
    %c0_495 = arith.constant 0 : index
    %c0_496 = arith.constant 0 : index
    %985 = vector.load %arg12[%984, %c0_495, %c0_496] : memref<8x8x16xf32, #tpu.memory_space<vmem>>, vector<1x8x16xf32>
    %986 = vector.shape_cast %985 : vector<1x8x16xf32> to vector<8x16xf32>
    %987 = vector.shape_cast %983 : vector<8x16xf32> to vector<1x8x16xf32>
    tpu.vector_store %arg12[%984, %c0_495, %c0_496], %987 {strides = array<i32>} : memref<8x8x16xf32, #tpu.memory_space<vmem>>, vector<1x8x16xf32>,
    %988 = vector.extract_strided_slice %975 {offsets = [0, 16], sizes = [8, 16], strides = [1, 1]} : vector<8x32xi1> to vector<8x16xi1>
    %989 = vector.extract_strided_slice %970 {offsets = [0, 16], sizes = [8, 16], strides = [1, 1]} : vector<8x32xf32> to vector<8x16xf32>
    %cst_497 = arith.constant 0.000000e+00 : f32
    %990 = vector.broadcast %cst_497 : f32 to vector<8x16xf32>
    %991 = arith.select %988, %989, %990 : vector<8x16xi1>, vector<8x16xf32>
    %992 = arith.index_cast %942 : i32 to index
    %c0_498 = arith.constant 0 : index
    %c0_499 = arith.constant 0 : index
    %993 = vector.load %arg13[%992, %c0_498, %c0_499] : memref<8x8x16xf32, #tpu.memory_space<vmem>>, vector<1x8x16xf32>
    %994 = vector.shape_cast %993 : vector<1x8x16xf32> to vector<8x16xf32>
    %995 = vector.shape_cast %991 : vector<8x16xf32> to vector<1x8x16xf32>
    tpu.vector_store %arg13[%992, %c0_498, %c0_499], %995 {strides = array<i32>} : memref<8x8x16xf32, #tpu.memory_space<vmem>>, vector<1x8x16xf32>,
    %c6_i32_500 = arith.constant 6 : i32
    %c7_i32_501 = arith.constant 7 : i32
    %996 = arith.subi %c7_i32_501, %c6_i32_500 : i32
    %c0_502 = arith.constant 0 : index
    %c0_503 = arith.constant 0 : index
    %997 = vector.load %arg14[%c0_502, %c0_503] : memref<8x32xf32, #tpu.memory_space<vmem>>, vector<8x32xf32>
    %c0_504 = arith.constant 0 : index
    %c0_505 = arith.constant 0 : index
    %998 = vector.load %arg15[%c0_504, %c0_505] : memref<8x32xf32, #tpu.memory_space<vmem>>, vector<8x32xf32>
    %999 = arith.index_cast %c6_i32_500 : i32 to index
    %c0_506 = arith.constant 0 : index
    %c0_507 = arith.constant 0 : index
    %1000 = vector.load %arg9[%999, %c0_506, %c0_507] : memref<8x8x128xf32, #tpu.memory_space<vmem>>, vector<1x8x128xf32>
    %1001 = vector.shape_cast %1000 : vector<1x8x128xf32> to vector<8x128xf32>
    %1002 = arith.index_cast %996 : i32 to index
    %c0_508 = arith.constant 0 : index
    %c0_509 = arith.constant 0 : index
    %1003 = vector.load %arg10[%1002, %c0_508, %c0_509] : memref<8x8x128xf32, #tpu.memory_space<vmem>>, vector<1x8x128xf32>
    %1004 = vector.shape_cast %1003 : vector<1x8x128xf32> to vector<8x128xf32>
    %1005 = arith.addf %1001, %1004 : vector<8x128xf32>
    %1006 = arith.truncf %997 : vector<8x32xf32> to vector<8x32xbf16>
    %cst_510 = arith.constant dense<0.000000e+00> : vector<8x128xf32>
    %1007 = tpu.matmul %1006, %561, %cst_510 {dimension_numbers = #tpu.dot_dimension_numbers<[1], [0], [0], [1], [0, 0, 1, 1], [], []>} : vector<8x32xbf16>, vector<32x128xbf16>, vector<8x128xf32> -> vector<8x128xf32>
    %1008 = arith.addf %1005, %1007 : vector<8x128xf32>
    %1009 = vector.extract_strided_slice %1008 {offsets = [0, 0], sizes = [8, 96], strides = [1, 1]} : vector<8x128xf32> to vector<8x96xf32>
    %1010 = arith.negf %1009 : vector<8x96xf32>
    %1011 = math.exp %1010 : vector<8x96xf32>
    %cst_511 = arith.constant 1.000000e+00 : f32
    %1012 = vector.broadcast %cst_511 : f32 to vector<8x96xf32>
    %1013 = arith.addf %1012, %1011 : vector<8x96xf32>
    %1014 = arith.divf %1012, %1013 : vector<8x96xf32>
    %1015 = vector.extract_strided_slice %1008 {offsets = [0, 96], sizes = [8, 32], strides = [1, 1]} : vector<8x128xf32> to vector<8x32xf32>
    %1016 = math.tanh %1015 : vector<8x32xf32>
    %1017 = vector.extract_strided_slice %1014 {offsets = [0, 0], sizes = [8, 32], strides = [1, 1]} : vector<8x96xf32> to vector<8x32xf32>
    %1018 = vector.extract_strided_slice %1014 {offsets = [0, 32], sizes = [8, 32], strides = [1, 1]} : vector<8x96xf32> to vector<8x32xf32>
    %1019 = vector.extract_strided_slice %1014 {offsets = [0, 64], sizes = [8, 32], strides = [1, 1]} : vector<8x96xf32> to vector<8x32xf32>
    %1020 = arith.mulf %1018, %998 : vector<8x32xf32>
    %1021 = arith.mulf %1017, %1016 : vector<8x32xf32>
    %1022 = arith.addf %1020, %1021 : vector<8x32xf32>
    %1023 = math.tanh %1022 : vector<8x32xf32>
    %1024 = arith.mulf %1019, %1023 : vector<8x32xf32>
    %1025 = vector.broadcast %996 : i32 to vector<8x32xi32>
    %1026 = vector.broadcast %c6_i32_500 : i32 to vector<8x32xi32>
    %1027 = arith.select %3, %1025, %1026 : vector<8x32xi1>, vector<8x32xi32>
    %1028 = vector.broadcast %0 : vector<8x1xi32> to vector<8x32xi32>
    %1029 = arith.cmpi slt, %1027, %1028 : vector<8x32xi32>
    %1030 = arith.select %1029, %1024, %997 : vector<8x32xi1>, vector<8x32xf32>
    %c0_512 = arith.constant 0 : index
    %c0_513 = arith.constant 0 : index
    %1031 = vector.load %arg14[%c0_512, %c0_513] : memref<8x32xf32, #tpu.memory_space<vmem>>, vector<8x32xf32>
    tpu.vector_store %arg14[%c0_512, %c0_513], %1030 {strides = array<i32>} : memref<8x32xf32, #tpu.memory_space<vmem>>, vector<8x32xf32>,
    %1032 = arith.select %1029, %1022, %998 : vector<8x32xi1>, vector<8x32xf32>
    %c0_514 = arith.constant 0 : index
    %c0_515 = arith.constant 0 : index
    %1033 = vector.load %arg15[%c0_514, %c0_515] : memref<8x32xf32, #tpu.memory_space<vmem>>, vector<8x32xf32>
    tpu.vector_store %arg15[%c0_514, %c0_515], %1032 {strides = array<i32>} : memref<8x32xf32, #tpu.memory_space<vmem>>, vector<8x32xf32>,
    %1034 = vector.extract_strided_slice %1029 {offsets = [0, 0], sizes = [8, 16], strides = [1, 1]} : vector<8x32xi1> to vector<8x16xi1>
    %1035 = vector.extract_strided_slice %1024 {offsets = [0, 0], sizes = [8, 16], strides = [1, 1]} : vector<8x32xf32> to vector<8x16xf32>
    %cst_516 = arith.constant 0.000000e+00 : f32
    %1036 = vector.broadcast %cst_516 : f32 to vector<8x16xf32>
    %1037 = arith.select %1034, %1035, %1036 : vector<8x16xi1>, vector<8x16xf32>
    %1038 = arith.index_cast %c6_i32_500 : i32 to index
    %c0_517 = arith.constant 0 : index
    %c0_518 = arith.constant 0 : index
    %1039 = vector.load %arg12[%1038, %c0_517, %c0_518] : memref<8x8x16xf32, #tpu.memory_space<vmem>>, vector<1x8x16xf32>
    %1040 = vector.shape_cast %1039 : vector<1x8x16xf32> to vector<8x16xf32>
    %1041 = vector.shape_cast %1037 : vector<8x16xf32> to vector<1x8x16xf32>
    tpu.vector_store %arg12[%1038, %c0_517, %c0_518], %1041 {strides = array<i32>} : memref<8x8x16xf32, #tpu.memory_space<vmem>>, vector<1x8x16xf32>,
    %1042 = vector.extract_strided_slice %1029 {offsets = [0, 16], sizes = [8, 16], strides = [1, 1]} : vector<8x32xi1> to vector<8x16xi1>
    %1043 = vector.extract_strided_slice %1024 {offsets = [0, 16], sizes = [8, 16], strides = [1, 1]} : vector<8x32xf32> to vector<8x16xf32>
    %cst_519 = arith.constant 0.000000e+00 : f32
    %1044 = vector.broadcast %cst_519 : f32 to vector<8x16xf32>
    %1045 = arith.select %1042, %1043, %1044 : vector<8x16xi1>, vector<8x16xf32>
    %1046 = arith.index_cast %996 : i32 to index
    %c0_520 = arith.constant 0 : index
    %c0_521 = arith.constant 0 : index
    %1047 = vector.load %arg13[%1046, %c0_520, %c0_521] : memref<8x8x16xf32, #tpu.memory_space<vmem>>, vector<1x8x16xf32>
    %1048 = vector.shape_cast %1047 : vector<1x8x16xf32> to vector<8x16xf32>
    %1049 = vector.shape_cast %1045 : vector<8x16xf32> to vector<1x8x16xf32>
    tpu.vector_store %arg13[%1046, %c0_520, %c0_521], %1049 {strides = array<i32>} : memref<8x8x16xf32, #tpu.memory_space<vmem>>, vector<1x8x16xf32>,
    %c7_i32_522 = arith.constant 7 : i32
    %c7_i32_523 = arith.constant 7 : i32
    %1050 = arith.subi %c7_i32_523, %c7_i32_522 : i32
    %c0_524 = arith.constant 0 : index
    %c0_525 = arith.constant 0 : index
    %1051 = vector.load %arg14[%c0_524, %c0_525] : memref<8x32xf32, #tpu.memory_space<vmem>>, vector<8x32xf32>
    %c0_526 = arith.constant 0 : index
    %c0_527 = arith.constant 0 : index
    %1052 = vector.load %arg15[%c0_526, %c0_527] : memref<8x32xf32, #tpu.memory_space<vmem>>, vector<8x32xf32>
    %1053 = arith.index_cast %c7_i32_522 : i32 to index
    %c0_528 = arith.constant 0 : index
    %c0_529 = arith.constant 0 : index
    %1054 = vector.load %arg9[%1053, %c0_528, %c0_529] : memref<8x8x128xf32, #tpu.memory_space<vmem>>, vector<1x8x128xf32>
    %1055 = vector.shape_cast %1054 : vector<1x8x128xf32> to vector<8x128xf32>
    %1056 = arith.index_cast %1050 : i32 to index
    %c0_530 = arith.constant 0 : index
    %c0_531 = arith.constant 0 : index
    %1057 = vector.load %arg10[%1056, %c0_530, %c0_531] : memref<8x8x128xf32, #tpu.memory_space<vmem>>, vector<1x8x128xf32>
    %1058 = vector.shape_cast %1057 : vector<1x8x128xf32> to vector<8x128xf32>
    %1059 = arith.addf %1055, %1058 : vector<8x128xf32>
    %1060 = arith.truncf %1051 : vector<8x32xf32> to vector<8x32xbf16>
    %cst_532 = arith.constant dense<0.000000e+00> : vector<8x128xf32>
    %1061 = tpu.matmul %1060, %561, %cst_532 {dimension_numbers = #tpu.dot_dimension_numbers<[1], [0], [0], [1], [0, 0, 1, 1], [], []>} : vector<8x32xbf16>, vector<32x128xbf16>, vector<8x128xf32> -> vector<8x128xf32>
    %1062 = arith.addf %1059, %1061 : vector<8x128xf32>
    %1063 = vector.extract_strided_slice %1062 {offsets = [0, 0], sizes = [8, 96], strides = [1, 1]} : vector<8x128xf32> to vector<8x96xf32>
    %1064 = arith.negf %1063 : vector<8x96xf32>
    %1065 = math.exp %1064 : vector<8x96xf32>
    %cst_533 = arith.constant 1.000000e+00 : f32
    %1066 = vector.broadcast %cst_533 : f32 to vector<8x96xf32>
    %1067 = arith.addf %1066, %1065 : vector<8x96xf32>
    %1068 = arith.divf %1066, %1067 : vector<8x96xf32>
    %1069 = vector.extract_strided_slice %1062 {offsets = [0, 96], sizes = [8, 32], strides = [1, 1]} : vector<8x128xf32> to vector<8x32xf32>
    %1070 = math.tanh %1069 : vector<8x32xf32>
    %1071 = vector.extract_strided_slice %1068 {offsets = [0, 0], sizes = [8, 32], strides = [1, 1]} : vector<8x96xf32> to vector<8x32xf32>
    %1072 = vector.extract_strided_slice %1068 {offsets = [0, 32], sizes = [8, 32], strides = [1, 1]} : vector<8x96xf32> to vector<8x32xf32>
    %1073 = vector.extract_strided_slice %1068 {offsets = [0, 64], sizes = [8, 32], strides = [1, 1]} : vector<8x96xf32> to vector<8x32xf32>
    %1074 = arith.mulf %1072, %1052 : vector<8x32xf32>
    %1075 = arith.mulf %1071, %1070 : vector<8x32xf32>
    %1076 = arith.addf %1074, %1075 : vector<8x32xf32>
    %1077 = math.tanh %1076 : vector<8x32xf32>
    %1078 = arith.mulf %1073, %1077 : vector<8x32xf32>
    %1079 = vector.broadcast %1050 : i32 to vector<8x32xi32>
    %1080 = vector.broadcast %c7_i32_522 : i32 to vector<8x32xi32>
    %1081 = arith.select %3, %1079, %1080 : vector<8x32xi1>, vector<8x32xi32>
    %1082 = vector.broadcast %0 : vector<8x1xi32> to vector<8x32xi32>
    %1083 = arith.cmpi slt, %1081, %1082 : vector<8x32xi32>
    %1084 = arith.select %1083, %1078, %1051 : vector<8x32xi1>, vector<8x32xf32>
    %c0_534 = arith.constant 0 : index
    %c0_535 = arith.constant 0 : index
    %1085 = vector.load %arg14[%c0_534, %c0_535] : memref<8x32xf32, #tpu.memory_space<vmem>>, vector<8x32xf32>
    tpu.vector_store %arg14[%c0_534, %c0_535], %1084 {strides = array<i32>} : memref<8x32xf32, #tpu.memory_space<vmem>>, vector<8x32xf32>,
    %1086 = arith.select %1083, %1076, %1052 : vector<8x32xi1>, vector<8x32xf32>
    %c0_536 = arith.constant 0 : index
    %c0_537 = arith.constant 0 : index
    %1087 = vector.load %arg15[%c0_536, %c0_537] : memref<8x32xf32, #tpu.memory_space<vmem>>, vector<8x32xf32>
    tpu.vector_store %arg15[%c0_536, %c0_537], %1086 {strides = array<i32>} : memref<8x32xf32, #tpu.memory_space<vmem>>, vector<8x32xf32>,
    %1088 = vector.extract_strided_slice %1083 {offsets = [0, 0], sizes = [8, 16], strides = [1, 1]} : vector<8x32xi1> to vector<8x16xi1>
    %1089 = vector.extract_strided_slice %1078 {offsets = [0, 0], sizes = [8, 16], strides = [1, 1]} : vector<8x32xf32> to vector<8x16xf32>
    %cst_538 = arith.constant 0.000000e+00 : f32
    %1090 = vector.broadcast %cst_538 : f32 to vector<8x16xf32>
    %1091 = arith.select %1088, %1089, %1090 : vector<8x16xi1>, vector<8x16xf32>
    %1092 = arith.index_cast %c7_i32_522 : i32 to index
    %c0_539 = arith.constant 0 : index
    %c0_540 = arith.constant 0 : index
    %1093 = vector.load %arg12[%1092, %c0_539, %c0_540] : memref<8x8x16xf32, #tpu.memory_space<vmem>>, vector<1x8x16xf32>
    %1094 = vector.shape_cast %1093 : vector<1x8x16xf32> to vector<8x16xf32>
    %1095 = vector.shape_cast %1091 : vector<8x16xf32> to vector<1x8x16xf32>
    tpu.vector_store %arg12[%1092, %c0_539, %c0_540], %1095 {strides = array<i32>} : memref<8x8x16xf32, #tpu.memory_space<vmem>>, vector<1x8x16xf32>,
    %1096 = vector.extract_strided_slice %1083 {offsets = [0, 16], sizes = [8, 16], strides = [1, 1]} : vector<8x32xi1> to vector<8x16xi1>
    %1097 = vector.extract_strided_slice %1078 {offsets = [0, 16], sizes = [8, 16], strides = [1, 1]} : vector<8x32xf32> to vector<8x16xf32>
    %cst_541 = arith.constant 0.000000e+00 : f32
    %1098 = vector.broadcast %cst_541 : f32 to vector<8x16xf32>
    %1099 = arith.select %1096, %1097, %1098 : vector<8x16xi1>, vector<8x16xf32>
    %1100 = arith.index_cast %1050 : i32 to index
    %c0_542 = arith.constant 0 : index
    %c0_543 = arith.constant 0 : index
    %1101 = vector.load %arg13[%1100, %c0_542, %c0_543] : memref<8x8x16xf32, #tpu.memory_space<vmem>>, vector<1x8x16xf32>
    %1102 = vector.shape_cast %1101 : vector<1x8x16xf32> to vector<8x16xf32>
    %1103 = vector.shape_cast %1099 : vector<8x16xf32> to vector<1x8x16xf32>
    tpu.vector_store %arg13[%1100, %c0_542, %c0_543], %1103 {strides = array<i32>} : memref<8x8x16xf32, #tpu.memory_space<vmem>>, vector<1x8x16xf32>,
    %c8_i32_544 = arith.constant 8 : i32
    %c0_545 = arith.constant 0 : index
    %c0_546 = arith.constant 0 : index
    %c0_547 = arith.constant 0 : index
    %1104 = vector.load %arg12[%c0_545, %c0_546, %c0_547] : memref<8x8x16xf32, #tpu.memory_space<vmem>>, vector<8x8x16xf32>
    %c0_548 = arith.constant 0 : index
    %c0_549 = arith.constant 0 : index
    %c0_550 = arith.constant 0 : index
    %1105 = vector.load %arg13[%c0_548, %c0_549, %c0_550] : memref<8x8x16xf32, #tpu.memory_space<vmem>>, vector<8x8x16xf32>
    %1106 = tpu.concatenate %1104, %1105 in 2 : vector<8x8x16xf32>, vector<8x8x16xf32> -> vector<8x8x32xf32>
    %c0_551 = arith.constant 0 : index
    %c0_552 = arith.constant 0 : index
    %c0_553 = arith.constant 0 : index
    %1107 = vector.load %arg8[%c0_551, %c0_552, %c0_553] : memref<8x8x32xf32, #tpu.memory_space<vmem>>, vector<8x8x32xf32>
    tpu.vector_store %arg8[%c0_551, %c0_552, %c0_553], %1106 {strides = array<i32>} : memref<8x8x32xf32, #tpu.memory_space<vmem>>, vector<8x8x32xf32>,
    return
  }
  func.func @transform_0(%arg0: i32) -> (i32, i32, i32) {
    %c0_i32 = arith.constant 0 : i32
    %c0_i32_0 = arith.constant 0 : i32
    %c0_i32_1 = arith.constant 0 : i32
    %c0_i32_2 = arith.constant 0 : i32
    return %c0_i32, %c0_i32_0, %c0_i32_1 : i32, i32, i32
  }
  func.func @transform_1(%arg0: i32) -> (i32, i32) {
    %c0_i32 = arith.constant 0 : i32
    %c0_i32_0 = arith.constant 0 : i32
    %c0_i32_1 = arith.constant 0 : i32
    return %c0_i32, %c0_i32_0 : i32, i32
  }
  func.func @transform_2(%arg0: i32) -> (i32, i32, i32) {
    %c0_i32 = arith.constant 0 : i32
    %c0_i32_0 = arith.constant 0 : i32
    %c0_i32_1 = arith.constant 0 : i32
    %c0_i32_2 = arith.constant 0 : i32
    return %c0_i32, %c0_i32_0, %c0_i32_1 : i32, i32, i32
  }
  func.func @transform_3(%arg0: i32) -> (i32, i32, i32) {
    %c0_i32 = arith.constant 0 : i32
    %c0_i32_0 = arith.constant 0 : i32
    %c0_i32_1 = arith.constant 0 : i32
    %c0_i32_2 = arith.constant 0 : i32
    return %c0_i32, %c0_i32_0, %c0_i32_1 : i32, i32, i32
  }
  func.func @transform_4(%arg0: i32) -> (i32, i32, i32) {
    %c0_i32 = arith.constant 0 : i32
    %c0_i32_0 = arith.constant 0 : i32
    %c0_i32_1 = arith.constant 0 : i32
    %c0_i32_2 = arith.constant 0 : i32
    return %c0_i32, %c0_i32_0, %c0_i32_1 : i32, i32, i32
  }
  func.func @transform_5(%arg0: i32) -> (i32, i32, i32) {
    %c0_i32 = arith.constant 0 : i32
    %c0_i32_0 = arith.constant 0 : i32
    %c0_i32_1 = arith.constant 0 : i32
    %c0_i32_2 = arith.constant 0 : i32
    return %c0_i32, %c0_i32_0, %c0_i32_1 : i32, i32, i32
  }
  func.func @transform_6(%arg0: i32) -> (i32, i32, i32) {
    %c0_i32 = arith.constant 0 : i32
    %c0_i32_0 = arith.constant 0 : i32
    %c0_i32_1 = arith.constant 0 : i32
    %c0_i32_2 = arith.constant 0 : i32
    return %c0_i32, %c0_i32_0, %c0_i32_1 : i32, i32, i32
  }
  func.func @transform_7(%arg0: i32) -> (i32, i32, i32) {
    %c0_i32 = arith.constant 0 : i32
    %c0_i32_0 = arith.constant 0 : i32
    %c0_i32_1 = arith.constant 0 : i32
    %c0_i32_2 = arith.constant 0 : i32
    return %c0_i32, %c0_i32_0, %c0_i32_1 : i32, i32, i32
  }
}

</mosaic_0001>

<llo_original>
// kernel: custom-call.14
$region0: #{custom-call.14}
  %s0 = inlined_call_operand.vmem [shape: s32[31,2,11], index: 0, kind: output, shape index: {}]

// kernel: custom-call.15
$region0: #{custom-call.15}
  %s0 = inlined_call_operand.vmem [shape: s32[31,2], index: 0, kind: output, shape index: {}]

// kernel: _device_forward.1
$region0: #{_device_forward.1}
  #allocation0 [shape = 'u32[]', space=smem, size = 0x4, offset = 0x4, fixed_abs, tag = 'smem constant byte address 0x4 - core index']
  #allocation1 [shape = 'u32[144,128]{1,0:T(1,128)}', space=vmem, size = 0x12000, scoped, tag = 'internal scratch']
  #allocation2 [shape = 'f32[8,8,128]{2,1,0:T(8,128)}', space=vmem, size = 0x8000, scoped, tag = 'scratch operand']
  #allocation3 [shape = 'f32[8,8,128]{2,1,0:T(8,128)}', space=vmem, size = 0x8000, scoped, tag = 'scratch operand']
  #allocation4 [shape = 'f32[8,8,32]{2,1,0:T(8,128)}', space=vmem, size = 0x8000, scoped, tag = 'scratch operand']
  #allocation5 [shape = 'f32[8,8,16]{2,1,0:T(8,128)}', space=vmem, size = 0x8000, scoped, tag = 'scratch operand']
  #allocation6 [shape = 'f32[8,8,16]{2,1,0:T(8,128)}', space=vmem, size = 0x8000, scoped, tag = 'scratch operand']
  #allocation7 [shape = 'f32[8,32]{1,0:T(8,128)}', space=vmem, size = 0x1000, scoped, tag = 'scratch operand']
  #allocation8 [shape = 'f32[8,32]{1,0:T(8,128)}', space=vmem, size = 0x1000, scoped, tag = 'scratch operand']
  %s0 = inlined_call_operand.vmem [shape: f32[8,8,32], index: 0, kind: input, shape index: {}]
  %s1 = inlined_call_operand.vmem [shape: s32[8,1], index: 1, kind: input, shape index: {}]
  %s2 = inlined_call_operand.vmem [shape: f32[2,32,256], index: 2, kind: input, shape index: {}]
  %s3 = inlined_call_operand.vmem [shape: f32[2,1,128], index: 3, kind: input, shape index: {}]
  %s4 = inlined_call_operand.vmem [shape: bf16[2,32,128], index: 4, kind: input, shape index: {}]
  %s5 = inlined_call_operand.vmem [shape: f32[2,8,32], index: 5, kind: input, shape index: {}]
  %s6 = inlined_call_operand.vmem [shape: f32[2,8,32], index: 6, kind: input, shape index: {}]
  %s7 = inlined_call_operand.vmem [shape: f32[8,8,32], index: 7, kind: output, shape index: {}]
  %s8 = sld [smem:[#allocation0]]
  $region38: #{_device_forward.1} parent=0
    _
  %s10 = ssub.s32 1, %s8
  %s11 = scalar_select 0, %s10, %s8
  // Predicated region
  $region2: #{_device_forward.1} parent=0 // pred_check
    _
  $region3: #{_device_forward.1} parent=0 // pred_check_branch
    %13 = sbr.rel (0) target = $region5
  $region4: #{_device_forward.1} parent=0 // pred_region
    _
  $region5: #{_device_forward.1} parent=0 // pred_fallthru
    _
  // Predicated region
  $region6: #{_device_forward.1} parent=0 // pred_check
    _
  $region7: #{_device_forward.1} parent=0 // pred_check_branch
    %15 = sbr.rel (0) target = $region9
  $region8: #{_device_forward.1} parent=0 // pred_region
    _
  $region9: #{_device_forward.1} parent=0 // pred_fallthru
    _
  // Predicated region
  $region10: #{_device_forward.1} parent=0 // pred_check
    _
  $region11: #{_device_forward.1} parent=0 // pred_check_branch
    %17 = sbr.rel (0) target = $region13
  $region12: #{_device_forward.1} parent=0 // pred_region
    _
  $region13: #{_device_forward.1} parent=0 // pred_fallthru
    _
  // Predicated region
  $region14: #{_device_forward.1} parent=0 // pred_check
    _
  $region15: #{_device_forward.1} parent=0 // pred_check_branch
    %19 = sbr.rel (0) target = $region17
  $region16: #{_device_forward.1} parent=0 // pred_region
    _
  $region17: #{_device_forward.1} parent=0 // pred_fallthru
    _
  // Predicated region
  $region18: #{_device_forward.1} parent=0 // pred_check
    _
  $region19: #{_device_forward.1} parent=0 // pred_check_branch
    %21 = sbr.rel (0) target = $region21
  $region20: #{_device_forward.1} parent=0 // pred_region
    _
  $region21: #{_device_forward.1} parent=0 // pred_fallthru
    _
  // Predicated region
  $region22: #{_device_forward.1} parent=0 // pred_check
    _
  $region23: #{_device_forward.1} parent=0 // pred_check_branch
    %23 = sbr.rel (0) target = $region25
  $region24: #{_device_forward.1} parent=0 // pred_region
    _
  $region25: #{_device_forward.1} parent=0 // pred_fallthru
    _
  // Predicated region
  $region26: #{_device_forward.1} parent=0 // pred_check
    _
  $region27: #{_device_forward.1} parent=0 // pred_check_branch
    %25 = sbr.rel (0) target = $region29
  $region28: #{_device_forward.1} parent=0 // pred_region
    _
  $region29: #{_device_forward.1} parent=0 // pred_fallthru
    _
  %v27 = vld [vmem:[%s1] sm:$0xff]
  %v28 = vlaneseq
  %v29 = vand.u32 %v28, 127
  %vm30 = vcmp.ge.s32.totalorder %v29, 16
  %v31 = vld [vmem:[%s2] sm:$0xff]
  %v32 = vld [vmem:[%s2 + $0x8] sm:$0xff]
  %v33 = vld [vmem:[%s2 + $0x10] sm:$0xff]
  %v34 = vld [vmem:[%s2 + $0x18] sm:$0xff]
  %v35 = vld [vmem:[%s2 + $0x20] sm:$0xff]
  %v36 = vld [vmem:[%s2 + $0x28] sm:$0xff]
  %v37 = vld [vmem:[%s2 + $0x30] sm:$0xff]
  %v38 = vld [vmem:[%s2 + $0x38] sm:$0xff]
  %v39 = vld [vmem:[%s3] sm:$0x1]
  %v40 = vld [vmem:[%s4] sm:$0xf]
  %v41 = vld [vmem:[%s4 + $0x4] sm:$0xf]
  %v42 = vld [vmem:[%s4 + $0x8] sm:$0xf]
  %v43 = vld [vmem:[%s4 + $0xc] sm:$0xf]
  %v44 = vld [vmem:[%s0] sm:$0xff]
  %vm45 = vcmask 261120
  %v47 = vsel %vm45, %v44, 0
  %49 = vmatprep.subr.mxu0 %v32
  %50 = vmatpush1.msra.mxu0 %v31
  %51 = vmatprep.subr.mxu0 %v34
  %52 = vmatpush1.msra.mxu0 %v33
  %53 = vmatprep.subr.mxu0 %v36
  %54 = vmatpush1.msra.mxu0 %v35
  %55 = vmatprep.subr.mxu0 %v38
  %56 = vmatpush1.msra.mxu0 %v37
  %57 = vmatprep.subr.mxu0 0.0
  %58 = vmatpush1.msra.mxu0 0.0
  %59 = vmatprep.subr.mxu0 0.0
  %60 = vmatpush1.msra.mxu0 0.0
  %61 = vmatprep.subr.mxu0 0.0
  %62 = vmatpush1.msra.mxu0 0.0
  %63 = vmatprep.subr.mxu0 0.0
  %64 = vmatpush1.msra.mxu0 0.0
  %65 = vmatprep.subr.mxu0 0.0
  %66 = vmatpush1.msra.mxu0 0.0
  %67 = vmatprep.subr.mxu0 0.0
  %68 = vmatpush1.msra.mxu0 0.0
  %69 = vmatprep.subr.mxu0 0.0
  %70 = vmatpush1.msra.mxu0 0.0
  %71 = vmatprep.subr.mxu0 0.0
  %72 = vmatpush1.msra.mxu0 0.0
  %73 = vmatprep.subr.mxu0 0.0
  %74 = vmatpush1.msra.mxu0 0.0
  %75 = vmatprep.subr.mxu0 0.0
  %76 = vmatpush1.msra.mxu0 0.0
  %77 = vmatprep.subr.mxu0 0.0
  %78 = vmatpush1.msra.mxu0 0.0
  %79 = vmatprep.subr.mxu0 0.0
  %80 = vmatpush1.msra.mxu0 0.0
  %81 = vmatprep.subr.mxu0 0.0
  %82 = vmatpush1.msra.mxu0 0.0
  %83 = vmatprep.subr.mxu0 0.0
  %84 = vmatpush1.msra.mxu0 0.0
  %85 = vmatprep.subr.mxu0 0.0
  %86 = vmatpush1.msra.mxu0 0.0
  %87 = vmatprep.subr.mxu0 0.0
  %88 = vmatpush1.msra.mxu0 0.0
  %89 = vmatprep.subr.mxu0 0.0
  %90 = vmatpush1.msra.mxu0 0.0
  %91 = vmatprep.subr.mxu0 0.0
  %92 = vmatpush1.msra.mxu0 0.0
  %93 = vmatprep.subr.mxu0 0.0
  %94 = vmatpush1.msra.mxu0 0.0
  %95 = vmatprep.subr.mxu0 0.0
  %96 = vmatpush1.msra.mxu0 0.0
  %97 = vmatprep.subr.mxu0 0.0
  %98 = vmatpush1.msra.mxu0 0.0
  %99 = vmatprep.subr.mxu0 0.0
  %100 = vmatpush1.msra.mxu0 0.0
  %101 = vmatprep.subr.mxu0 0.0
  %102 = vmatpush1.msra.mxu0 0.0
  %103 = vmatprep.subr.mxu0 0.0
  %104 = vmatpush1.msra.mxu0 0.0
  %105 = vmatprep.subr.mxu0 0.0
  %106 = vmatpush1.msra.mxu0 0.0
  %107 = vmatprep.subr.mxu0 0.0
  %108 = vmatpush1.msra.mxu0 0.0
  %109 = vmatprep.subr.mxu0 0.0
  %110 = vmatpush1.msra.mxu0 0.0
  %111 = vmatprep.subr.mxu0 0.0
  %112 = vmatpush1.msra.mxu0 0.0
  %113 = vmatprep.mubr.f32.mxu0 0.0
  %114 = vmatmul.mubr.f32.gmra.mrb[0].mxu0 %v47
  %v115 = vpop.f32.mrb[0].mxu0
  %v116 = vadd.f32 0.0, %v115
  %v117 = vpop.f32.mrb[0].mxu0
  %v118 = vadd.f32 0.0, %v117
  %119 = vdwg.mxu0
  %v121 = vlaneseq
  %v122 = vshrl.u32 %v121, 7
  %v123 = vsub.s32 0, %v122
  %v124 = vrot.slane %v39, %v123
  %v126 = vadd.f32 %v116, %v124
  %127 = vst [vmem:[#allocation2] sm:$0xff] %v126
  %128 = vst [vmem:[#allocation3] sm:$0xff] %v118
  %s129 = scalar_lea.vmem %s0, 8
  %v130 = vld [vmem:[%s129] sm:$0xff]
  %v132 = vsel %vm45, %v130, 0
  %134 = vmatprep.subr.mxu0 %v32
  %135 = vmatpush1.msra.mxu0 %v31
  %136 = vmatprep.subr.mxu0 %v34
  %137 = vmatpush1.msra.mxu0 %v33
  %138 = vmatprep.subr.mxu0 %v36
  %139 = vmatpush1.msra.mxu0 %v35
  %140 = vmatprep.subr.mxu0 %v38
  %141 = vmatpush1.msra.mxu0 %v37
  %142 = vmatprep.subr.mxu0 0.0
  %143 = vmatpush1.msra.mxu0 0.0
  %144 = vmatprep.subr.mxu0 0.0
  %145 = vmatpush1.msra.mxu0 0.0
  %146 = vmatprep.subr.mxu0 0.0
  %147 = vmatpush1.msra.mxu0 0.0
  %148 = vmatprep.subr.mxu0 0.0
  %149 = vmatpush1.msra.mxu0 0.0
  %150 = vmatprep.subr.mxu0 0.0
  %151 = vmatpush1.msra.mxu0 0.0
  %152 = vmatprep.subr.mxu0 0.0
  %153 = vmatpush1.msra.mxu0 0.0
  %154 = vmatprep.subr.mxu0 0.0
  %155 = vmatpush1.msra.mxu0 0.0
  %156 = vmatprep.subr.mxu0 0.0
  %157 = vmatpush1.msra.mxu0 0.0
  %158 = vmatprep.subr.mxu0 0.0
  %159 = vmatpush1.msra.mxu0 0.0
  %160 = vmatprep.subr.mxu0 0.0
  %161 = vmatpush1.msra.mxu0 0.0
  %162 = vmatprep.subr.mxu0 0.0
  %163 = vmatpush1.msra.mxu0 0.0
  %164 = vmatprep.subr.mxu0 0.0
  %165 = vmatpush1.msra.mxu0 0.0
  %166 = vmatprep.subr.mxu0 0.0
  %167 = vmatpush1.msra.mxu0 0.0
  %168 = vmatprep.subr.mxu0 0.0
  %169 = vmatpush1.msra.mxu0 0.0
  %170 = vmatprep.subr.mxu0 0.0
  %171 = vmatpush1.msra.mxu0 0.0
  %172 = vmatprep.subr.mxu0 0.0
  %173 = vmatpush1.msra.mxu0 0.0
  %174 = vmatprep.subr.mxu0 0.0
  %175 = vmatpush1.msra.mxu0 0.0
  %176 = vmatprep.subr.mxu0 0.0
  %177 = vmatpush1.msra.mxu0 0.0
  %178 = vmatprep.subr.mxu0 0.0
  %179 = vmatpush1.msra.mxu0 0.0
  %180 = vmatprep.subr.mxu0 0.0
  %181 = vmatpush1.msra.mxu0 0.0
  %182 = vmatprep.subr.mxu0 0.0
  %183 = vmatpush1.msra.mxu0 0.0
  %184 = vmatprep.subr.mxu0 0.0
  %185 = vmatpush1.msra.mxu0 0.0
  %186 = vmatprep.subr.mxu0 0.0
  %187 = vmatpush1.msra.mxu0 0.0
  %188 = vmatprep.subr.mxu0 0.0
  %189 = vmatpush1.msra.mxu0 0.0
  %190 = vmatprep.subr.mxu0 0.0
  %191 = vmatpush1.msra.mxu0 0.0
  %192 = vmatprep.subr.mxu0 0.0
  %193 = vmatpush1.msra.mxu0 0.0
  %194 = vmatprep.subr.mxu0 0.0
  %195 = vmatpush1.msra.mxu0 0.0
  %196 = vmatprep.subr.mxu0 0.0
  %197 = vmatpush1.msra.mxu0 0.0
  %198 = vmatprep.mubr.f32.mxu0 0.0
  %199 = vmatmul.mubr.f32.gmra.mrb[0].mxu0 %v132
  %v200 = vpop.f32.mrb[0].mxu0
  %v201 = vadd.f32 0.0, %v200
  %v202 = vpop.f32.mrb[0].mxu0
  %v203 = vadd.f32 0.0, %v202
  %204 = vdwg.mxu0
  %v205 = vadd.f32 %v201, %v124
  %s206 = scalar_lea.vmem [#allocation2], 8
  %207 = vst [vmem:[%s206] sm:$0xff] %v205
  %s208 = scalar_lea.vmem [#allocation3], 8
  %209 = vst [vmem:[%s208] sm:$0xff] %v203
  %s210 = scalar_lea.vmem %s0, 16
  %v211 = vld [vmem:[%s210] sm:$0xff]
  %v213 = vsel %vm45, %v211, 0
  %215 = vmatprep.subr.mxu0 %v32
  %216 = vmatpush1.msra.mxu0 %v31
  %217 = vmatprep.subr.mxu0 %v34
  %218 = vmatpush1.msra.mxu0 %v33
  %219 = vmatprep.subr.mxu0 %v36
  %220 = vmatpush1.msra.mxu0 %v35
  %221 = vmatprep.subr.mxu0 %v38
  %222 = vmatpush1.msra.mxu0 %v37
  %223 = vmatprep.subr.mxu0 0.0
  %224 = vmatpush1.msra.mxu0 0.0
  %225 = vmatprep.subr.mxu0 0.0
  %226 = vmatpush1.msra.mxu0 0.0
  %227 = vmatprep.subr.mxu0 0.0
  %228 = vmatpush1.msra.mxu0 0.0
  %229 = vmatprep.subr.mxu0 0.0
  %230 = vmatpush1.msra.mxu0 0.0
  %231 = vmatprep.subr.mxu0 0.0
  %232 = vmatpush1.msra.mxu0 0.0
  %233 = vmatprep.subr.mxu0 0.0
  %234 = vmatpush1.msra.mxu0 0.0
  %235 = vmatprep.subr.mxu0 0.0
  %236 = vmatpush1.msra.mxu0 0.0
  %237 = vmatprep.subr.mxu0 0.0
  %238 = vmatpush1.msra.mxu0 0.0
  %239 = vmatprep.subr.mxu0 0.0
  %240 = vmatpush1.msra.mxu0 0.0
  %241 = vmatprep.subr.mxu0 0.0
  %242 = vmatpush1.msra.mxu0 0.0
  %243 = vmatprep.subr.mxu0 0.0
  %244 = vmatpush1.msra.mxu0 0.0
  %245 = vmatprep.subr.mxu0 0.0
  %246 = vmatpush1.msra.mxu0 0.0
  %247 = vmatprep.subr.mxu0 0.0
  %248 = vmatpush1.msra.mxu0 0.0
  %249 = vmatprep.subr.mxu0 0.0
  %250 = vmatpush1.msra.mxu0 0.0
  %251 = vmatprep.subr.mxu0 0.0
  %252 = vmatpush1.msra.mxu0 0.0
  %253 = vmatprep.subr.mxu0 0.0
  %254 = vmatpush1.msra.mxu0 0.0
  %255 = vmatprep.subr.mxu0 0.0
  %256 = vmatpush1.msra.mxu0 0.0
  %257 = vmatprep.subr.mxu0 0.0
  %258 = vmatpush1.msra.mxu0 0.0
  %259 = vmatprep.subr.mxu0 0.0
  %260 = vmatpush1.msra.mxu0 0.0
  %261 = vmatprep.subr.mxu0 0.0
  %262 = vmatpush1.msra.mxu0 0.0
  %263 = vmatprep.subr.mxu0 0.0
  %264 = vmatpush1.msra.mxu0 0.0
  %265 = vmatprep.subr.mxu0 0.0
  %266 = vmatpush1.msra.mxu0 0.0
  %267 = vmatprep.subr.mxu0 0.0
  %268 = vmatpush1.msra.mxu0 0.0
  %269 = vmatprep.subr.mxu0 0.0
  %270 = vmatpush1.msra.mxu0 0.0
  %271 = vmatprep.subr.mxu0 0.0
  %272 = vmatpush1.msra.mxu0 0.0
  %273 = vmatprep.subr.mxu0 0.0
  %274 = vmatpush1.msra.mxu0 0.0
  %275 = vmatprep.subr.mxu0 0.0
  %276 = vmatpush1.msra.mxu0 0.0
  %277 = vmatprep.subr.mxu0 0.0
  %278 = vmatpush1.msra.mxu0 0.0
  %279 = vmatprep.mubr.f32.mxu0 0.0
  %280 = vmatmul.mubr.f32.gmra.mrb[0].mxu0 %v213
  %v281 = vpop.f32.mrb[0].mxu0
  %v282 = vadd.f32 0.0, %v281
  %v283 = vpop.f32.mrb[0].mxu0
  %v284 = vadd.f32 0.0, %v283
  %285 = vdwg.mxu0
  %v286 = vadd.f32 %v282, %v124
  %s287 = scalar_lea.vmem [#allocation2], 16
  %288 = vst [vmem:[%s287] sm:$0xff] %v286
  %s289 = scalar_lea.vmem [#allocation3], 16
  %290 = vst [vmem:[%s289] sm:$0xff] %v284
  %s291 = scalar_lea.vmem %s0, 24
  %v292 = vld [vmem:[%s291] sm:$0xff]
  %v294 = vsel %vm45, %v292, 0
  %296 = vmatprep.subr.mxu0 %v32
  %297 = vmatpush1.msra.mxu0 %v31
  %298 = vmatprep.subr.mxu0 %v34
  %299 = vmatpush1.msra.mxu0 %v33
  %300 = vmatprep.subr.mxu0 %v36
  %301 = vmatpush1.msra.mxu0 %v35
  %302 = vmatprep.subr.mxu0 %v38
  %303 = vmatpush1.msra.mxu0 %v37
  %304 = vmatprep.subr.mxu0 0.0
  %305 = vmatpush1.msra.mxu0 0.0
  %306 = vmatprep.subr.mxu0 0.0
  %307 = vmatpush1.msra.mxu0 0.0
  %308 = vmatprep.subr.mxu0 0.0
  %309 = vmatpush1.msra.mxu0 0.0
  %310 = vmatprep.subr.mxu0 0.0
  %311 = vmatpush1.msra.mxu0 0.0
  %312 = vmatprep.subr.mxu0 0.0
  %313 = vmatpush1.msra.mxu0 0.0
  %314 = vmatprep.subr.mxu0 0.0
  %315 = vmatpush1.msra.mxu0 0.0
  %316 = vmatprep.subr.mxu0 0.0
  %317 = vmatpush1.msra.mxu0 0.0
  %318 = vmatprep.subr.mxu0 0.0
  %319 = vmatpush1.msra.mxu0 0.0
  %320 = vmatprep.subr.mxu0 0.0
  %321 = vmatpush1.msra.mxu0 0.0
  %322 = vmatprep.subr.mxu0 0.0
  %323 = vmatpush1.msra.mxu0 0.0
  %324 = vmatprep.subr.mxu0 0.0
  %325 = vmatpush1.msra.mxu0 0.0
  %326 = vmatprep.subr.mxu0 0.0
  %327 = vmatpush1.msra.mxu0 0.0
  %328 = vmatprep.subr.mxu0 0.0
  %329 = vmatpush1.msra.mxu0 0.0
  %330 = vmatprep.subr.mxu0 0.0
  %331 = vmatpush1.msra.mxu0 0.0
  %332 = vmatprep.subr.mxu0 0.0
  %333 = vmatpush1.msra.mxu0 0.0
  %334 = vmatprep.subr.mxu0 0.0
  %335 = vmatpush1.msra.mxu0 0.0
  %336 = vmatprep.subr.mxu0 0.0
  %337 = vmatpush1.msra.mxu0 0.0
  %338 = vmatprep.subr.mxu0 0.0
  %339 = vmatpush1.msra.mxu0 0.0
  %340 = vmatprep.subr.mxu0 0.0
  %341 = vmatpush1.msra.mxu0 0.0
  %342 = vmatprep.subr.mxu0 0.0
  %343 = vmatpush1.msra.mxu0 0.0
  %344 = vmatprep.subr.mxu0 0.0
  %345 = vmatpush1.msra.mxu0 0.0
  %346 = vmatprep.subr.mxu0 0.0
  %347 = vmatpush1.msra.mxu0 0.0
  %348 = vmatprep.subr.mxu0 0.0
  %349 = vmatpush1.msra.mxu0 0.0
  %350 = vmatprep.subr.mxu0 0.0
  %351 = vmatpush1.msra.mxu0 0.0
  %352 = vmatprep.subr.mxu0 0.0
  %353 = vmatpush1.msra.mxu0 0.0
  %354 = vmatprep.subr.mxu0 0.0
  %355 = vmatpush1.msra.mxu0 0.0
  %356 = vmatprep.subr.mxu0 0.0
  %357 = vmatpush1.msra.mxu0 0.0
  %358 = vmatprep.subr.mxu0 0.0
  %359 = vmatpush1.msra.mxu0 0.0
  %360 = vmatprep.mubr.f32.mxu0 0.0
  %361 = vmatmul.mubr.f32.gmra.mrb[0].mxu0 %v294
  %v362 = vpop.f32.mrb[0].mxu0
  %v363 = vadd.f32 0.0, %v362
  %v364 = vpop.f32.mrb[0].mxu0
  %v365 = vadd.f32 0.0, %v364
  %366 = vdwg.mxu0
  %v367 = vadd.f32 %v363, %v124
  %s368 = scalar_lea.vmem [#allocation2], 24
  %369 = vst [vmem:[%s368] sm:$0xff] %v367
  %s370 = scalar_lea.vmem [#allocation3], 24
  %371 = vst [vmem:[%s370] sm:$0xff] %v365
  %s372 = scalar_lea.vmem %s0, 32
  %v373 = vld [vmem:[%s372] sm:$0xff]
  %v375 = vsel %vm45, %v373, 0
  %377 = vmatprep.subr.mxu0 %v32
  %378 = vmatpush1.msra.mxu0 %v31
  %379 = vmatprep.subr.mxu0 %v34
  %380 = vmatpush1.msra.mxu0 %v33
  %381 = vmatprep.subr.mxu0 %v36
  %382 = vmatpush1.msra.mxu0 %v35
  %383 = vmatprep.subr.mxu0 %v38
  %384 = vmatpush1.msra.mxu0 %v37
  %385 = vmatprep.subr.mxu0 0.0
  %386 = vmatpush1.msra.mxu0 0.0
  %387 = vmatprep.subr.mxu0 0.0
  %388 = vmatpush1.msra.mxu0 0.0
  %389 = vmatprep.subr.mxu0 0.0
  %390 = vmatpush1.msra.mxu0 0.0
  %391 = vmatprep.subr.mxu0 0.0
  %392 = vmatpush1.msra.mxu0 0.0
  %393 = vmatprep.subr.mxu0 0.0
  %394 = vmatpush1.msra.mxu0 0.0
  %395 = vmatprep.subr.mxu0 0.0
  %396 = vmatpush1.msra.mxu0 0.0
  %397 = vmatprep.subr.mxu0 0.0
  %398 = vmatpush1.msra.mxu0 0.0
  %399 = vmatprep.subr.mxu0 0.0
  %400 = vmatpush1.msra.mxu0 0.0
  %401 = vmatprep.subr.mxu0 0.0
  %402 = vmatpush1.msra.mxu0 0.0
  %403 = vmatprep.subr.mxu0 0.0
  %404 = vmatpush1.msra.mxu0 0.0
  %405 = vmatprep.subr.mxu0 0.0
  %406 = vmatpush1.msra.mxu0 0.0
  %407 = vmatprep.subr.mxu0 0.0
  %408 = vmatpush1.msra.mxu0 0.0
  %409 = vmatprep.subr.mxu0 0.0
  %410 = vmatpush1.msra.mxu0 0.0
  %411 = vmatprep.subr.mxu0 0.0
  %412 = vmatpush1.msra.mxu0 0.0
  %413 = vmatprep.subr.mxu0 0.0
  %414 = vmatpush1.msra.mxu0 0.0
  %415 = vmatprep.subr.mxu0 0.0
  %416 = vmatpush1.msra.mxu0 0.0
  %417 = vmatprep.subr.mxu0 0.0
  %418 = vmatpush1.msra.mxu0 0.0
  %419 = vmatprep.subr.mxu0 0.0
  %420 = vmatpush1.msra.mxu0 0.0
  %421 = vmatprep.subr.mxu0 0.0
  %422 = vmatpush1.msra.mxu0 0.0
  %423 = vmatprep.subr.mxu0 0.0
  %424 = vmatpush1.msra.mxu0 0.0
  %425 = vmatprep.subr.mxu0 0.0
  %426 = vmatpush1.msra.mxu0 0.0
  %427 = vmatprep.subr.mxu0 0.0
  %428 = vmatpush1.msra.mxu0 0.0
  %429 = vmatprep.subr.mxu0 0.0
  %430 = vmatpush1.msra.mxu0 0.0
  %431 = vmatprep.subr.mxu0 0.0
  %432 = vmatpush1.msra.mxu0 0.0
  %433 = vmatprep.subr.mxu0 0.0
  %434 = vmatpush1.msra.mxu0 0.0
  %435 = vmatprep.subr.mxu0 0.0
  %436 = vmatpush1.msra.mxu0 0.0
  %437 = vmatprep.subr.mxu0 0.0
  %438 = vmatpush1.msra.mxu0 0.0
  %439 = vmatprep.subr.mxu0 0.0
  %440 = vmatpush1.msra.mxu0 0.0
  %441 = vmatprep.mubr.f32.mxu0 0.0
  %442 = vmatmul.mubr.f32.gmra.mrb[0].mxu0 %v375
  %v443 = vpop.f32.mrb[0].mxu0
  %v444 = vadd.f32 0.0, %v443
  %v445 = vpop.f32.mrb[0].mxu0
  %v446 = vadd.f32 0.0, %v445
  %447 = vdwg.mxu0
  %v448 = vadd.f32 %v444, %v124
  %s449 = scalar_lea.vmem [#allocation2], 32
  %450 = vst [vmem:[%s449] sm:$0xff] %v448
  %s451 = scalar_lea.vmem [#allocation3], 32
  %452 = vst [vmem:[%s451] sm:$0xff] %v446
  %s453 = scalar_lea.vmem %s0, 40
  %v454 = vld [vmem:[%s453] sm:$0xff]
  %v456 = vsel %vm45, %v454, 0
  %458 = vmatprep.subr.mxu0 %v32
  %459 = vmatpush1.msra.mxu0 %v31
  %460 = vmatprep.subr.mxu0 %v34
  %461 = vmatpush1.msra.mxu0 %v33
  %462 = vmatprep.subr.mxu0 %v36
  %463 = vmatpush1.msra.mxu0 %v35
  %464 = vmatprep.subr.mxu0 %v38
  %465 = vmatpush1.msra.mxu0 %v37
  %466 = vmatprep.subr.mxu0 0.0
  %467 = vmatpush1.msra.mxu0 0.0
  %468 = vmatprep.subr.mxu0 0.0
  %469 = vmatpush1.msra.mxu0 0.0
  %470 = vmatprep.subr.mxu0 0.0
  %471 = vmatpush1.msra.mxu0 0.0
  %472 = vmatprep.subr.mxu0 0.0
  %473 = vmatpush1.msra.mxu0 0.0
  %474 = vmatprep.subr.mxu0 0.0
  %475 = vmatpush1.msra.mxu0 0.0
  %476 = vmatprep.subr.mxu0 0.0
  %477 = vmatpush1.msra.mxu0 0.0
  %478 = vmatprep.subr.mxu0 0.0
  %479 = vmatpush1.msra.mxu0 0.0
  %480 = vmatprep.subr.mxu0 0.0
  %481 = vmatpush1.msra.mxu0 0.0
  %482 = vmatprep.subr.mxu0 0.0
  %483 = vmatpush1.msra.mxu0 0.0
  %484 = vmatprep.subr.mxu0 0.0
  %485 = vmatpush1.msra.mxu0 0.0
  %486 = vmatprep.subr.mxu0 0.0
  %487 = vmatpush1.msra.mxu0 0.0
  %488 = vmatprep.subr.mxu0 0.0
  %489 = vmatpush1.msra.mxu0 0.0
  %490 = vmatprep.subr.mxu0 0.0
  %491 = vmatpush1.msra.mxu0 0.0
  %492 = vmatprep.subr.mxu0 0.0
  %493 = vmatpush1.msra.mxu0 0.0
  %494 = vmatprep.subr.mxu0 0.0
  %495 = vmatpush1.msra.mxu0 0.0
  %496 = vmatprep.subr.mxu0 0.0
  %497 = vmatpush1.msra.mxu0 0.0
  %498 = vmatprep.subr.mxu0 0.0
  %499 = vmatpush1.msra.mxu0 0.0
  %500 = vmatprep.subr.mxu0 0.0
  %501 = vmatpush1.msra.mxu0 0.0
  %502 = vmatprep.subr.mxu0 0.0
  %503 = vmatpush1.msra.mxu0 0.0
  %504 = vmatprep.subr.mxu0 0.0
  %505 = vmatpush1.msra.mxu0 0.0
  %506 = vmatprep.subr.mxu0 0.0
  %507 = vmatpush1.msra.mxu0 0.0
  %508 = vmatprep.subr.mxu0 0.0
  %509 = vmatpush1.msra.mxu0 0.0
  %510 = vmatprep.subr.mxu0 0.0
  %511 = vmatpush1.msra.mxu0 0.0
  %512 = vmatprep.subr.mxu0 0.0
  %513 = vmatpush1.msra.mxu0 0.0
  %514 = vmatprep.subr.mxu0 0.0
  %515 = vmatpush1.msra.mxu0 0.0
  %516 = vmatprep.subr.mxu0 0.0
  %517 = vmatpush1.msra.mxu0 0.0
  %518 = vmatprep.subr.mxu0 0.0
  %519 = vmatpush1.msra.mxu0 0.0
  %520 = vmatprep.subr.mxu0 0.0
  %521 = vmatpush1.msra.mxu0 0.0
  %522 = vmatprep.mubr.f32.mxu0 0.0
  %523 = vmatmul.mubr.f32.gmra.mrb[0].mxu0 %v456
  %v524 = vpop.f32.mrb[0].mxu0
  %v525 = vadd.f32 0.0, %v524
  %v526 = vpop.f32.mrb[0].mxu0
  %v527 = vadd.f32 0.0, %v526
  %528 = vdwg.mxu0
  %v529 = vadd.f32 %v525, %v124
  %s530 = scalar_lea.vmem [#allocation2], 40
  %531 = vst [vmem:[%s530] sm:$0xff] %v529
  %s532 = scalar_lea.vmem [#allocation3], 40
  %533 = vst [vmem:[%s532] sm:$0xff] %v527
  %s534 = scalar_lea.vmem %s0, 48
  %v535 = vld [vmem:[%s534] sm:$0xff]
  %v537 = vsel %vm45, %v535, 0
  %539 = vmatprep.subr.mxu0 %v32
  %540 = vmatpush1.msra.mxu0 %v31
  %541 = vmatprep.subr.mxu0 %v34
  %542 = vmatpush1.msra.mxu0 %v33
  %543 = vmatprep.subr.mxu0 %v36
  %544 = vmatpush1.msra.mxu0 %v35
  %545 = vmatprep.subr.mxu0 %v38
  %546 = vmatpush1.msra.mxu0 %v37
  %547 = vmatprep.subr.mxu0 0.0
  %548 = vmatpush1.msra.mxu0 0.0
  %549 = vmatprep.subr.mxu0 0.0
  %550 = vmatpush1.msra.mxu0 0.0
  %551 = vmatprep.subr.mxu0 0.0
  %552 = vmatpush1.msra.mxu0 0.0
  %553 = vmatprep.subr.mxu0 0.0
  %554 = vmatpush1.msra.mxu0 0.0
  %555 = vmatprep.subr.mxu0 0.0
  %556 = vmatpush1.msra.mxu0 0.0
  %557 = vmatprep.subr.mxu0 0.0
  %558 = vmatpush1.msra.mxu0 0.0
  %559 = vmatprep.subr.mxu0 0.0
  %560 = vmatpush1.msra.mxu0 0.0
  %561 = vmatprep.subr.mxu0 0.0
  %562 = vmatpush1.msra.mxu0 0.0
  %563 = vmatprep.subr.mxu0 0.0
  %564 = vmatpush1.msra.mxu0 0.0
  %565 = vmatprep.subr.mxu0 0.0
  %566 = vmatpush1.msra.mxu0 0.0
  %567 = vmatprep.subr.mxu0 0.0
  %568 = vmatpush1.msra.mxu0 0.0
  %569 = vmatprep.subr.mxu0 0.0
  %570 = vmatpush1.msra.mxu0 0.0
  %571 = vmatprep.subr.mxu0 0.0
  %572 = vmatpush1.msra.mxu0 0.0
  %573 = vmatprep.subr.mxu0 0.0
  %574 = vmatpush1.msra.mxu0 0.0
  %575 = vmatprep.subr.mxu0 0.0
  %576 = vmatpush1.msra.mxu0 0.0
  %577 = vmatprep.subr.mxu0 0.0
  %578 = vmatpush1.msra.mxu0 0.0
  %579 = vmatprep.subr.mxu0 0.0
  %580 = vmatpush1.msra.mxu0 0.0
  %581 = vmatprep.subr.mxu0 0.0
  %582 = vmatpush1.msra.mxu0 0.0
  %583 = vmatprep.subr.mxu0 0.0
  %584 = vmatpush1.msra.mxu0 0.0
  %585 = vmatprep.subr.mxu0 0.0
  %586 = vmatpush1.msra.mxu0 0.0
  %587 = vmatprep.subr.mxu0 0.0
  %588 = vmatpush1.msra.mxu0 0.0
  %589 = vmatprep.subr.mxu0 0.0
  %590 = vmatpush1.msra.mxu0 0.0
  %591 = vmatprep.subr.mxu0 0.0
  %592 = vmatpush1.msra.mxu0 0.0
  %593 = vmatprep.subr.mxu0 0.0
  %594 = vmatpush1.msra.mxu0 0.0
  %595 = vmatprep.subr.mxu0 0.0
  %596 = vmatpush1.msra.mxu0 0.0
  %597 = vmatprep.subr.mxu0 0.0
  %598 = vmatpush1.msra.mxu0 0.0
  %599 = vmatprep.subr.mxu0 0.0
  %600 = vmatpush1.msra.mxu0 0.0
  %601 = vmatprep.subr.mxu0 0.0
  %602 = vmatpush1.msra.mxu0 0.0
  %603 = vmatprep.mubr.f32.mxu0 0.0
  %604 = vmatmul.mubr.f32.gmra.mrb[0].mxu0 %v537
  %v605 = vpop.f32.mrb[0].mxu0
  %v606 = vadd.f32 0.0, %v605
  %v607 = vpop.f32.mrb[0].mxu0
  %v608 = vadd.f32 0.0, %v607
  %609 = vdwg.mxu0
  %v610 = vadd.f32 %v606, %v124
  %s611 = scalar_lea.vmem [#allocation2], 48
  %612 = vst [vmem:[%s611] sm:$0xff] %v610
  %s613 = scalar_lea.vmem [#allocation3], 48
  %614 = vst [vmem:[%s613] sm:$0xff] %v608
  %s615 = scalar_lea.vmem %s0, 56
  %v616 = vld [vmem:[%s615] sm:$0xff]
  %v618 = vsel %vm45, %v616, 0
  %620 = vmatprep.subr.mxu0 %v32
  %621 = vmatpush1.msra.mxu0 %v31
  %622 = vmatprep.subr.mxu0 %v34
  %623 = vmatpush1.msra.mxu0 %v33
  %624 = vmatprep.subr.mxu0 %v36
  %625 = vmatpush1.msra.mxu0 %v35
  %626 = vmatprep.subr.mxu0 %v38
  %627 = vmatpush1.msra.mxu0 %v37
  %628 = vmatprep.subr.mxu0 0.0
  %629 = vmatpush1.msra.mxu0 0.0
  %630 = vmatprep.subr.mxu0 0.0
  %631 = vmatpush1.msra.mxu0 0.0
  %632 = vmatprep.subr.mxu0 0.0
  %633 = vmatpush1.msra.mxu0 0.0
  %634 = vmatprep.subr.mxu0 0.0
  %635 = vmatpush1.msra.mxu0 0.0
  %636 = vmatprep.subr.mxu0 0.0
  %637 = vmatpush1.msra.mxu0 0.0
  %638 = vmatprep.subr.mxu0 0.0
  %639 = vmatpush1.msra.mxu0 0.0
  %640 = vmatprep.subr.mxu0 0.0
  %641 = vmatpush1.msra.mxu0 0.0
  %642 = vmatprep.subr.mxu0 0.0
  %643 = vmatpush1.msra.mxu0 0.0
  %644 = vmatprep.subr.mxu0 0.0
  %645 = vmatpush1.msra.mxu0 0.0
  %646 = vmatprep.subr.mxu0 0.0
  %647 = vmatpush1.msra.mxu0 0.0
  %648 = vmatprep.subr.mxu0 0.0
  %649 = vmatpush1.msra.mxu0 0.0
  %650 = vmatprep.subr.mxu0 0.0
  %651 = vmatpush1.msra.mxu0 0.0
  %652 = vmatprep.subr.mxu0 0.0
  %653 = vmatpush1.msra.mxu0 0.0
  %654 = vmatprep.subr.mxu0 0.0
  %655 = vmatpush1.msra.mxu0 0.0
  %656 = vmatprep.subr.mxu0 0.0
  %657 = vmatpush1.msra.mxu0 0.0
  %658 = vmatprep.subr.mxu0 0.0
  %659 = vmatpush1.msra.mxu0 0.0
  %660 = vmatprep.subr.mxu0 0.0
  %661 = vmatpush1.msra.mxu0 0.0
  %662 = vmatprep.subr.mxu0 0.0
  %663 = vmatpush1.msra.mxu0 0.0
  %664 = vmatprep.subr.mxu0 0.0
  %665 = vmatpush1.msra.mxu0 0.0
  %666 = vmatprep.subr.mxu0 0.0
  %667 = vmatpush1.msra.mxu0 0.0
  %668 = vmatprep.subr.mxu0 0.0
  %669 = vmatpush1.msra.mxu0 0.0
  %670 = vmatprep.subr.mxu0 0.0
  %671 = vmatpush1.msra.mxu0 0.0
  %672 = vmatprep.subr.mxu0 0.0
  %673 = vmatpush1.msra.mxu0 0.0
  %674 = vmatprep.subr.mxu0 0.0
  %675 = vmatpush1.msra.mxu0 0.0
  %676 = vmatprep.subr.mxu0 0.0
  %677 = vmatpush1.msra.mxu0 0.0
  %678 = vmatprep.subr.mxu0 0.0
  %679 = vmatpush1.msra.mxu0 0.0
  %680 = vmatprep.subr.mxu0 0.0
  %681 = vmatpush1.msra.mxu0 0.0
  %682 = vmatprep.subr.mxu0 0.0
  %683 = vmatpush1.msra.mxu0 0.0
  %684 = vmatprep.mubr.f32.mxu0 0.0
  %685 = vmatmul.mubr.f32.gmra.mrb[0].mxu0 %v618
  %v686 = vpop.f32.mrb[0].mxu0
  %v687 = vadd.f32 0.0, %v686
  %v688 = vpop.f32.mrb[0].mxu0
  %v689 = vadd.f32 0.0, %v688
  %690 = vdwg.mxu0
  %v691 = vadd.f32 %v687, %v124
  %s692 = scalar_lea.vmem [#allocation2], 56
  %693 = vst [vmem:[%s692] sm:$0xff] %v691
  %s694 = scalar_lea.vmem [#allocation3], 56
  %695 = vst [vmem:[%s694] sm:$0xff] %v689
  %v696 = vld [vmem:[%s5] sm:$0xff]
  %697 = vst.msk [vmem:[#allocation7] sm:$0xff] %vm45, %v696
  %v698 = vld [vmem:[%s6] sm:$0xff]
  %699 = vst.msk [vmem:[#allocation8] sm:$0xff] %vm45, %v698
  %v700 = vld [vmem:[#allocation7] sm:$0xff]
  %v701 = vld [vmem:[#allocation8] sm:$0xff]
  %v702 = vld [vmem:[#allocation2] sm:$0xff]
  %v703 = vld [vmem:[%s694] sm:$0xff]
  %v704 = vadd.f32 %v702, %v703
  %v705 = vpack.c.bf16 %v700, %v700
  %v710 = vunpack.c.l.b16 %v40
  %v711 = vunpack.c.l.b16 %v41
  %v712 = vunpack.c.l.b16 %v42
  %v713 = vunpack.c.l.b16 %v43
  %v714 = vpack.c.b16 %v711, %v710
  %v715 = vpack.c.b16 %v713, %v712
  %v719 = vsel %vm45, %v705, 0
  %721 = vmatprep.subr.bf16.mxu0 0
  %722 = vmatpush1.bf16.msra.mxu0 %v714
  %723 = vmatprep.subr.bf16.mxu0 0
  %724 = vmatpush1.bf16.msra.mxu0 %v715
  %725 = vmatprep.subr.bf16.mxu0 0
  %726 = vmatpush1.bf16.msra.mxu0 0
  %727 = vmatprep.subr.bf16.mxu0 0
  %728 = vmatpush1.bf16.msra.mxu0 0
  %729 = vmatprep.subr.bf16.mxu0 0
  %730 = vmatpush1.bf16.msra.mxu0 0
  %731 = vmatprep.subr.bf16.mxu0 0
  %732 = vmatpush1.bf16.msra.mxu0 0
  %733 = vmatprep.subr.bf16.mxu0 0
  %734 = vmatpush1.bf16.msra.mxu0 0
  %735 = vmatprep.subr.bf16.mxu0 0
  %736 = vmatpush1.bf16.msra.mxu0 0
  %737 = vmatprep.subr.bf16.mxu0 0
  %738 = vmatpush1.bf16.msra.mxu0 0
  %739 = vmatprep.subr.bf16.mxu0 0
  %740 = vmatpush1.bf16.msra.mxu0 0
  %741 = vmatprep.subr.bf16.mxu0 0
  %742 = vmatpush1.bf16.msra.mxu0 0
  %743 = vmatprep.subr.bf16.mxu0 0
  %744 = vmatpush1.bf16.msra.mxu0 0
  %745 = vmatprep.subr.bf16.mxu0 0
  %746 = vmatpush1.bf16.msra.mxu0 0
  %747 = vmatprep.subr.bf16.mxu0 0
  %748 = vmatpush1.bf16.msra.mxu0 0
  %749 = vmatprep.subr.bf16.mxu0 0
  %750 = vmatpush1.bf16.msra.mxu0 0
  %751 = vmatprep.subr.bf16.mxu0 0
  %752 = vmatpush1.bf16.msra.mxu0 0
  %753 = vmatprep.mubr.bf16.mxu0 0
  %754 = vmatmul.mubr.bf16.gmra.mrb[0].mxu0 %v719
  %v755 = vpop.f32.mrb[0].mxu0
  %v756 = vadd.f32 0.0, %v755
  %v757 = vpop.f32.mrb[0].mxu0
  %v758 = vpop.f32.mrb[0].mxu0
  %v759 = vpop.f32.mrb[0].mxu0
  %760 = vdwg.mxu0
  %v761 = vadd.f32 %v704, %v756
  %v762 = vxor.u32 %v761, 2147483648
  %v763 = vmul.f32 %v762, 1.442695
  %v764 = vpow.pop %v763
  %v765 = vadd.f32 %v764, 1.0
  %v766 = vrcp.pop %v765
  %v767 = vmul.f32 1.0, %v766
  %v768 = vtanh.pop %v761
  %770 = vrot.lane.b32.xlu0 %v701, 32
  %v771 = vpop.permute.xlu0 %770
  %v773 = vmul.f32 %v767, %v771
  %775 = vrot.lane.b32.xlu0 %v768, 32
  %v776 = vpop.permute.xlu0 %775
  %v778 = vmul.f32 %v767, %v776
  %780 = vrot.lane.b32.xlu0 %v778, 32
  %v781 = vpop.permute.xlu0 %780
  %v783 = vadd.f32 %v773, %v781
  %v784 = vtanh.pop %v783
  %786 = vrot.lane.b32.xlu0 %v784, 32
  %v787 = vpop.permute.xlu0 %786
  %v789 = vmul.f32 %v767, %v787
  %v790 = vsel %vm30, 7, 0
  %791 = vset.pattern.permute.xlu0 0
  %792 = vperm.xlu0 %791, %v27
  %v793 = vpop.permute.xlu0 %792
  %vm794 = vcmp.lt.s32.totalorder %v790, %v793
  %796 = vrot.lane.b32.xlu0 %v789, 64
  %v797 = vpop.permute.xlu0 %796
  %v799 = vsel %vm794, %v797, %v700
  %800 = vst.msk [vmem:[#allocation7] sm:$0xff] %vm45, %v799
  %802 = vrot.lane.b32.xlu0 %v783, 96
  %v803 = vpop.permute.xlu0 %802
  %v805 = vsel %vm794, %v803, %v701
  %806 = vst.msk [vmem:[#allocation8] sm:$0xff] %vm45, %v805
  %v807 = vsel %vm794, %v797, 0.0
  %vm808 = vcmask 130048
  %809 = vst.msk [vmem:[#allocation5] sm:$0xff] %vm808, %v807
  %811 = vrot.lane.b32.xlu0 %v807, 112
  %v812 = vpop.permute.xlu0 %811
  %s814 = scalar_lea.vmem [#allocation6], 56
  %815 = vst.msk [vmem:[%s814] sm:$0xff] %vm808, %v812
  %v816 = vld [vmem:[#allocation7] sm:$0xff]
  %v817 = vld [vmem:[#allocation8] sm:$0xff]
  %v818 = vld [vmem:[%s206] sm:$0xff]
  %v819 = vld [vmem:[%s613] sm:$0xff]
  %v820 = vadd.f32 %v818, %v819
  %v821 = vpack.c.bf16 %v816, %v816
  %v823 = vsel %vm45, %v821, 0
  %825 = vmatprep.subr.bf16.mxu0 0
  %826 = vmatpush1.bf16.msra.mxu0 %v714
  %827 = vmatprep.subr.bf16.mxu0 0
  %828 = vmatpush1.bf16.msra.mxu0 %v715
  %829 = vmatprep.subr.bf16.mxu0 0
  %830 = vmatpush1.bf16.msra.mxu0 0
  %831 = vmatprep.subr.bf16.mxu0 0
  %832 = vmatpush1.bf16.msra.mxu0 0
  %833 = vmatprep.subr.bf16.mxu0 0
  %834 = vmatpush1.bf16.msra.mxu0 0
  %835 = vmatprep.subr.bf16.mxu0 0
  %836 = vmatpush1.bf16.msra.mxu0 0
  %837 = vmatprep.subr.bf16.mxu0 0
  %838 = vmatpush1.bf16.msra.mxu0 0
  %839 = vmatprep.subr.bf16.mxu0 0
  %840 = vmatpush1.bf16.msra.mxu0 0
  %841 = vmatprep.subr.bf16.mxu0 0
  %842 = vmatpush1.bf16.msra.mxu0 0
  %843 = vmatprep.subr.bf16.mxu0 0
  %844 = vmatpush1.bf16.msra.mxu0 0
  %845 = vmatprep.subr.bf16.mxu0 0
  %846 = vmatpush1.bf16.msra.mxu0 0
  %847 = vmatprep.subr.bf16.mxu0 0
  %848 = vmatpush1.bf16.msra.mxu0 0
  %849 = vmatprep.subr.bf16.mxu0 0
  %850 = vmatpush1.bf16.msra.mxu0 0
  %851 = vmatprep.subr.bf16.mxu0 0
  %852 = vmatpush1.bf16.msra.mxu0 0
  %853 = vmatprep.subr.bf16.mxu0 0
  %854 = vmatpush1.bf16.msra.mxu0 0
  %855 = vmatprep.subr.bf16.mxu0 0
  %856 = vmatpush1.bf16.msra.mxu0 0
  %857 = vmatprep.mubr.bf16.mxu0 0
  %858 = vmatmul.mubr.bf16.gmra.mrb[0].mxu0 %v823
  %v859 = vpop.f32.mrb[0].mxu0
  %v860 = vadd.f32 0.0, %v859
  %v861 = vpop.f32.mrb[0].mxu0
  %v862 = vpop.f32.mrb[0].mxu0
  %v863 = vpop.f32.mrb[0].mxu0
  %864 = vdwg.mxu0
  %v865 = vadd.f32 %v820, %v860
  %v866 = vxor.u32 %v865, 2147483648
  %v867 = vmul.f32 %v866, 1.442695
  %v868 = vpow.pop %v867
  %v869 = vadd.f32 %v868, 1.0
  %v870 = vrcp.pop %v869
  %v871 = vmul.f32 1.0, %v870
  %v872 = vtanh.pop %v865
  %874 = vrot.lane.b32.xlu0 %v817, 32
  %v875 = vpop.permute.xlu0 %874
  %v877 = vmul.f32 %v871, %v875
  %879 = vrot.lane.b32.xlu0 %v872, 32
  %v880 = vpop.permute.xlu0 %879
  %v882 = vmul.f32 %v871, %v880
  %884 = vrot.lane.b32.xlu0 %v882, 32
  %v885 = vpop.permute.xlu0 %884
  %v887 = vadd.f32 %v877, %v885
  %v888 = vtanh.pop %v887
  %890 = vrot.lane.b32.xlu0 %v888, 32
  %v891 = vpop.permute.xlu0 %890
  %v893 = vmul.f32 %v871, %v891
  %v894 = vsel %vm30, 6, 1
  %vm895 = vcmp.lt.s32.totalorder %v894, %v793
  %897 = vrot.lane.b32.xlu0 %v893, 64
  %v898 = vpop.permute.xlu0 %897
  %v900 = vsel %vm895, %v898, %v816
  %901 = vst.msk [vmem:[#allocation7] sm:$0xff] %vm45, %v900
  %903 = vrot.lane.b32.xlu0 %v887, 96
  %v904 = vpop.permute.xlu0 %903
  %v906 = vsel %vm895, %v904, %v817
  %907 = vst.msk [vmem:[#allocation8] sm:$0xff] %vm45, %v906
  %v908 = vsel %vm895, %v898, 0.0
  %s909 = scalar_lea.vmem [#allocation5], 8
  %910 = vst.msk [vmem:[%s909] sm:$0xff] %vm808, %v908
  %912 = vrot.lane.b32.xlu0 %v908, 112
  %v913 = vpop.permute.xlu0 %912
  %s915 = scalar_lea.vmem [#allocation6], 48
  %916 = vst.msk [vmem:[%s915] sm:$0xff] %vm808, %v913
  %v917 = vld [vmem:[#allocation7] sm:$0xff]
  %v918 = vld [vmem:[#allocation8] sm:$0xff]
  %v919 = vld [vmem:[%s287] sm:$0xff]
  %v920 = vld [vmem:[%s532] sm:$0xff]
  %v921 = vadd.f32 %v919, %v920
  %v922 = vpack.c.bf16 %v917, %v917
  %v924 = vsel %vm45, %v922, 0
  %926 = vmatprep.subr.bf16.mxu0 0
  %927 = vmatpush1.bf16.msra.mxu0 %v714
  %928 = vmatprep.subr.bf16.mxu0 0
  %929 = vmatpush1.bf16.msra.mxu0 %v715
  %930 = vmatprep.subr.bf16.mxu0 0
  %931 = vmatpush1.bf16.msra.mxu0 0
  %932 = vmatprep.subr.bf16.mxu0 0
  %933 = vmatpush1.bf16.msra.mxu0 0
  %934 = vmatprep.subr.bf16.mxu0 0
  %935 = vmatpush1.bf16.msra.mxu0 0
  %936 = vmatprep.subr.bf16.mxu0 0
  %937 = vmatpush1.bf16.msra.mxu0 0
  %938 = vmatprep.subr.bf16.mxu0 0
  %939 = vmatpush1.bf16.msra.mxu0 0
  %940 = vmatprep.subr.bf16.mxu0 0
  %941 = vmatpush1.bf16.msra.mxu0 0
  %942 = vmatprep.subr.bf16.mxu0 0
  %943 = vmatpush1.bf16.msra.mxu0 0
  %944 = vmatprep.subr.bf16.mxu0 0
  %945 = vmatpush1.bf16.msra.mxu0 0
  %946 = vmatprep.subr.bf16.mxu0 0
  %947 = vmatpush1.bf16.msra.mxu0 0
  %948 = vmatprep.subr.bf16.mxu0 0
  %949 = vmatpush1.bf16.msra.mxu0 0
  %950 = vmatprep.subr.bf16.mxu0 0
  %951 = vmatpush1.bf16.msra.mxu0 0
  %952 = vmatprep.subr.bf16.mxu0 0
  %953 = vmatpush1.bf16.msra.mxu0 0
  %954 = vmatprep.subr.bf16.mxu0 0
  %955 = vmatpush1.bf16.msra.mxu0 0
  %956 = vmatprep.subr.bf16.mxu0 0
  %957 = vmatpush1.bf16.msra.mxu0 0
  %958 = vmatprep.mubr.bf16.mxu0 0
  %959 = vmatmul.mubr.bf16.gmra.mrb[0].mxu0 %v924
  %v960 = vpop.f32.mrb[0].mxu0
  %v961 = vadd.f32 0.0, %v960
  %v962 = vpop.f32.mrb[0].mxu0
  %v963 = vpop.f32.mrb[0].mxu0
  %v964 = vpop.f32.mrb[0].mxu0
  %965 = vdwg.mxu0
  %v966 = vadd.f32 %v921, %v961
  %v967 = vxor.u32 %v966, 2147483648
  %v968 = vmul.f32 %v967, 1.442695
  %v969 = vpow.pop %v968
  %v970 = vadd.f32 %v969, 1.0
  %v971 = vrcp.pop %v970
  %v972 = vmul.f32 1.0, %v971
  %v973 = vtanh.pop %v966
  %975 = vrot.lane.b32.xlu0 %v918, 32
  %v976 = vpop.permute.xlu0 %975
  %v978 = vmul.f32 %v972, %v976
  %980 = vrot.lane.b32.xlu0 %v973, 32
  %v981 = vpop.permute.xlu0 %980
  %v983 = vmul.f32 %v972, %v981
  %985 = vrot.lane.b32.xlu0 %v983, 32
  %v986 = vpop.permute.xlu0 %985
  %v988 = vadd.f32 %v978, %v986
  %v989 = vtanh.pop %v988
  %991 = vrot.lane.b32.xlu0 %v989, 32
  %v992 = vpop.permute.xlu0 %991
  %v994 = vmul.f32 %v972, %v992
  %v995 = vsel %vm30, 5, 2
  %vm996 = vcmp.lt.s32.totalorder %v995, %v793
  %998 = vrot.lane.b32.xlu0 %v994, 64
  %v999 = vpop.permute.xlu0 %998
  %v1001 = vsel %vm996, %v999, %v917
  %1002 = vst.msk [vmem:[#allocation7] sm:$0xff] %vm45, %v1001
  %1004 = vrot.lane.b32.xlu0 %v988, 96
  %v1005 = vpop.permute.xlu0 %1004
  %v1007 = vsel %vm996, %v1005, %v918
  %1008 = vst.msk [vmem:[#allocation8] sm:$0xff] %vm45, %v1007
  %v1009 = vsel %vm996, %v999, 0.0
  %s1010 = scalar_lea.vmem [#allocation5], 16
  %1011 = vst.msk [vmem:[%s1010] sm:$0xff] %vm808, %v1009
  %1013 = vrot.lane.b32.xlu0 %v1009, 112
  %v1014 = vpop.permute.xlu0 %1013
  %s1016 = scalar_lea.vmem [#allocation6], 40
  %1017 = vst.msk [vmem:[%s1016] sm:$0xff] %vm808, %v1014
  %v1018 = vld [vmem:[#allocation7] sm:$0xff]
  %v1019 = vld [vmem:[#allocation8] sm:$0xff]
  %v1020 = vld [vmem:[%s368] sm:$0xff]
  %v1021 = vld [vmem:[%s451] sm:$0xff]
  %v1022 = vadd.f32 %v1020, %v1021
  %v1023 = vpack.c.bf16 %v1018, %v1018
  %v1025 = vsel %vm45, %v1023, 0
  %1027 = vmatprep.subr.bf16.mxu0 0
  %1028 = vmatpush1.bf16.msra.mxu0 %v714
  %1029 = vmatprep.subr.bf16.mxu0 0
  %1030 = vmatpush1.bf16.msra.mxu0 %v715
  %1031 = vmatprep.subr.bf16.mxu0 0
  %1032 = vmatpush1.bf16.msra.mxu0 0
  %1033 = vmatprep.subr.bf16.mxu0 0
  %1034 = vmatpush1.bf16.msra.mxu0 0
  %1035 = vmatprep.subr.bf16.mxu0 0
  %1036 = vmatpush1.bf16.msra.mxu0 0
  %1037 = vmatprep.subr.bf16.mxu0 0
  %1038 = vmatpush1.bf16.msra.mxu0 0
  %1039 = vmatprep.subr.bf16.mxu0 0
  %1040 = vmatpush1.bf16.msra.mxu0 0
  %1041 = vmatprep.subr.bf16.mxu0 0
  %1042 = vmatpush1.bf16.msra.mxu0 0
  %1043 = vmatprep.subr.bf16.mxu0 0
  %1044 = vmatpush1.bf16.msra.mxu0 0
  %1045 = vmatprep.subr.bf16.mxu0 0
  %1046 = vmatpush1.bf16.msra.mxu0 0
  %1047 = vmatprep.subr.bf16.mxu0 0
  %1048 = vmatpush1.bf16.msra.mxu0 0
  %1049 = vmatprep.subr.bf16.mxu0 0
  %1050 = vmatpush1.bf16.msra.mxu0 0
  %1051 = vmatprep.subr.bf16.mxu0 0
  %1052 = vmatpush1.bf16.msra.mxu0 0
  %1053 = vmatprep.subr.bf16.mxu0 0
  %1054 = vmatpush1.bf16.msra.mxu0 0
  %1055 = vmatprep.subr.bf16.mxu0 0
  %1056 = vmatpush1.bf16.msra.mxu0 0
  %1057 = vmatprep.subr.bf16.mxu0 0
  %1058 = vmatpush1.bf16.msra.mxu0 0
  %1059 = vmatprep.mubr.bf16.mxu0 0
  %1060 = vmatmul.mubr.bf16.gmra.mrb[0].mxu0 %v1025
  %v1061 = vpop.f32.mrb[0].mxu0
  %v1062 = vadd.f32 0.0, %v1061
  %v1063 = vpop.f32.mrb[0].mxu0
  %v1064 = vpop.f32.mrb[0].mxu0
  %v1065 = vpop.f32.mrb[0].mxu0
  %1066 = vdwg.mxu0
  %v1067 = vadd.f32 %v1022, %v1062
  %v1068 = vxor.u32 %v1067, 2147483648
  %v1069 = vmul.f32 %v1068, 1.442695
  %v1070 = vpow.pop %v1069
  %v1071 = vadd.f32 %v1070, 1.0
  %v1072 = vrcp.pop %v1071
  %v1073 = vmul.f32 1.0, %v1072
  %v1074 = vtanh.pop %v1067
  %1076 = vrot.lane.b32.xlu0 %v1019, 32
  %v1077 = vpop.permute.xlu0 %1076
  %v1079 = vmul.f32 %v1073, %v1077
  %1081 = vrot.lane.b32.xlu0 %v1074, 32
  %v1082 = vpop.permute.xlu0 %1081
  %v1084 = vmul.f32 %v1073, %v1082
  %1086 = vrot.lane.b32.xlu0 %v1084, 32
  %v1087 = vpop.permute.xlu0 %1086
  %v1089 = vadd.f32 %v1079, %v1087
  %v1090 = vtanh.pop %v1089
  %1092 = vrot.lane.b32.xlu0 %v1090, 32
  %v1093 = vpop.permute.xlu0 %1092
  %v1095 = vmul.f32 %v1073, %v1093
  %v1096 = vsel %vm30, 4, 3
  %vm1097 = vcmp.lt.s32.totalorder %v1096, %v793
  %1099 = vrot.lane.b32.xlu0 %v1095, 64
  %v1100 = vpop.permute.xlu0 %1099
  %v1102 = vsel %vm1097, %v1100, %v1018
  %1103 = vst.msk [vmem:[#allocation7] sm:$0xff] %vm45, %v1102
  %1105 = vrot.lane.b32.xlu0 %v1089, 96
  %v1106 = vpop.permute.xlu0 %1105
  %v1108 = vsel %vm1097, %v1106, %v1019
  %1109 = vst.msk [vmem:[#allocation8] sm:$0xff] %vm45, %v1108
  %v1110 = vsel %vm1097, %v1100, 0.0
  %s1111 = scalar_lea.vmem [#allocation5], 24
  %1112 = vst.msk [vmem:[%s1111] sm:$0xff] %vm808, %v1110
  %1114 = vrot.lane.b32.xlu0 %v1110, 112
  %v1115 = vpop.permute.xlu0 %1114
  %s1117 = scalar_lea.vmem [#allocation6], 32
  %1118 = vst.msk [vmem:[%s1117] sm:$0xff] %vm808, %v1115
  %v1119 = vld [vmem:[#allocation7] sm:$0xff]
  %v1120 = vld [vmem:[#allocation8] sm:$0xff]
  %v1121 = vld [vmem:[%s449] sm:$0xff]
  %v1122 = vld [vmem:[%s370] sm:$0xff]
  %v1123 = vadd.f32 %v1121, %v1122
  %v1124 = vpack.c.bf16 %v1119, %v1119
  %v1126 = vsel %vm45, %v1124, 0
  %1128 = vmatprep.subr.bf16.mxu0 0
  %1129 = vmatpush1.bf16.msra.mxu0 %v714
  %1130 = vmatprep.subr.bf16.mxu0 0
  %1131 = vmatpush1.bf16.msra.mxu0 %v715
  %1132 = vmatprep.subr.bf16.mxu0 0
  %1133 = vmatpush1.bf16.msra.mxu0 0
  %1134 = vmatprep.subr.bf16.mxu0 0
  %1135 = vmatpush1.bf16.msra.mxu0 0
  %1136 = vmatprep.subr.bf16.mxu0 0
  %1137 = vmatpush1.bf16.msra.mxu0 0
  %1138 = vmatprep.subr.bf16.mxu0 0
  %1139 = vmatpush1.bf16.msra.mxu0 0
  %1140 = vmatprep.subr.bf16.mxu0 0
  %1141 = vmatpush1.bf16.msra.mxu0 0
  %1142 = vmatprep.subr.bf16.mxu0 0
  %1143 = vmatpush1.bf16.msra.mxu0 0
  %1144 = vmatprep.subr.bf16.mxu0 0
  %1145 = vmatpush1.bf16.msra.mxu0 0
  %1146 = vmatprep.subr.bf16.mxu0 0
  %1147 = vmatpush1.bf16.msra.mxu0 0
  %1148 = vmatprep.subr.bf16.mxu0 0
  %1149 = vmatpush1.bf16.msra.mxu0 0
  %1150 = vmatprep.subr.bf16.mxu0 0
  %1151 = vmatpush1.bf16.msra.mxu0 0
  %1152 = vmatprep.subr.bf16.mxu0 0
  %1153 = vmatpush1.bf16.msra.mxu0 0
  %1154 = vmatprep.subr.bf16.mxu0 0
  %1155 = vmatpush1.bf16.msra.mxu0 0
  %1156 = vmatprep.subr.bf16.mxu0 0
  %1157 = vmatpush1.bf16.msra.mxu0 0
  %1158 = vmatprep.subr.bf16.mxu0 0
  %1159 = vmatpush1.bf16.msra.mxu0 0
  %1160 = vmatprep.mubr.bf16.mxu0 0
  %1161 = vmatmul.mubr.bf16.gmra.mrb[0].mxu0 %v1126
  %v1162 = vpop.f32.mrb[0].mxu0
  %v1163 = vadd.f32 0.0, %v1162
  %v1164 = vpop.f32.mrb[0].mxu0
  %v1165 = vpop.f32.mrb[0].mxu0
  %v1166 = vpop.f32.mrb[0].mxu0
  %1167 = vdwg.mxu0
  %v1168 = vadd.f32 %v1123, %v1163
  %v1169 = vxor.u32 %v1168, 2147483648
  %v1170 = vmul.f32 %v1169, 1.442695
  %v1171 = vpow.pop %v1170
  %v1172 = vadd.f32 %v1171, 1.0
  %v1173 = vrcp.pop %v1172
  %v1174 = vmul.f32 1.0, %v1173
  %v1175 = vtanh.pop %v1168
  %1177 = vrot.lane.b32.xlu0 %v1120, 32
  %v1178 = vpop.permute.xlu0 %1177
  %v1180 = vmul.f32 %v1174, %v1178
  %1182 = vrot.lane.b32.xlu0 %v1175, 32
  %v1183 = vpop.permute.xlu0 %1182
  %v1185 = vmul.f32 %v1174, %v1183
  %1187 = vrot.lane.b32.xlu0 %v1185, 32
  %v1188 = vpop.permute.xlu0 %1187
  %v1190 = vadd.f32 %v1180, %v1188
  %v1191 = vtanh.pop %v1190
  %1193 = vrot.lane.b32.xlu0 %v1191, 32
  %v1194 = vpop.permute.xlu0 %1193
  %v1196 = vmul.f32 %v1174, %v1194
  %v1197 = vsel %vm30, 3, 4
  %vm1198 = vcmp.lt.s32.totalorder %v1197, %v793
  %1200 = vrot.lane.b32.xlu0 %v1196, 64
  %v1201 = vpop.permute.xlu0 %1200
  %v1203 = vsel %vm1198, %v1201, %v1119
  %1204 = vst.msk [vmem:[#allocation7] sm:$0xff] %vm45, %v1203
  %1206 = vrot.lane.b32.xlu0 %v1190, 96
  %v1207 = vpop.permute.xlu0 %1206
  %v1209 = vsel %vm1198, %v1207, %v1120
  %1210 = vst.msk [vmem:[#allocation8] sm:$0xff] %vm45, %v1209
  %v1211 = vsel %vm1198, %v1201, 0.0
  %s1212 = scalar_lea.vmem [#allocation5], 32
  %1213 = vst.msk [vmem:[%s1212] sm:$0xff] %vm808, %v1211
  %1215 = vrot.lane.b32.xlu0 %v1211, 112
  %v1216 = vpop.permute.xlu0 %1215
  %s1218 = scalar_lea.vmem [#allocation6], 24
  %1219 = vst.msk [vmem:[%s1218] sm:$0xff] %vm808, %v1216
  %v1220 = vld [vmem:[#allocation7] sm:$0xff]
  %v1221 = vld [vmem:[#allocation8] sm:$0xff]
  %v1222 = vld [vmem:[%s530] sm:$0xff]
  %v1223 = vld [vmem:[%s289] sm:$0xff]
  %v1224 = vadd.f32 %v1222, %v1223
  %v1225 = vpack.c.bf16 %v1220, %v1220
  %v1227 = vsel %vm45, %v1225, 0
  %1229 = vmatprep.subr.bf16.mxu0 0
  %1230 = vmatpush1.bf16.msra.mxu0 %v714
  %1231 = vmatprep.subr.bf16.mxu0 0
  %1232 = vmatpush1.bf16.msra.mxu0 %v715
  %1233 = vmatprep.subr.bf16.mxu0 0
  %1234 = vmatpush1.bf16.msra.mxu0 0
  %1235 = vmatprep.subr.bf16.mxu0 0
  %1236 = vmatpush1.bf16.msra.mxu0 0
  %1237 = vmatprep.subr.bf16.mxu0 0
  %1238 = vmatpush1.bf16.msra.mxu0 0
  %1239 = vmatprep.subr.bf16.mxu0 0
  %1240 = vmatpush1.bf16.msra.mxu0 0
  %1241 = vmatprep.subr.bf16.mxu0 0
  %1242 = vmatpush1.bf16.msra.mxu0 0
  %1243 = vmatprep.subr.bf16.mxu0 0
  %1244 = vmatpush1.bf16.msra.mxu0 0
  %1245 = vmatprep.subr.bf16.mxu0 0
  %1246 = vmatpush1.bf16.msra.mxu0 0
  %1247 = vmatprep.subr.bf16.mxu0 0
  %1248 = vmatpush1.bf16.msra.mxu0 0
  %1249 = vmatprep.subr.bf16.mxu0 0
  %1250 = vmatpush1.bf16.msra.mxu0 0
  %1251 = vmatprep.subr.bf16.mxu0 0
  %1252 = vmatpush1.bf16.msra.mxu0 0
  %1253 = vmatprep.subr.bf16.mxu0 0
  %1254 = vmatpush1.bf16.msra.mxu0 0
  %1255 = vmatprep.subr.bf16.mxu0 0
  %1256 = vmatpush1.bf16.msra.mxu0 0
  %1257 = vmatprep.subr.bf16.mxu0 0
  %1258 = vmatpush1.bf16.msra.mxu0 0
  %1259 = vmatprep.subr.bf16.mxu0 0
  %1260 = vmatpush1.bf16.msra.mxu0 0
  %1261 = vmatprep.mubr.bf16.mxu0 0
  %1262 = vmatmul.mubr.bf16.gmra.mrb[0].mxu0 %v1227
  %v1263 = vpop.f32.mrb[0].mxu0
  %v1264 = vadd.f32 0.0, %v1263
  %v1265 = vpop.f32.mrb[0].mxu0
  %v1266 = vpop.f32.mrb[0].mxu0
  %v1267 = vpop.f32.mrb[0].mxu0
  %1268 = vdwg.mxu0
  %v1269 = vadd.f32 %v1224, %v1264
  %v1270 = vxor.u32 %v1269, 2147483648
  %v1271 = vmul.f32 %v1270, 1.442695
  %v1272 = vpow.pop %v1271
  %v1273 = vadd.f32 %v1272, 1.0
  %v1274 = vrcp.pop %v1273
  %v1275 = vmul.f32 1.0, %v1274
  %v1276 = vtanh.pop %v1269
  %1278 = vrot.lane.b32.xlu0 %v1221, 32
  %v1279 = vpop.permute.xlu0 %1278
  %v1281 = vmul.f32 %v1275, %v1279
  %1283 = vrot.lane.b32.xlu0 %v1276, 32
  %v1284 = vpop.permute.xlu0 %1283
  %v1286 = vmul.f32 %v1275, %v1284
  %1288 = vrot.lane.b32.xlu0 %v1286, 32
  %v1289 = vpop.permute.xlu0 %1288
  %v1291 = vadd.f32 %v1281, %v1289
  %v1292 = vtanh.pop %v1291
  %1294 = vrot.lane.b32.xlu0 %v1292, 32
  %v1295 = vpop.permute.xlu0 %1294
  %v1297 = vmul.f32 %v1275, %v1295
  %v1298 = vsel %vm30, 2, 5
  %vm1299 = vcmp.lt.s32.totalorder %v1298, %v793
  %1301 = vrot.lane.b32.xlu0 %v1297, 64
  %v1302 = vpop.permute.xlu0 %1301
  %v1304 = vsel %vm1299, %v1302, %v1220
  %1305 = vst.msk [vmem:[#allocation7] sm:$0xff] %vm45, %v1304
  %1307 = vrot.lane.b32.xlu0 %v1291, 96
  %v1308 = vpop.permute.xlu0 %1307
  %v1310 = vsel %vm1299, %v1308, %v1221
  %1311 = vst.msk [vmem:[#allocation8] sm:$0xff] %vm45, %v1310
  %v1312 = vsel %vm1299, %v1302, 0.0
  %s1313 = scalar_lea.vmem [#allocation5], 40
  %1314 = vst.msk [vmem:[%s1313] sm:$0xff] %vm808, %v1312
  %1316 = vrot.lane.b32.xlu0 %v1312, 112
  %v1317 = vpop.permute.xlu0 %1316
  %s1319 = scalar_lea.vmem [#allocation6], 16
  %1320 = vst.msk [vmem:[%s1319] sm:$0xff] %vm808, %v1317
  %v1321 = vld [vmem:[#allocation7] sm:$0xff]
  %v1322 = vld [vmem:[#allocation8] sm:$0xff]
  %v1323 = vld [vmem:[%s611] sm:$0xff]
  %v1324 = vld [vmem:[%s208] sm:$0xff]
  %v1325 = vadd.f32 %v1323, %v1324
  %v1326 = vpack.c.bf16 %v1321, %v1321
  %v1328 = vsel %vm45, %v1326, 0
  %1330 = vmatprep.subr.bf16.mxu0 0
  %1331 = vmatpush1.bf16.msra.mxu0 %v714
  %1332 = vmatprep.subr.bf16.mxu0 0
  %1333 = vmatpush1.bf16.msra.mxu0 %v715
  %1334 = vmatprep.subr.bf16.mxu0 0
  %1335 = vmatpush1.bf16.msra.mxu0 0
  %1336 = vmatprep.subr.bf16.mxu0 0
  %1337 = vmatpush1.bf16.msra.mxu0 0
  %1338 = vmatprep.subr.bf16.mxu0 0
  %1339 = vmatpush1.bf16.msra.mxu0 0
  %1340 = vmatprep.subr.bf16.mxu0 0
  %1341 = vmatpush1.bf16.msra.mxu0 0
  %1342 = vmatprep.subr.bf16.mxu0 0
  %1343 = vmatpush1.bf16.msra.mxu0 0
  %1344 = vmatprep.subr.bf16.mxu0 0
  %1345 = vmatpush1.bf16.msra.mxu0 0
  %1346 = vmatprep.subr.bf16.mxu0 0
  %1347 = vmatpush1.bf16.msra.mxu0 0
  %1348 = vmatprep.subr.bf16.mxu0 0
  %1349 = vmatpush1.bf16.msra.mxu0 0
  %1350 = vmatprep.subr.bf16.mxu0 0
  %1351 = vmatpush1.bf16.msra.mxu0 0
  %1352 = vmatprep.subr.bf16.mxu0 0
  %1353 = vmatpush1.bf16.msra.mxu0 0
  %1354 = vmatprep.subr.bf16.mxu0 0
  %1355 = vmatpush1.bf16.msra.mxu0 0
  %1356 = vmatprep.subr.bf16.mxu0 0
  %1357 = vmatpush1.bf16.msra.mxu0 0
  %1358 = vmatprep.subr.bf16.mxu0 0
  %1359 = vmatpush1.bf16.msra.mxu0 0
  %1360 = vmatprep.subr.bf16.mxu0 0
  %1361 = vmatpush1.bf16.msra.mxu0 0
  %1362 = vmatprep.mubr.bf16.mxu0 0
  %1363 = vmatmul.mubr.bf16.gmra.mrb[0].mxu0 %v1328
  %v1364 = vpop.f32.mrb[0].mxu0
  %v1365 = vadd.f32 0.0, %v1364
  %v1366 = vpop.f32.mrb[0].mxu0
  %v1367 = vpop.f32.mrb[0].mxu0
  %v1368 = vpop.f32.mrb[0].mxu0
  %1369 = vdwg.mxu0
  %v1370 = vadd.f32 %v1325, %v1365
  %v1371 = vxor.u32 %v1370, 2147483648
  %v1372 = vmul.f32 %v1371, 1.442695
  %v1373 = vpow.pop %v1372
  %v1374 = vadd.f32 %v1373, 1.0
  %v1375 = vrcp.pop %v1374
  %v1376 = vmul.f32 1.0, %v1375
  %v1377 = vtanh.pop %v1370
  %1379 = vrot.lane.b32.xlu0 %v1322, 32
  %v1380 = vpop.permute.xlu0 %1379
  %v1382 = vmul.f32 %v1376, %v1380
  %1384 = vrot.lane.b32.xlu0 %v1377, 32
  %v1385 = vpop.permute.xlu0 %1384
  %v1387 = vmul.f32 %v1376, %v1385
  %1389 = vrot.lane.b32.xlu0 %v1387, 32
  %v1390 = vpop.permute.xlu0 %1389
  %v1392 = vadd.f32 %v1382, %v1390
  %v1393 = vtanh.pop %v1392
  %1395 = vrot.lane.b32.xlu0 %v1393, 32
  %v1396 = vpop.permute.xlu0 %1395
  %v1398 = vmul.f32 %v1376, %v1396
  %v1399 = vsel %vm30, 1, 6
  %vm1400 = vcmp.lt.s32.totalorder %v1399, %v793
  %1402 = vrot.lane.b32.xlu0 %v1398, 64
  %v1403 = vpop.permute.xlu0 %1402
  %v1405 = vsel %vm1400, %v1403, %v1321
  %1406 = vst.msk [vmem:[#allocation7] sm:$0xff] %vm45, %v1405
  %1408 = vrot.lane.b32.xlu0 %v1392, 96
  %v1409 = vpop.permute.xlu0 %1408
  %v1411 = vsel %vm1400, %v1409, %v1322
  %1412 = vst.msk [vmem:[#allocation8] sm:$0xff] %vm45, %v1411
  %v1413 = vsel %vm1400, %v1403, 0.0
  %s1414 = scalar_lea.vmem [#allocation5], 48
  %1415 = vst.msk [vmem:[%s1414] sm:$0xff] %vm808, %v1413
  %1417 = vrot.lane.b32.xlu0 %v1413, 112
  %v1418 = vpop.permute.xlu0 %1417
  %s1420 = scalar_lea.vmem [#allocation6], 8
  %1421 = vst.msk [vmem:[%s1420] sm:$0xff] %vm808, %v1418
  %v1422 = vld [vmem:[#allocation7] sm:$0xff]
  %v1423 = vld [vmem:[#allocation8] sm:$0xff]
  %v1424 = vld [vmem:[%s692] sm:$0xff]
  %v1425 = vld [vmem:[#allocation3] sm:$0xff]
  %v1426 = vadd.f32 %v1424, %v1425
  %v1427 = vpack.c.bf16 %v1422, %v1422
  %v1429 = vsel %vm45, %v1427, 0
  %1431 = vmatprep.subr.bf16.mxu0 0
  %1432 = vmatpush1.bf16.msra.mxu0 %v714
  %1433 = vmatprep.subr.bf16.mxu0 0
  %1434 = vmatpush1.bf16.msra.mxu0 %v715
  %1435 = vmatprep.subr.bf16.mxu0 0
  %1436 = vmatpush1.bf16.msra.mxu0 0
  %1437 = vmatprep.subr.bf16.mxu0 0
  %1438 = vmatpush1.bf16.msra.mxu0 0
  %1439 = vmatprep.subr.bf16.mxu0 0
  %1440 = vmatpush1.bf16.msra.mxu0 0
  %1441 = vmatprep.subr.bf16.mxu0 0
  %1442 = vmatpush1.bf16.msra.mxu0 0
  %1443 = vmatprep.subr.bf16.mxu0 0
  %1444 = vmatpush1.bf16.msra.mxu0 0
  %1445 = vmatprep.subr.bf16.mxu0 0
  %1446 = vmatpush1.bf16.msra.mxu0 0
  %1447 = vmatprep.subr.bf16.mxu0 0
  %1448 = vmatpush1.bf16.msra.mxu0 0
  %1449 = vmatprep.subr.bf16.mxu0 0
  %1450 = vmatpush1.bf16.msra.mxu0 0
  %1451 = vmatprep.subr.bf16.mxu0 0
  %1452 = vmatpush1.bf16.msra.mxu0 0
  %1453 = vmatprep.subr.bf16.mxu0 0
  %1454 = vmatpush1.bf16.msra.mxu0 0
  %1455 = vmatprep.subr.bf16.mxu0 0
  %1456 = vmatpush1.bf16.msra.mxu0 0
  %1457 = vmatprep.subr.bf16.mxu0 0
  %1458 = vmatpush1.bf16.msra.mxu0 0
  %1459 = vmatprep.subr.bf16.mxu0 0
  %1460 = vmatpush1.bf16.msra.mxu0 0
  %1461 = vmatprep.subr.bf16.mxu0 0
  %1462 = vmatpush1.bf16.msra.mxu0 0
  %1463 = vmatprep.mubr.bf16.mxu0 0
  %1464 = vmatmul.mubr.bf16.gmra.mrb[0].mxu0 %v1429
  %v1465 = vpop.f32.mrb[0].mxu0
  %v1466 = vadd.f32 0.0, %v1465
  %v1467 = vpop.f32.mrb[0].mxu0
  %v1468 = vpop.f32.mrb[0].mxu0
  %v1469 = vpop.f32.mrb[0].mxu0
  %1470 = vdwg.mxu0
  %v1471 = vadd.f32 %v1426, %v1466
  %v1472 = vxor.u32 %v1471, 2147483648
  %v1473 = vmul.f32 %v1472, 1.442695
  %v1474 = vpow.pop %v1473
  %v1475 = vadd.f32 %v1474, 1.0
  %v1476 = vrcp.pop %v1475
  %v1477 = vmul.f32 1.0, %v1476
  %v1478 = vtanh.pop %v1471
  %1480 = vrot.lane.b32.xlu0 %v1423, 32
  %v1481 = vpop.permute.xlu0 %1480
  %v1483 = vmul.f32 %v1477, %v1481
  %1485 = vrot.lane.b32.xlu0 %v1478, 32
  %v1486 = vpop.permute.xlu0 %1485
  %v1488 = vmul.f32 %v1477, %v1486
  %1490 = vrot.lane.b32.xlu0 %v1488, 32
  %v1491 = vpop.permute.xlu0 %1490
  %v1493 = vadd.f32 %v1483, %v1491
  %v1494 = vtanh.pop %v1493
  %1496 = vrot.lane.b32.xlu0 %v1494, 32
  %v1497 = vpop.permute.xlu0 %1496
  %v1499 = vmul.f32 %v1477, %v1497
  %v1500 = vsel %vm30, 0, 7
  %vm1501 = vcmp.lt.s32.totalorder %v1500, %v793
  %1503 = vrot.lane.b32.xlu0 %v1499, 64
  %v1504 = vpop.permute.xlu0 %1503
  %v1506 = vsel %vm1501, %v1504, %v1422
  %1507 = vst.msk [vmem:[#allocation7] sm:$0xff] %vm45, %v1506
  %1509 = vrot.lane.b32.xlu0 %v1493, 96
  %v1510 = vpop.permute.xlu0 %1509
  %v1512 = vsel %vm1501, %v1510, %v1423
  %1513 = vst.msk [vmem:[#allocation8] sm:$0xff] %vm45, %v1512
  %v1514 = vsel %vm1501, %v1504, 0.0
  %s1515 = scalar_lea.vmem [#allocation5], 56
  %1516 = vst.msk [vmem:[%s1515] sm:$0xff] %vm808, %v1514
  %1518 = vrot.lane.b32.xlu0 %v1514, 112
  %v1519 = vpop.permute.xlu0 %1518
  %1521 = vst.msk [vmem:[#allocation6] sm:$0xff] %vm808, %v1519
  %v1522 = vld [vmem:[#allocation5] sm:$0xff]
  %v1523 = vld [vmem:[#allocation5 + $0x8] sm:$0xff]
  %v1524 = vld [vmem:[#allocation5 + $0x10] sm:$0xff]
  %v1525 = vld [vmem:[#allocation5 + $0x18] sm:$0xff]
  %v1526 = vld [vmem:[#allocation5 + $0x20] sm:$0xff]
  %v1527 = vld [vmem:[#allocation5 + $0x28] sm:$0xff]
  %v1528 = vld [vmem:[#allocation5 + $0x30] sm:$0xff]
  %v1529 = vld [vmem:[#allocation5 + $0x38] sm:$0xff]
  %v1530 = vld [vmem:[#allocation6] sm:$0xff]
  %v1531 = vld [vmem:[#allocation6 + $0x8] sm:$0xff]
  %v1532 = vld [vmem:[#allocation6 + $0x10] sm:$0xff]
  %v1533 = vld [vmem:[#allocation6 + $0x18] sm:$0xff]
  %v1534 = vld [vmem:[#allocation6 + $0x20] sm:$0xff]
  %v1535 = vld [vmem:[#allocation6 + $0x28] sm:$0xff]
  %v1536 = vld [vmem:[#allocation6 + $0x30] sm:$0xff]
  %v1537 = vld [vmem:[#allocation6 + $0x38] sm:$0xff]
  %1546 = vrot.lane.b32.xlu0 %v1530, 16
  %v1547 = vpop.permute.xlu0 %1546
  %1548 = vrot.lane.b32.xlu0 %v1531, 16
  %v1549 = vpop.permute.xlu0 %1548
  %1550 = vrot.lane.b32.xlu0 %v1532, 16
  %v1551 = vpop.permute.xlu0 %1550
  %1552 = vrot.lane.b32.xlu0 %v1533, 16
  %v1553 = vpop.permute.xlu0 %1552
  %1554 = vrot.lane.b32.xlu0 %v1534, 16
  %v1555 = vpop.permute.xlu0 %1554
  %1556 = vrot.lane.b32.xlu0 %v1535, 16
  %v1557 = vpop.permute.xlu0 %1556
  %1558 = vrot.lane.b32.xlu0 %v1536, 16
  %v1559 = vpop.permute.xlu0 %1558
  %1560 = vrot.lane.b32.xlu0 %v1537, 16
  %v1561 = vpop.permute.xlu0 %1560
  %v1570 = vsel %vm808, %v1522, %v1547
  %v1571 = vsel %vm808, %v1523, %v1549
  %v1572 = vsel %vm808, %v1524, %v1551
  %v1573 = vsel %vm808, %v1525, %v1553
  %v1574 = vsel %vm808, %v1526, %v1555
  %v1575 = vsel %vm808, %v1527, %v1557
  %v1576 = vsel %vm808, %v1528, %v1559
  %v1577 = vsel %vm808, %v1529, %v1561
  %1578 = vst.msk [vmem:[#allocation4] sm:$0xff] %vm45, %v1570
  %1579 = vst.msk [vmem:[#allocation4 + $0x8] sm:$0xff] %vm45, %v1571
  %1580 = vst.msk [vmem:[#allocation4 + $0x10] sm:$0xff] %vm45, %v1572
  %1581 = vst.msk [vmem:[#allocation4 + $0x18] sm:$0xff] %vm45, %v1573
  %1582 = vst.msk [vmem:[#allocation4 + $0x20] sm:$0xff] %vm45, %v1574
  %1583 = vst.msk [vmem:[#allocation4 + $0x28] sm:$0xff] %vm45, %v1575
  %1584 = vst.msk [vmem:[#allocation4 + $0x30] sm:$0xff] %vm45, %v1576
  %1585 = vst.msk [vmem:[#allocation4 + $0x38] sm:$0xff] %vm45, %v1577
  %s1586 = scalar_lea.vmem %s2, 64
  %v1587 = vld [vmem:[%s1586] sm:$0xff]
  %v1588 = vld [vmem:[%s1586 + $0x8] sm:$0xff]
  %v1589 = vld [vmem:[%s1586 + $0x10] sm:$0xff]
  %v1590 = vld [vmem:[%s1586 + $0x18] sm:$0xff]
  %v1591 = vld [vmem:[%s1586 + $0x20] sm:$0xff]
  %v1592 = vld [vmem:[%s1586 + $0x28] sm:$0xff]
  %v1593 = vld [vmem:[%s1586 + $0x30] sm:$0xff]
  %v1594 = vld [vmem:[%s1586 + $0x38] sm:$0xff]
  %s1595 = scalar_lea.vmem %s3, 1
  %v1596 = vld [vmem:[%s1595] sm:$0x1]
  %s1597 = scalar_lea.vmem %s4, 16
  %v1598 = vld [vmem:[%s1597] sm:$0xf]
  %v1599 = vld [vmem:[%s1597 + $0x4] sm:$0xf]
  %v1600 = vld [vmem:[%s1597 + $0x8] sm:$0xf]
  %v1601 = vld [vmem:[%s1597 + $0xc] sm:$0xf]
  %v1602 = vld [vmem:[#allocation4] sm:$0xff]
  %v1604 = vsel %vm45, %v1602, 0
  %1606 = vmatprep.subr.mxu0 %v1588
  %1607 = vmatpush1.msra.mxu0 %v1587
  %1608 = vmatprep.subr.mxu0 %v1590
  %1609 = vmatpush1.msra.mxu0 %v1589
  %1610 = vmatprep.subr.mxu0 %v1592
  %1611 = vmatpush1.msra.mxu0 %v1591
  %1612 = vmatprep.subr.mxu0 %v1594
  %1613 = vmatpush1.msra.mxu0 %v1593
  %1614 = vmatprep.subr.mxu0 0.0
  %1615 = vmatpush1.msra.mxu0 0.0
  %1616 = vmatprep.subr.mxu0 0.0
  %1617 = vmatpush1.msra.mxu0 0.0
  %1618 = vmatprep.subr.mxu0 0.0
  %1619 = vmatpush1.msra.mxu0 0.0
  %1620 = vmatprep.subr.mxu0 0.0
  %1621 = vmatpush1.msra.mxu0 0.0
  %1622 = vmatprep.subr.mxu0 0.0
  %1623 = vmatpush1.msra.mxu0 0.0
  %1624 = vmatprep.subr.mxu0 0.0
  %1625 = vmatpush1.msra.mxu0 0.0
  %1626 = vmatprep.subr.mxu0 0.0
  %1627 = vmatpush1.msra.mxu0 0.0
  %1628 = vmatprep.subr.mxu0 0.0
  %1629 = vmatpush1.msra.mxu0 0.0
  %1630 = vmatprep.subr.mxu0 0.0
  %1631 = vmatpush1.msra.mxu0 0.0
  %1632 = vmatprep.subr.mxu0 0.0
  %1633 = vmatpush1.msra.mxu0 0.0
  %1634 = vmatprep.subr.mxu0 0.0
  %1635 = vmatpush1.msra.mxu0 0.0
  %1636 = vmatprep.subr.mxu0 0.0
  %1637 = vmatpush1.msra.mxu0 0.0
  %1638 = vmatprep.subr.mxu0 0.0
  %1639 = vmatpush1.msra.mxu0 0.0
  %1640 = vmatprep.subr.mxu0 0.0
  %1641 = vmatpush1.msra.mxu0 0.0
  %1642 = vmatprep.subr.mxu0 0.0
  %1643 = vmatpush1.msra.mxu0 0.0
  %1644 = vmatprep.subr.mxu0 0.0
  %1645 = vmatpush1.msra.mxu0 0.0
  %1646 = vmatprep.subr.mxu0 0.0
  %1647 = vmatpush1.msra.mxu0 0.0
  %1648 = vmatprep.subr.mxu0 0.0
  %1649 = vmatpush1.msra.mxu0 0.0
  %1650 = vmatprep.subr.mxu0 0.0
  %1651 = vmatpush1.msra.mxu0 0.0
  %1652 = vmatprep.subr.mxu0 0.0
  %1653 = vmatpush1.msra.mxu0 0.0
  %1654 = vmatprep.subr.mxu0 0.0
  %1655 = vmatpush1.msra.mxu0 0.0
  %1656 = vmatprep.subr.mxu0 0.0
  %1657 = vmatpush1.msra.mxu0 0.0
  %1658 = vmatprep.subr.mxu0 0.0
  %1659 = vmatpush1.msra.mxu0 0.0
  %1660 = vmatprep.subr.mxu0 0.0
  %1661 = vmatpush1.msra.mxu0 0.0
  %1662 = vmatprep.subr.mxu0 0.0
  %1663 = vmatpush1.msra.mxu0 0.0
  %1664 = vmatprep.subr.mxu0 0.0
  %1665 = vmatpush1.msra.mxu0 0.0
  %1666 = vmatprep.subr.mxu0 0.0
  %1667 = vmatpush1.msra.mxu0 0.0
  %1668 = vmatprep.subr.mxu0 0.0
  %1669 = vmatpush1.msra.mxu0 0.0
  %1670 = vmatprep.mubr.f32.mxu0 0.0
  %1671 = vmatmul.mubr.f32.gmra.mrb[0].mxu0 %v1604
  %v1672 = vpop.f32.mrb[0].mxu0
  %v1673 = vadd.f32 0.0, %v1672
  %v1674 = vpop.f32.mrb[0].mxu0
  %v1675 = vadd.f32 0.0, %v1674
  %1676 = vdwg.mxu0
  %v1678 = vlaneseq
  %v1679 = vshrl.u32 %v1678, 7
  %v1680 = vsub.s32 0, %v1679
  %v1681 = vrot.slane %v1596, %v1680
  %v1683 = vadd.f32 %v1673, %v1681
  %1684 = vst [vmem:[#allocation2] sm:$0xff] %v1683
  %1685 = vst [vmem:[#allocation3] sm:$0xff] %v1675
  %s1686 = scalar_lea.vmem [#allocation4], 8
  %v1687 = vld [vmem:[%s1686] sm:$0xff]
  %v1689 = vsel %vm45, %v1687, 0
  %1691 = vmatprep.subr.mxu0 %v1588
  %1692 = vmatpush1.msra.mxu0 %v1587
  %1693 = vmatprep.subr.mxu0 %v1590
  %1694 = vmatpush1.msra.mxu0 %v1589
  %1695 = vmatprep.subr.mxu0 %v1592
  %1696 = vmatpush1.msra.mxu0 %v1591
  %1697 = vmatprep.subr.mxu0 %v1594
  %1698 = vmatpush1.msra.mxu0 %v1593
  %1699 = vmatprep.subr.mxu0 0.0
  %1700 = vmatpush1.msra.mxu0 0.0
  %1701 = vmatprep.subr.mxu0 0.0
  %1702 = vmatpush1.msra.mxu0 0.0
  %1703 = vmatprep.subr.mxu0 0.0
  %1704 = vmatpush1.msra.mxu0 0.0
  %1705 = vmatprep.subr.mxu0 0.0
  %1706 = vmatpush1.msra.mxu0 0.0
  %1707 = vmatprep.subr.mxu0 0.0
  %1708 = vmatpush1.msra.mxu0 0.0
  %1709 = vmatprep.subr.mxu0 0.0
  %1710 = vmatpush1.msra.mxu0 0.0
  %1711 = vmatprep.subr.mxu0 0.0
  %1712 = vmatpush1.msra.mxu0 0.0
  %1713 = vmatprep.subr.mxu0 0.0
  %1714 = vmatpush1.msra.mxu0 0.0
  %1715 = vmatprep.subr.mxu0 0.0
  %1716 = vmatpush1.msra.mxu0 0.0
  %1717 = vmatprep.subr.mxu0 0.0
  %1718 = vmatpush1.msra.mxu0 0.0
  %1719 = vmatprep.subr.mxu0 0.0
  %1720 = vmatpush1.msra.mxu0 0.0
  %1721 = vmatprep.subr.mxu0 0.0
  %1722 = vmatpush1.msra.mxu0 0.0
  %1723 = vmatprep.subr.mxu0 0.0
  %1724 = vmatpush1.msra.mxu0 0.0
  %1725 = vmatprep.subr.mxu0 0.0
  %1726 = vmatpush1.msra.mxu0 0.0
  %1727 = vmatprep.subr.mxu0 0.0
  %1728 = vmatpush1.msra.mxu0 0.0
  %1729 = vmatprep.subr.mxu0 0.0
  %1730 = vmatpush1.msra.mxu0 0.0
  %1731 = vmatprep.subr.mxu0 0.0
  %1732 = vmatpush1.msra.mxu0 0.0
  %1733 = vmatprep.subr.mxu0 0.0
  %1734 = vmatpush1.msra.mxu0 0.0
  %1735 = vmatprep.subr.mxu0 0.0
  %1736 = vmatpush1.msra.mxu0 0.0
  %1737 = vmatprep.subr.mxu0 0.0
  %1738 = vmatpush1.msra.mxu0 0.0
  %1739 = vmatprep.subr.mxu0 0.0
  %1740 = vmatpush1.msra.mxu0 0.0
  %1741 = vmatprep.subr.mxu0 0.0
  %1742 = vmatpush1.msra.mxu0 0.0
  %1743 = vmatprep.subr.mxu0 0.0
  %1744 = vmatpush1.msra.mxu0 0.0
  %1745 = vmatprep.subr.mxu0 0.0
  %1746 = vmatpush1.msra.mxu0 0.0
  %1747 = vmatprep.subr.mxu0 0.0
  %1748 = vmatpush1.msra.mxu0 0.0
  %1749 = vmatprep.subr.mxu0 0.0
  %1750 = vmatpush1.msra.mxu0 0.0
  %1751 = vmatprep.subr.mxu0 0.0
  %1752 = vmatpush1.msra.mxu0 0.0
  %1753 = vmatprep.subr.mxu0 0.0
  %1754 = vmatpush1.msra.mxu0 0.0
  %1755 = vmatprep.mubr.f32.mxu0 0.0
  %1756 = vmatmul.mubr.f32.gmra.mrb[0].mxu0 %v1689
  %v1757 = vpop.f32.mrb[0].mxu0
  %v1758 = vadd.f32 0.0, %v1757
  %v1759 = vpop.f32.mrb[0].mxu0
  %v1760 = vadd.f32 0.0, %v1759
  %1761 = vdwg.mxu0
  %v1762 = vadd.f32 %v1758, %v1681
  %1763 = vst [vmem:[%s206] sm:$0xff] %v1762
  %1764 = vst [vmem:[%s208] sm:$0xff] %v1760
  %s1765 = scalar_lea.vmem [#allocation4], 16
  %v1766 = vld [vmem:[%s1765] sm:$0xff]
  %v1768 = vsel %vm45, %v1766, 0
  %1770 = vmatprep.subr.mxu0 %v1588
  %1771 = vmatpush1.msra.mxu0 %v1587
  %1772 = vmatprep.subr.mxu0 %v1590
  %1773 = vmatpush1.msra.mxu0 %v1589
  %1774 = vmatprep.subr.mxu0 %v1592
  %1775 = vmatpush1.msra.mxu0 %v1591
  %1776 = vmatprep.subr.mxu0 %v1594
  %1777 = vmatpush1.msra.mxu0 %v1593
  %1778 = vmatprep.subr.mxu0 0.0
  %1779 = vmatpush1.msra.mxu0 0.0
  %1780 = vmatprep.subr.mxu0 0.0
  %1781 = vmatpush1.msra.mxu0 0.0
  %1782 = vmatprep.subr.mxu0 0.0
  %1783 = vmatpush1.msra.mxu0 0.0
  %1784 = vmatprep.subr.mxu0 0.0
  %1785 = vmatpush1.msra.mxu0 0.0
  %1786 = vmatprep.subr.mxu0 0.0
  %1787 = vmatpush1.msra.mxu0 0.0
  %1788 = vmatprep.subr.mxu0 0.0
  %1789 = vmatpush1.msra.mxu0 0.0
  %1790 = vmatprep.subr.mxu0 0.0
  %1791 = vmatpush1.msra.mxu0 0.0
  %1792 = vmatprep.subr.mxu0 0.0
  %1793 = vmatpush1.msra.mxu0 0.0
  %1794 = vmatprep.subr.mxu0 0.0
  %1795 = vmatpush1.msra.mxu0 0.0
  %1796 = vmatprep.subr.mxu0 0.0
  %1797 = vmatpush1.msra.mxu0 0.0
  %1798 = vmatprep.subr.mxu0 0.0
  %1799 = vmatpush1.msra.mxu0 0.0
  %1800 = vmatprep.subr.mxu0 0.0
  %1801 = vmatpush1.msra.mxu0 0.0
  %1802 = vmatprep.subr.mxu0 0.0
  %1803 = vmatpush1.msra.mxu0 0.0
  %1804 = vmatprep.subr.mxu0 0.0
  %1805 = vmatpush1.msra.mxu0 0.0
  %1806 = vmatprep.subr.mxu0 0.0
  %1807 = vmatpush1.msra.mxu0 0.0
  %1808 = vmatprep.subr.mxu0 0.0
  %1809 = vmatpush1.msra.mxu0 0.0
  %1810 = vmatprep.subr.mxu0 0.0
  %1811 = vmatpush1.msra.mxu0 0.0
  %1812 = vmatprep.subr.mxu0 0.0
  %1813 = vmatpush1.msra.mxu0 0.0
  %1814 = vmatprep.subr.mxu0 0.0
  %1815 = vmatpush1.msra.mxu0 0.0
  %1816 = vmatprep.subr.mxu0 0.0
  %1817 = vmatpush1.msra.mxu0 0.0
  %1818 = vmatprep.subr.mxu0 0.0
  %1819 = vmatpush1.msra.mxu0 0.0
  %1820 = vmatprep.subr.mxu0 0.0
  %1821 = vmatpush1.msra.mxu0 0.0
  %1822 = vmatprep.subr.mxu0 0.0
  %1823 = vmatpush1.msra.mxu0 0.0
  %1824 = vmatprep.subr.mxu0 0.0
  %1825 = vmatpush1.msra.mxu0 0.0
  %1826 = vmatprep.subr.mxu0 0.0
  %1827 = vmatpush1.msra.mxu0 0.0
  %1828 = vmatprep.subr.mxu0 0.0
  %1829 = vmatpush1.msra.mxu0 0.0
  %1830 = vmatprep.subr.mxu0 0.0
  %1831 = vmatpush1.msra.mxu0 0.0
  %1832 = vmatprep.subr.mxu0 0.0
  %1833 = vmatpush1.msra.mxu0 0.0
  %1834 = vmatprep.mubr.f32.mxu0 0.0
  %1835 = vmatmul.mubr.f32.gmra.mrb[0].mxu0 %v1768
  %v1836 = vpop.f32.mrb[0].mxu0
  %v1837 = vadd.f32 0.0, %v1836
  %v1838 = vpop.f32.mrb[0].mxu0
  %v1839 = vadd.f32 0.0, %v1838
  %1840 = vdwg.mxu0
  %v1841 = vadd.f32 %v1837, %v1681
  %1842 = vst [vmem:[%s287] sm:$0xff] %v1841
  %1843 = vst [vmem:[%s289] sm:$0xff] %v1839
  %s1844 = scalar_lea.vmem [#allocation4], 24
  %v1845 = vld [vmem:[%s1844] sm:$0xff]
  %v1847 = vsel %vm45, %v1845, 0
  %1849 = vmatprep.subr.mxu0 %v1588
  %1850 = vmatpush1.msra.mxu0 %v1587
  %1851 = vmatprep.subr.mxu0 %v1590
  %1852 = vmatpush1.msra.mxu0 %v1589
  %1853 = vmatprep.subr.mxu0 %v1592
  %1854 = vmatpush1.msra.mxu0 %v1591
  %1855 = vmatprep.subr.mxu0 %v1594
  %1856 = vmatpush1.msra.mxu0 %v1593
  %1857 = vmatprep.subr.mxu0 0.0
  %1858 = vmatpush1.msra.mxu0 0.0
  %1859 = vmatprep.subr.mxu0 0.0
  %1860 = vmatpush1.msra.mxu0 0.0
  %1861 = vmatprep.subr.mxu0 0.0
  %1862 = vmatpush1.msra.mxu0 0.0
  %1863 = vmatprep.subr.mxu0 0.0
  %1864 = vmatpush1.msra.mxu0 0.0
  %1865 = vmatprep.subr.mxu0 0.0
  %1866 = vmatpush1.msra.mxu0 0.0
  %1867 = vmatprep.subr.mxu0 0.0
  %1868 = vmatpush1.msra.mxu0 0.0
  %1869 = vmatprep.subr.mxu0 0.0
  %1870 = vmatpush1.msra.mxu0 0.0
  %1871 = vmatprep.subr.mxu0 0.0
  %1872 = vmatpush1.msra.mxu0 0.0
  %1873 = vmatprep.subr.mxu0 0.0
  %1874 = vmatpush1.msra.mxu0 0.0
  %1875 = vmatprep.subr.mxu0 0.0
  %1876 = vmatpush1.msra.mxu0 0.0
  %1877 = vmatprep.subr.mxu0 0.0
  %1878 = vmatpush1.msra.mxu0 0.0
  %1879 = vmatprep.subr.mxu0 0.0
  %1880 = vmatpush1.msra.mxu0 0.0
  %1881 = vmatprep.subr.mxu0 0.0
  %1882 = vmatpush1.msra.mxu0 0.0
  %1883 = vmatprep.subr.mxu0 0.0
  %1884 = vmatpush1.msra.mxu0 0.0
  %1885 = vmatprep.subr.mxu0 0.0
  %1886 = vmatpush1.msra.mxu0 0.0
  %1887 = vmatprep.subr.mxu0 0.0
  %1888 = vmatpush1.msra.mxu0 0.0
  %1889 = vmatprep.subr.mxu0 0.0
  %1890 = vmatpush1.msra.mxu0 0.0
  %1891 = vmatprep.subr.mxu0 0.0
  %1892 = vmatpush1.msra.mxu0 0.0
  %1893 = vmatprep.subr.mxu0 0.0
  %1894 = vmatpush1.msra.mxu0 0.0
  %1895 = vmatprep.subr.mxu0 0.0
  %1896 = vmatpush1.msra.mxu0 0.0
  %1897 = vmatprep.subr.mxu0 0.0
  %1898 = vmatpush1.msra.mxu0 0.0
  %1899 = vmatprep.subr.mxu0 0.0
  %1900 = vmatpush1.msra.mxu0 0.0
  %1901 = vmatprep.subr.mxu0 0.0
  %1902 = vmatpush1.msra.mxu0 0.0
  %1903 = vmatprep.subr.mxu0 0.0
  %1904 = vmatpush1.msra.mxu0 0.0
  %1905 = vmatprep.subr.mxu0 0.0
  %1906 = vmatpush1.msra.mxu0 0.0
  %1907 = vmatprep.subr.mxu0 0.0
  %1908 = vmatpush1.msra.mxu0 0.0
  %1909 = vmatprep.subr.mxu0 0.0
  %1910 = vmatpush1.msra.mxu0 0.0
  %1911 = vmatprep.subr.mxu0 0.0
  %1912 = vmatpush1.msra.mxu0 0.0
  %1913 = vmatprep.mubr.f32.mxu0 0.0
  %1914 = vmatmul.mubr.f32.gmra.mrb[0].mxu0 %v1847
  %v1915 = vpop.f32.mrb[0].mxu0
  %v1916 = vadd.f32 0.0, %v1915
  %v1917 = vpop.f32.mrb[0].mxu0
  %v1918 = vadd.f32 0.0, %v1917
  %1919 = vdwg.mxu0
  %v1920 = vadd.f32 %v1916, %v1681
  %1921 = vst [vmem:[%s368] sm:$0xff] %v1920
  %1922 = vst [vmem:[%s370] sm:$0xff] %v1918
  %s1923 = scalar_lea.vmem [#allocation4], 32
  %v1924 = vld [vmem:[%s1923] sm:$0xff]
  %v1926 = vsel %vm45, %v1924, 0
  %1928 = vmatprep.subr.mxu0 %v1588
  %1929 = vmatpush1.msra.mxu0 %v1587
  %1930 = vmatprep.subr.mxu0 %v1590
  %1931 = vmatpush1.msra.mxu0 %v1589
  %1932 = vmatprep.subr.mxu0 %v1592
  %1933 = vmatpush1.msra.mxu0 %v1591
  %1934 = vmatprep.subr.mxu0 %v1594
  %1935 = vmatpush1.msra.mxu0 %v1593
  %1936 = vmatprep.subr.mxu0 0.0
  %1937 = vmatpush1.msra.mxu0 0.0
  %1938 = vmatprep.subr.mxu0 0.0
  %1939 = vmatpush1.msra.mxu0 0.0
  %1940 = vmatprep.subr.mxu0 0.0
  %1941 = vmatpush1.msra.mxu0 0.0
  %1942 = vmatprep.subr.mxu0 0.0
  %1943 = vmatpush1.msra.mxu0 0.0
  %1944 = vmatprep.subr.mxu0 0.0
  %1945 = vmatpush1.msra.mxu0 0.0
  %1946 = vmatprep.subr.mxu0 0.0
  %1947 = vmatpush1.msra.mxu0 0.0
  %1948 = vmatprep.subr.mxu0 0.0
  %1949 = vmatpush1.msra.mxu0 0.0
  %1950 = vmatprep.subr.mxu0 0.0
  %1951 = vmatpush1.msra.mxu0 0.0
  %1952 = vmatprep.subr.mxu0 0.0
  %1953 = vmatpush1.msra.mxu0 0.0
  %1954 = vmatprep.subr.mxu0 0.0
  %1955 = vmatpush1.msra.mxu0 0.0
  %1956 = vmatprep.subr.mxu0 0.0
  %1957 = vmatpush1.msra.mxu0 0.0
  %1958 = vmatprep.subr.mxu0 0.0
  %1959 = vmatpush1.msra.mxu0 0.0
  %1960 = vmatprep.subr.mxu0 0.0
  %1961 = vmatpush1.msra.mxu0 0.0
  %1962 = vmatprep.subr.mxu0 0.0
  %1963 = vmatpush1.msra.mxu0 0.0
  %1964 = vmatprep.subr.mxu0 0.0
  %1965 = vmatpush1.msra.mxu0 0.0
  %1966 = vmatprep.subr.mxu0 0.0
  %1967 = vmatpush1.msra.mxu0 0.0
  %1968 = vmatprep.subr.mxu0 0.0
  %1969 = vmatpush1.msra.mxu0 0.0
  %1970 = vmatprep.subr.mxu0 0.0
  %1971 = vmatpush1.msra.mxu0 0.0
  %1972 = vmatprep.subr.mxu0 0.0
  %1973 = vmatpush1.msra.mxu0 0.0
  %1974 = vmatprep.subr.mxu0 0.0
  %1975 = vmatpush1.msra.mxu0 0.0
  %1976 = vmatprep.subr.mxu0 0.0
  %1977 = vmatpush1.msra.mxu0 0.0
  %1978 = vmatprep.subr.mxu0 0.0
  %1979 = vmatpush1.msra.mxu0 0.0
  %1980 = vmatprep.subr.mxu0 0.0
  %1981 = vmatpush1.msra.mxu0 0.0
  %1982 = vmatprep.subr.mxu0 0.0
  %1983 = vmatpush1.msra.mxu0 0.0
  %1984 = vmatprep.subr.mxu0 0.0
  %1985 = vmatpush1.msra.mxu0 0.0
  %1986 = vmatprep.subr.mxu0 0.0
  %1987 = vmatpush1.msra.mxu0 0.0
  %1988 = vmatprep.subr.mxu0 0.0
  %1989 = vmatpush1.msra.mxu0 0.0
  %1990 = vmatprep.subr.mxu0 0.0
  %1991 = vmatpush1.msra.mxu0 0.0
  %1992 = vmatprep.mubr.f32.mxu0 0.0
  %1993 = vmatmul.mubr.f32.gmra.mrb[0].mxu0 %v1926
  %v1994 = vpop.f32.mrb[0].mxu0
  %v1995 = vadd.f32 0.0, %v1994
  %v1996 = vpop.f32.mrb[0].mxu0
  %v1997 = vadd.f32 0.0, %v1996
  %1998 = vdwg.mxu0
  %v1999 = vadd.f32 %v1995, %v1681
  %2000 = vst [vmem:[%s449] sm:$0xff] %v1999
  %2001 = vst [vmem:[%s451] sm:$0xff] %v1997
  %s2002 = scalar_lea.vmem [#allocation4], 40
  %v2003 = vld [vmem:[%s2002] sm:$0xff]
  %v2005 = vsel %vm45, %v2003, 0
  %2007 = vmatprep.subr.mxu0 %v1588
  %2008 = vmatpush1.msra.mxu0 %v1587
  %2009 = vmatprep.subr.mxu0 %v1590
  %2010 = vmatpush1.msra.mxu0 %v1589
  %2011 = vmatprep.subr.mxu0 %v1592
  %2012 = vmatpush1.msra.mxu0 %v1591
  %2013 = vmatprep.subr.mxu0 %v1594
  %2014 = vmatpush1.msra.mxu0 %v1593
  %2015 = vmatprep.subr.mxu0 0.0
  %2016 = vmatpush1.msra.mxu0 0.0
  %2017 = vmatprep.subr.mxu0 0.0
  %2018 = vmatpush1.msra.mxu0 0.0
  %2019 = vmatprep.subr.mxu0 0.0
  %2020 = vmatpush1.msra.mxu0 0.0
  %2021 = vmatprep.subr.mxu0 0.0
  %2022 = vmatpush1.msra.mxu0 0.0
  %2023 = vmatprep.subr.mxu0 0.0
  %2024 = vmatpush1.msra.mxu0 0.0
  %2025 = vmatprep.subr.mxu0 0.0
  %2026 = vmatpush1.msra.mxu0 0.0
  %2027 = vmatprep.subr.mxu0 0.0
  %2028 = vmatpush1.msra.mxu0 0.0
  %2029 = vmatprep.subr.mxu0 0.0
  %2030 = vmatpush1.msra.mxu0 0.0
  %2031 = vmatprep.subr.mxu0 0.0
  %2032 = vmatpush1.msra.mxu0 0.0
  %2033 = vmatprep.subr.mxu0 0.0
  %2034 = vmatpush1.msra.mxu0 0.0
  %2035 = vmatprep.subr.mxu0 0.0
  %2036 = vmatpush1.msra.mxu0 0.0
  %2037 = vmatprep.subr.mxu0 0.0
  %2038 = vmatpush1.msra.mxu0 0.0
  %2039 = vmatprep.subr.mxu0 0.0
  %2040 = vmatpush1.msra.mxu0 0.0
  %2041 = vmatprep.subr.mxu0 0.0
  %2042 = vmatpush1.msra.mxu0 0.0
  %2043 = vmatprep.subr.mxu0 0.0
  %2044 = vmatpush1.msra.mxu0 0.0
  %2045 = vmatprep.subr.mxu0 0.0
  %2046 = vmatpush1.msra.mxu0 0.0
  %2047 = vmatprep.subr.mxu0 0.0
  %2048 = vmatpush1.msra.mxu0 0.0
  %2049 = vmatprep.subr.mxu0 0.0
  %2050 = vmatpush1.msra.mxu0 0.0
  %2051 = vmatprep.subr.mxu0 0.0
  %2052 = vmatpush1.msra.mxu0 0.0
  %2053 = vmatprep.subr.mxu0 0.0
  %2054 = vmatpush1.msra.mxu0 0.0
  %2055 = vmatprep.subr.mxu0 0.0
  %2056 = vmatpush1.msra.mxu0 0.0
  %2057 = vmatprep.subr.mxu0 0.0
  %2058 = vmatpush1.msra.mxu0 0.0
  %2059 = vmatprep.subr.mxu0 0.0
  %2060 = vmatpush1.msra.mxu0 0.0
  %2061 = vmatprep.subr.mxu0 0.0
  %2062 = vmatpush1.msra.mxu0 0.0
  %2063 = vmatprep.subr.mxu0 0.0
  %2064 = vmatpush1.msra.mxu0 0.0
  %2065 = vmatprep.subr.mxu0 0.0
  %2066 = vmatpush1.msra.mxu0 0.0
  %2067 = vmatprep.subr.mxu0 0.0
  %2068 = vmatpush1.msra.mxu0 0.0
  %2069 = vmatprep.subr.mxu0 0.0
  %2070 = vmatpush1.msra.mxu0 0.0
  %2071 = vmatprep.mubr.f32.mxu0 0.0
  %2072 = vmatmul.mubr.f32.gmra.mrb[0].mxu0 %v2005
  %v2073 = vpop.f32.mrb[0].mxu0
  %v2074 = vadd.f32 0.0, %v2073
  %v2075 = vpop.f32.mrb[0].mxu0
  %v2076 = vadd.f32 0.0, %v2075
  %2077 = vdwg.mxu0
  %v2078 = vadd.f32 %v2074, %v1681
  %2079 = vst [vmem:[%s530] sm:$0xff] %v2078
  %2080 = vst [vmem:[%s532] sm:$0xff] %v2076
  %s2081 = scalar_lea.vmem [#allocation4], 48
  %v2082 = vld [vmem:[%s2081] sm:$0xff]
  %v2084 = vsel %vm45, %v2082, 0
  %2086 = vmatprep.subr.mxu0 %v1588
  %2087 = vmatpush1.msra.mxu0 %v1587
  %2088 = vmatprep.subr.mxu0 %v1590
  %2089 = vmatpush1.msra.mxu0 %v1589
  %2090 = vmatprep.subr.mxu0 %v1592
  %2091 = vmatpush1.msra.mxu0 %v1591
  %2092 = vmatprep.subr.mxu0 %v1594
  %2093 = vmatpush1.msra.mxu0 %v1593
  %2094 = vmatprep.subr.mxu0 0.0
  %2095 = vmatpush1.msra.mxu0 0.0
  %2096 = vmatprep.subr.mxu0 0.0
  %2097 = vmatpush1.msra.mxu0 0.0
  %2098 = vmatprep.subr.mxu0 0.0
  %2099 = vmatpush1.msra.mxu0 0.0
  %2100 = vmatprep.subr.mxu0 0.0
  %2101 = vmatpush1.msra.mxu0 0.0
  %2102 = vmatprep.subr.mxu0 0.0
  %2103 = vmatpush1.msra.mxu0 0.0
  %2104 = vmatprep.subr.mxu0 0.0
  %2105 = vmatpush1.msra.mxu0 0.0
  %2106 = vmatprep.subr.mxu0 0.0
  %2107 = vmatpush1.msra.mxu0 0.0
  %2108 = vmatprep.subr.mxu0 0.0
  %2109 = vmatpush1.msra.mxu0 0.0
  %2110 = vmatprep.subr.mxu0 0.0
  %2111 = vmatpush1.msra.mxu0 0.0
  %2112 = vmatprep.subr.mxu0 0.0
  %2113 = vmatpush1.msra.mxu0 0.0
  %2114 = vmatprep.subr.mxu0 0.0
  %2115 = vmatpush1.msra.mxu0 0.0
  %2116 = vmatprep.subr.mxu0 0.0
  %2117 = vmatpush1.msra.mxu0 0.0
  %2118 = vmatprep.subr.mxu0 0.0
  %2119 = vmatpush1.msra.mxu0 0.0
  %2120 = vmatprep.subr.mxu0 0.0
  %2121 = vmatpush1.msra.mxu0 0.0
  %2122 = vmatprep.subr.mxu0 0.0
  %2123 = vmatpush1.msra.mxu0 0.0
  %2124 = vmatprep.subr.mxu0 0.0
  %2125 = vmatpush1.msra.mxu0 0.0
  %2126 = vmatprep.subr.mxu0 0.0
  %2127 = vmatpush1.msra.mxu0 0.0
  %2128 = vmatprep.subr.mxu0 0.0
  %2129 = vmatpush1.msra.mxu0 0.0
  %2130 = vmatprep.subr.mxu0 0.0
  %2131 = vmatpush1.msra.mxu0 0.0
  %2132 = vmatprep.subr.mxu0 0.0
  %2133 = vmatpush1.msra.mxu0 0.0
  %2134 = vmatprep.subr.mxu0 0.0
  %2135 = vmatpush1.msra.mxu0 0.0
  %2136 = vmatprep.subr.mxu0 0.0
  %2137 = vmatpush1.msra.mxu0 0.0
  %2138 = vmatprep.subr.mxu0 0.0
  %2139 = vmatpush1.msra.mxu0 0.0
  %2140 = vmatprep.subr.mxu0 0.0
  %2141 = vmatpush1.msra.mxu0 0.0
  %2142 = vmatprep.subr.mxu0 0.0
  %2143 = vmatpush1.msra.mxu0 0.0
  %2144 = vmatprep.subr.mxu0 0.0
  %2145 = vmatpush1.msra.mxu0 0.0
  %2146 = vmatprep.subr.mxu0 0.0
  %2147 = vmatpush1.msra.mxu0 0.0
  %2148 = vmatprep.subr.mxu0 0.0
  %2149 = vmatpush1.msra.mxu0 0.0
  %2150 = vmatprep.mubr.f32.mxu0 0.0
  %2151 = vmatmul.mubr.f32.gmra.mrb[0].mxu0 %v2084
  %v2152 = vpop.f32.mrb[0].mxu0
  %v2153 = vadd.f32 0.0, %v2152
  %v2154 = vpop.f32.mrb[0].mxu0
  %v2155 = vadd.f32 0.0, %v2154
  %2156 = vdwg.mxu0
  %v2157 = vadd.f32 %v2153, %v1681
  %2158 = vst [vmem:[%s611] sm:$0xff] %v2157
  %2159 = vst [vmem:[%s613] sm:$0xff] %v2155
  %s2160 = scalar_lea.vmem [#allocation4], 56
  %v2161 = vld [vmem:[%s2160] sm:$0xff]
  %v2163 = vsel %vm45, %v2161, 0
  %2165 = vmatprep.subr.mxu0 %v1588
  %2166 = vmatpush1.msra.mxu0 %v1587
  %2167 = vmatprep.subr.mxu0 %v1590
  %2168 = vmatpush1.msra.mxu0 %v1589
  %2169 = vmatprep.subr.mxu0 %v1592
  %2170 = vmatpush1.msra.mxu0 %v1591
  %2171 = vmatprep.subr.mxu0 %v1594
  %2172 = vmatpush1.msra.mxu0 %v1593
  %2173 = vmatprep.subr.mxu0 0.0
  %2174 = vmatpush1.msra.mxu0 0.0
  %2175 = vmatprep.subr.mxu0 0.0
  %2176 = vmatpush1.msra.mxu0 0.0
  %2177 = vmatprep.subr.mxu0 0.0
  %2178 = vmatpush1.msra.mxu0 0.0
  %2179 = vmatprep.subr.mxu0 0.0
  %2180 = vmatpush1.msra.mxu0 0.0
  %2181 = vmatprep.subr.mxu0 0.0
  %2182 = vmatpush1.msra.mxu0 0.0
  %2183 = vmatprep.subr.mxu0 0.0
  %2184 = vmatpush1.msra.mxu0 0.0
  %2185 = vmatprep.subr.mxu0 0.0
  %2186 = vmatpush1.msra.mxu0 0.0
  %2187 = vmatprep.subr.mxu0 0.0
  %2188 = vmatpush1.msra.mxu0 0.0
  %2189 = vmatprep.subr.mxu0 0.0
  %2190 = vmatpush1.msra.mxu0 0.0
  %2191 = vmatprep.subr.mxu0 0.0
  %2192 = vmatpush1.msra.mxu0 0.0
  %2193 = vmatprep.subr.mxu0 0.0
  %2194 = vmatpush1.msra.mxu0 0.0
  %2195 = vmatprep.subr.mxu0 0.0
  %2196 = vmatpush1.msra.mxu0 0.0
  %2197 = vmatprep.subr.mxu0 0.0
  %2198 = vmatpush1.msra.mxu0 0.0
  %2199 = vmatprep.subr.mxu0 0.0
  %2200 = vmatpush1.msra.mxu0 0.0
  %2201 = vmatprep.subr.mxu0 0.0
  %2202 = vmatpush1.msra.mxu0 0.0
  %2203 = vmatprep.subr.mxu0 0.0
  %2204 = vmatpush1.msra.mxu0 0.0
  %2205 = vmatprep.subr.mxu0 0.0
  %2206 = vmatpush1.msra.mxu0 0.0
  %2207 = vmatprep.subr.mxu0 0.0
  %2208 = vmatpush1.msra.mxu0 0.0
  %2209 = vmatprep.subr.mxu0 0.0
  %2210 = vmatpush1.msra.mxu0 0.0
  %2211 = vmatprep.subr.mxu0 0.0
  %2212 = vmatpush1.msra.mxu0 0.0
  %2213 = vmatprep.subr.mxu0 0.0
  %2214 = vmatpush1.msra.mxu0 0.0
  %2215 = vmatprep.subr.mxu0 0.0
  %2216 = vmatpush1.msra.mxu0 0.0
  %2217 = vmatprep.subr.mxu0 0.0
  %2218 = vmatpush1.msra.mxu0 0.0
  %2219 = vmatprep.subr.mxu0 0.0
  %2220 = vmatpush1.msra.mxu0 0.0
  %2221 = vmatprep.subr.mxu0 0.0
  %2222 = vmatpush1.msra.mxu0 0.0
  %2223 = vmatprep.subr.mxu0 0.0
  %2224 = vmatpush1.msra.mxu0 0.0
  %2225 = vmatprep.subr.mxu0 0.0
  %2226 = vmatpush1.msra.mxu0 0.0
  %2227 = vmatprep.subr.mxu0 0.0
  %2228 = vmatpush1.msra.mxu0 0.0
  %2229 = vmatprep.mubr.f32.mxu0 0.0
  %2230 = vmatmul.mubr.f32.gmra.mrb[0].mxu0 %v2163
  %v2231 = vpop.f32.mrb[0].mxu0
  %v2232 = vadd.f32 0.0, %v2231
  %v2233 = vpop.f32.mrb[0].mxu0
  %v2234 = vadd.f32 0.0, %v2233
  %2235 = vdwg.mxu0
  %v2236 = vadd.f32 %v2232, %v1681
  %2237 = vst [vmem:[%s692] sm:$0xff] %v2236
  %2238 = vst [vmem:[%s694] sm:$0xff] %v2234
  %s2239 = scalar_lea.vmem %s5, 8
  %v2240 = vld [vmem:[%s2239] sm:$0xff]
  %2241 = vst.msk [vmem:[#allocation7] sm:$0xff] %vm45, %v2240
  %s2242 = scalar_lea.vmem %s6, 8
  %v2243 = vld [vmem:[%s2242] sm:$0xff]
  %2244 = vst.msk [vmem:[#allocation8] sm:$0xff] %vm45, %v2243
  %v2245 = vld [vmem:[#allocation7] sm:$0xff]
  %v2246 = vld [vmem:[#allocation8] sm:$0xff]
  %v2247 = vld [vmem:[#allocation2] sm:$0xff]
  %v2248 = vld [vmem:[%s694] sm:$0xff]
  %v2249 = vadd.f32 %v2247, %v2248
  %v2250 = vpack.c.bf16 %v2245, %v2245
  %v2255 = vunpack.c.l.b16 %v1598
  %v2256 = vunpack.c.l.b16 %v1599
  %v2257 = vunpack.c.l.b16 %v1600
  %v2258 = vunpack.c.l.b16 %v1601
  %v2259 = vpack.c.b16 %v2256, %v2255
  %v2260 = vpack.c.b16 %v2258, %v2257
  %v2264 = vsel %vm45, %v2250, 0
  %2266 = vmatprep.subr.bf16.mxu0 0
  %2267 = vmatpush1.bf16.msra.mxu0 %v2259
  %2268 = vmatprep.subr.bf16.mxu0 0
  %2269 = vmatpush1.bf16.msra.mxu0 %v2260
  %2270 = vmatprep.subr.bf16.mxu0 0
  %2271 = vmatpush1.bf16.msra.mxu0 0
  %2272 = vmatprep.subr.bf16.mxu0 0
  %2273 = vmatpush1.bf16.msra.mxu0 0
  %2274 = vmatprep.subr.bf16.mxu0 0
  %2275 = vmatpush1.bf16.msra.mxu0 0
  %2276 = vmatprep.subr.bf16.mxu0 0
  %2277 = vmatpush1.bf16.msra.mxu0 0
  %2278 = vmatprep.subr.bf16.mxu0 0
  %2279 = vmatpush1.bf16.msra.mxu0 0
  %2280 = vmatprep.subr.bf16.mxu0 0
  %2281 = vmatpush1.bf16.msra.mxu0 0
  %2282 = vmatprep.subr.bf16.mxu0 0
  %2283 = vmatpush1.bf16.msra.mxu0 0
  %2284 = vmatprep.subr.bf16.mxu0 0
  %2285 = vmatpush1.bf16.msra.mxu0 0
  %2286 = vmatprep.subr.bf16.mxu0 0
  %2287 = vmatpush1.bf16.msra.mxu0 0
  %2288 = vmatprep.subr.bf16.mxu0 0
  %2289 = vmatpush1.bf16.msra.mxu0 0
  %2290 = vmatprep.subr.bf16.mxu0 0
  %2291 = vmatpush1.bf16.msra.mxu0 0
  %2292 = vmatprep.subr.bf16.mxu0 0
  %2293 = vmatpush1.bf16.msra.mxu0 0
  %2294 = vmatprep.subr.bf16.mxu0 0
  %2295 = vmatpush1.bf16.msra.mxu0 0
  %2296 = vmatprep.subr.bf16.mxu0 0
  %2297 = vmatpush1.bf16.msra.mxu0 0
  %2298 = vmatprep.mubr.bf16.mxu0 0
  %2299 = vmatmul.mubr.bf16.gmra.mrb[0].mxu0 %v2264
  %v2300 = vpop.f32.mrb[0].mxu0
  %v2301 = vadd.f32 0.0, %v2300
  %v2302 = vpop.f32.mrb[0].mxu0
  %v2303 = vpop.f32.mrb[0].mxu0
  %v2304 = vpop.f32.mrb[0].mxu0
  %2305 = vdwg.mxu0
  %v2306 = vadd.f32 %v2249, %v2301
  %v2307 = vxor.u32 %v2306, 2147483648
  %v2308 = vmul.f32 %v2307, 1.442695
  %v2309 = vpow.pop %v2308
  %v2310 = vadd.f32 %v2309, 1.0
  %v2311 = vrcp.pop %v2310
  %v2312 = vmul.f32 1.0, %v2311
  %v2313 = vtanh.pop %v2306
  %2315 = vrot.lane.b32.xlu0 %v2246, 32
  %v2316 = vpop.permute.xlu0 %2315
  %v2318 = vmul.f32 %v2312, %v2316
  %2320 = vrot.lane.b32.xlu0 %v2313, 32
  %v2321 = vpop.permute.xlu0 %2320
  %v2323 = vmul.f32 %v2312, %v2321
  %2325 = vrot.lane.b32.xlu0 %v2323, 32
  %v2326 = vpop.permute.xlu0 %2325
  %v2328 = vadd.f32 %v2318, %v2326
  %v2329 = vtanh.pop %v2328
  %2331 = vrot.lane.b32.xlu0 %v2329, 32
  %v2332 = vpop.permute.xlu0 %2331
  %v2334 = vmul.f32 %v2312, %v2332
  %2336 = vrot.lane.b32.xlu0 %v2334, 64
  %v2337 = vpop.permute.xlu0 %2336
  %v2339 = vsel %vm794, %v2337, %v2245
  %2340 = vst.msk [vmem:[#allocation7] sm:$0xff] %vm45, %v2339
  %2342 = vrot.lane.b32.xlu0 %v2328, 96
  %v2343 = vpop.permute.xlu0 %2342
  %v2345 = vsel %vm794, %v2343, %v2246
  %2346 = vst.msk [vmem:[#allocation8] sm:$0xff] %vm45, %v2345
  %v2347 = vsel %vm794, %v2337, 0.0
  %2348 = vst.msk [vmem:[#allocation5] sm:$0xff] %vm808, %v2347
  %2350 = vrot.lane.b32.xlu0 %v2347, 112
  %v2351 = vpop.permute.xlu0 %2350
  %2353 = vst.msk [vmem:[%s814] sm:$0xff] %vm808, %v2351
  %v2354 = vld [vmem:[#allocation7] sm:$0xff]
  %v2355 = vld [vmem:[#allocation8] sm:$0xff]
  %v2356 = vld [vmem:[%s206] sm:$0xff]
  %v2357 = vld [vmem:[%s613] sm:$0xff]
  %v2358 = vadd.f32 %v2356, %v2357
  %v2359 = vpack.c.bf16 %v2354, %v2354
  %v2361 = vsel %vm45, %v2359, 0
  %2363 = vmatprep.subr.bf16.mxu0 0
  %2364 = vmatpush1.bf16.msra.mxu0 %v2259
  %2365 = vmatprep.subr.bf16.mxu0 0
  %2366 = vmatpush1.bf16.msra.mxu0 %v2260
  %2367 = vmatprep.subr.bf16.mxu0 0
  %2368 = vmatpush1.bf16.msra.mxu0 0
  %2369 = vmatprep.subr.bf16.mxu0 0
  %2370 = vmatpush1.bf16.msra.mxu0 0
  %2371 = vmatprep.subr.bf16.mxu0 0
  %2372 = vmatpush1.bf16.msra.mxu0 0
  %2373 = vmatprep.subr.bf16.mxu0 0
  %2374 = vmatpush1.bf16.msra.mxu0 0
  %2375 = vmatprep.subr.bf16.mxu0 0
  %2376 = vmatpush1.bf16.msra.mxu0 0
  %2377 = vmatprep.subr.bf16.mxu0 0
  %2378 = vmatpush1.bf16.msra.mxu0 0
  %2379 = vmatprep.subr.bf16.mxu0 0
  %2380 = vmatpush1.bf16.msra.mxu0 0
  %2381 = vmatprep.subr.bf16.mxu0 0
  %2382 = vmatpush1.bf16.msra.mxu0 0
  %2383 = vmatprep.subr.bf16.mxu0 0
  %2384 = vmatpush1.bf16.msra.mxu0 0
  %2385 = vmatprep.subr.bf16.mxu0 0
  %2386 = vmatpush1.bf16.msra.mxu0 0
  %2387 = vmatprep.subr.bf16.mxu0 0
  %2388 = vmatpush1.bf16.msra.mxu0 0
  %2389 = vmatprep.subr.bf16.mxu0 0
  %2390 = vmatpush1.bf16.msra.mxu0 0
  %2391 = vmatprep.subr.bf16.mxu0 0
  %2392 = vmatpush1.bf16.msra.mxu0 0
  %2393 = vmatprep.subr.bf16.mxu0 0
  %2394 = vmatpush1.bf16.msra.mxu0 0
  %2395 = vmatprep.mubr.bf16.mxu0 0
  %2396 = vmatmul.mubr.bf16.gmra.mrb[0].mxu0 %v2361
  %v2397 = vpop.f32.mrb[0].mxu0
  %v2398 = vadd.f32 0.0, %v2397
  %v2399 = vpop.f32.mrb[0].mxu0
  %v2400 = vpop.f32.mrb[0].mxu0
  %v2401 = vpop.f32.mrb[0].mxu0
  %2402 = vdwg.mxu0
  %v2403 = vadd.f32 %v2358, %v2398
  %v2404 = vxor.u32 %v2403, 2147483648
  %v2405 = vmul.f32 %v2404, 1.442695
  %v2406 = vpow.pop %v2405
  %v2407 = vadd.f32 %v2406, 1.0
  %v2408 = vrcp.pop %v2407
  %v2409 = vmul.f32 1.0, %v2408
  %v2410 = vtanh.pop %v2403
  %2412 = vrot.lane.b32.xlu0 %v2355, 32
  %v2413 = vpop.permute.xlu0 %2412
  %v2415 = vmul.f32 %v2409, %v2413
  %2417 = vrot.lane.b32.xlu0 %v2410, 32
  %v2418 = vpop.permute.xlu0 %2417
  %v2420 = vmul.f32 %v2409, %v2418
  %2422 = vrot.lane.b32.xlu0 %v2420, 32
  %v2423 = vpop.permute.xlu0 %2422
  %v2425 = vadd.f32 %v2415, %v2423
  %v2426 = vtanh.pop %v2425
  %2428 = vrot.lane.b32.xlu0 %v2426, 32
  %v2429 = vpop.permute.xlu0 %2428
  %v2431 = vmul.f32 %v2409, %v2429
  %2433 = vrot.lane.b32.xlu0 %v2431, 64
  %v2434 = vpop.permute.xlu0 %2433
  %v2436 = vsel %vm895, %v2434, %v2354
  %2437 = vst.msk [vmem:[#allocation7] sm:$0xff] %vm45, %v2436
  %2439 = vrot.lane.b32.xlu0 %v2425, 96
  %v2440 = vpop.permute.xlu0 %2439
  %v2442 = vsel %vm895, %v2440, %v2355
  %2443 = vst.msk [vmem:[#allocation8] sm:$0xff] %vm45, %v2442
  %v2444 = vsel %vm895, %v2434, 0.0
  %2445 = vst.msk [vmem:[%s909] sm:$0xff] %vm808, %v2444
  %2447 = vrot.lane.b32.xlu0 %v2444, 112
  %v2448 = vpop.permute.xlu0 %2447
  %2450 = vst.msk [vmem:[%s915] sm:$0xff] %vm808, %v2448
  %v2451 = vld [vmem:[#allocation7] sm:$0xff]
  %v2452 = vld [vmem:[#allocation8] sm:$0xff]
  %v2453 = vld [vmem:[%s287] sm:$0xff]
  %v2454 = vld [vmem:[%s532] sm:$0xff]
  %v2455 = vadd.f32 %v2453, %v2454
  %v2456 = vpack.c.bf16 %v2451, %v2451
  %v2458 = vsel %vm45, %v2456, 0
  %2460 = vmatprep.subr.bf16.mxu0 0
  %2461 = vmatpush1.bf16.msra.mxu0 %v2259
  %2462 = vmatprep.subr.bf16.mxu0 0
  %2463 = vmatpush1.bf16.msra.mxu0 %v2260
  %2464 = vmatprep.subr.bf16.mxu0 0
  %2465 = vmatpush1.bf16.msra.mxu0 0
  %2466 = vmatprep.subr.bf16.mxu0 0
  %2467 = vmatpush1.bf16.msra.mxu0 0
  %2468 = vmatprep.subr.bf16.mxu0 0
  %2469 = vmatpush1.bf16.msra.mxu0 0
  %2470 = vmatprep.subr.bf16.mxu0 0
  %2471 = vmatpush1.bf16.msra.mxu0 0
  %2472 = vmatprep.subr.bf16.mxu0 0
  %2473 = vmatpush1.bf16.msra.mxu0 0
  %2474 = vmatprep.subr.bf16.mxu0 0
  %2475 = vmatpush1.bf16.msra.mxu0 0
  %2476 = vmatprep.subr.bf16.mxu0 0
  %2477 = vmatpush1.bf16.msra.mxu0 0
  %2478 = vmatprep.subr.bf16.mxu0 0
  %2479 = vmatpush1.bf16.msra.mxu0 0
  %2480 = vmatprep.subr.bf16.mxu0 0
  %2481 = vmatpush1.bf16.msra.mxu0 0
  %2482 = vmatprep.subr.bf16.mxu0 0
  %2483 = vmatpush1.bf16.msra.mxu0 0
  %2484 = vmatprep.subr.bf16.mxu0 0
  %2485 = vmatpush1.bf16.msra.mxu0 0
  %2486 = vmatprep.subr.bf16.mxu0 0
  %2487 = vmatpush1.bf16.msra.mxu0 0
  %2488 = vmatprep.subr.bf16.mxu0 0
  %2489 = vmatpush1.bf16.msra.mxu0 0
  %2490 = vmatprep.subr.bf16.mxu0 0
  %2491 = vmatpush1.bf16.msra.mxu0 0
  %2492 = vmatprep.mubr.bf16.mxu0 0
  %2493 = vmatmul.mubr.bf16.gmra.mrb[0].mxu0 %v2458
  %v2494 = vpop.f32.mrb[0].mxu0
  %v2495 = vadd.f32 0.0, %v2494
  %v2496 = vpop.f32.mrb[0].mxu0
  %v2497 = vpop.f32.mrb[0].mxu0
  %v2498 = vpop.f32.mrb[0].mxu0
  %2499 = vdwg.mxu0
  %v2500 = vadd.f32 %v2455, %v2495
  %v2501 = vxor.u32 %v2500, 2147483648
  %v2502 = vmul.f32 %v2501, 1.442695
  %v2503 = vpow.pop %v2502
  %v2504 = vadd.f32 %v2503, 1.0
  %v2505 = vrcp.pop %v2504
  %v2506 = vmul.f32 1.0, %v2505
  %v2507 = vtanh.pop %v2500
  %2509 = vrot.lane.b32.xlu0 %v2452, 32
  %v2510 = vpop.permute.xlu0 %2509
  %v2512 = vmul.f32 %v2506, %v2510
  %2514 = vrot.lane.b32.xlu0 %v2507, 32
  %v2515 = vpop.permute.xlu0 %2514
  %v2517 = vmul.f32 %v2506, %v2515
  %2519 = vrot.lane.b32.xlu0 %v2517, 32
  %v2520 = vpop.permute.xlu0 %2519
  %v2522 = vadd.f32 %v2512, %v2520
  %v2523 = vtanh.pop %v2522
  %2525 = vrot.lane.b32.xlu0 %v2523, 32
  %v2526 = vpop.permute.xlu0 %2525
  %v2528 = vmul.f32 %v2506, %v2526
  %2530 = vrot.lane.b32.xlu0 %v2528, 64
  %v2531 = vpop.permute.xlu0 %2530
  %v2533 = vsel %vm996, %v2531, %v2451
  %2534 = vst.msk [vmem:[#allocation7] sm:$0xff] %vm45, %v2533
  %2536 = vrot.lane.b32.xlu0 %v2522, 96
  %v2537 = vpop.permute.xlu0 %2536
  %v2539 = vsel %vm996, %v2537, %v2452
  %2540 = vst.msk [vmem:[#allocation8] sm:$0xff] %vm45, %v2539
  %v2541 = vsel %vm996, %v2531, 0.0
  %2542 = vst.msk [vmem:[%s1010] sm:$0xff] %vm808, %v2541
  %2544 = vrot.lane.b32.xlu0 %v2541, 112
  %v2545 = vpop.permute.xlu0 %2544
  %2547 = vst.msk [vmem:[%s1016] sm:$0xff] %vm808, %v2545
  %v2548 = vld [vmem:[#allocation7] sm:$0xff]
  %v2549 = vld [vmem:[#allocation8] sm:$0xff]
  %v2550 = vld [vmem:[%s368] sm:$0xff]
  %v2551 = vld [vmem:[%s451] sm:$0xff]
  %v2552 = vadd.f32 %v2550, %v2551
  %v2553 = vpack.c.bf16 %v2548, %v2548
  %v2555 = vsel %vm45, %v2553, 0
  %2557 = vmatprep.subr.bf16.mxu0 0
  %2558 = vmatpush1.bf16.msra.mxu0 %v2259
  %2559 = vmatprep.subr.bf16.mxu0 0
  %2560 = vmatpush1.bf16.msra.mxu0 %v2260
  %2561 = vmatprep.subr.bf16.mxu0 0
  %2562 = vmatpush1.bf16.msra.mxu0 0
  %2563 = vmatprep.subr.bf16.mxu0 0
  %2564 = vmatpush1.bf16.msra.mxu0 0
  %2565 = vmatprep.subr.bf16.mxu0 0
  %2566 = vmatpush1.bf16.msra.mxu0 0
  %2567 = vmatprep.subr.bf16.mxu0 0
  %2568 = vmatpush1.bf16.msra.mxu0 0
  %2569 = vmatprep.subr.bf16.mxu0 0
  %2570 = vmatpush1.bf16.msra.mxu0 0
  %2571 = vmatprep.subr.bf16.mxu0 0
  %2572 = vmatpush1.bf16.msra.mxu0 0
  %2573 = vmatprep.subr.bf16.mxu0 0
  %2574 = vmatpush1.bf16.msra.mxu0 0
  %2575 = vmatprep.subr.bf16.mxu0 0
  %2576 = vmatpush1.bf16.msra.mxu0 0
  %2577 = vmatprep.subr.bf16.mxu0 0
  %2578 = vmatpush1.bf16.msra.mxu0 0
  %2579 = vmatprep.subr.bf16.mxu0 0
  %2580 = vmatpush1.bf16.msra.mxu0 0
  %2581 = vmatprep.subr.bf16.mxu0 0
  %2582 = vmatpush1.bf16.msra.mxu0 0
  %2583 = vmatprep.subr.bf16.mxu0 0
  %2584 = vmatpush1.bf16.msra.mxu0 0
  %2585 = vmatprep.subr.bf16.mxu0 0
  %2586 = vmatpush1.bf16.msra.mxu0 0
  %2587 = vmatprep.subr.bf16.mxu0 0
  %2588 = vmatpush1.bf16.msra.mxu0 0
  %2589 = vmatprep.mubr.bf16.mxu0 0
  %2590 = vmatmul.mubr.bf16.gmra.mrb[0].mxu0 %v2555
  %v2591 = vpop.f32.mrb[0].mxu0
  %v2592 = vadd.f32 0.0, %v2591
  %v2593 = vpop.f32.mrb[0].mxu0
  %v2594 = vpop.f32.mrb[0].mxu0
  %v2595 = vpop.f32.mrb[0].mxu0
  %2596 = vdwg.mxu0
  %v2597 = vadd.f32 %v2552, %v2592
  %v2598 = vxor.u32 %v2597, 2147483648
  %v2599 = vmul.f32 %v2598, 1.442695
  %v2600 = vpow.pop %v2599
  %v2601 = vadd.f32 %v2600, 1.0
  %v2602 = vrcp.pop %v2601
  %v2603 = vmul.f32 1.0, %v2602
  %v2604 = vtanh.pop %v2597
  %2606 = vrot.lane.b32.xlu0 %v2549, 32
  %v2607 = vpop.permute.xlu0 %2606
  %v2609 = vmul.f32 %v2603, %v2607
  %2611 = vrot.lane.b32.xlu0 %v2604, 32
  %v2612 = vpop.permute.xlu0 %2611
  %v2614 = vmul.f32 %v2603, %v2612
  %2616 = vrot.lane.b32.xlu0 %v2614, 32
  %v2617 = vpop.permute.xlu0 %2616
  %v2619 = vadd.f32 %v2609, %v2617
  %v2620 = vtanh.pop %v2619
  %2622 = vrot.lane.b32.xlu0 %v2620, 32
  %v2623 = vpop.permute.xlu0 %2622
  %v2625 = vmul.f32 %v2603, %v2623
  %2627 = vrot.lane.b32.xlu0 %v2625, 64
  %v2628 = vpop.permute.xlu0 %2627
  %v2630 = vsel %vm1097, %v2628, %v2548
  %2631 = vst.msk [vmem:[#allocation7] sm:$0xff] %vm45, %v2630
  %2633 = vrot.lane.b32.xlu0 %v2619, 96
  %v2634 = vpop.permute.xlu0 %2633
  %v2636 = vsel %vm1097, %v2634, %v2549
  %2637 = vst.msk [vmem:[#allocation8] sm:$0xff] %vm45, %v2636
  %v2638 = vsel %vm1097, %v2628, 0.0
  %2639 = vst.msk [vmem:[%s1111] sm:$0xff] %vm808, %v2638
  %2641 = vrot.lane.b32.xlu0 %v2638, 112
  %v2642 = vpop.permute.xlu0 %2641
  %2644 = vst.msk [vmem:[%s1117] sm:$0xff] %vm808, %v2642
  %v2645 = vld [vmem:[#allocation7] sm:$0xff]
  %v2646 = vld [vmem:[#allocation8] sm:$0xff]
  %v2647 = vld [vmem:[%s449] sm:$0xff]
  %v2648 = vld [vmem:[%s370] sm:$0xff]
  %v2649 = vadd.f32 %v2647, %v2648
  %v2650 = vpack.c.bf16 %v2645, %v2645
  %v2652 = vsel %vm45, %v2650, 0
  %2654 = vmatprep.subr.bf16.mxu0 0
  %2655 = vmatpush1.bf16.msra.mxu0 %v2259
  %2656 = vmatprep.subr.bf16.mxu0 0
  %2657 = vmatpush1.bf16.msra.mxu0 %v2260
  %2658 = vmatprep.subr.bf16.mxu0 0
  %2659 = vmatpush1.bf16.msra.mxu0 0
  %2660 = vmatprep.subr.bf16.mxu0 0
  %2661 = vmatpush1.bf16.msra.mxu0 0
  %2662 = vmatprep.subr.bf16.mxu0 0
  %2663 = vmatpush1.bf16.msra.mxu0 0
  %2664 = vmatprep.subr.bf16.mxu0 0
  %2665 = vmatpush1.bf16.msra.mxu0 0
  %2666 = vmatprep.subr.bf16.mxu0 0
  %2667 = vmatpush1.bf16.msra.mxu0 0
  %2668 = vmatprep.subr.bf16.mxu0 0
  %2669 = vmatpush1.bf16.msra.mxu0 0
  %2670 = vmatprep.subr.bf16.mxu0 0
  %2671 = vmatpush1.bf16.msra.mxu0 0
  %2672 = vmatprep.subr.bf16.mxu0 0
  %2673 = vmatpush1.bf16.msra.mxu0 0
  %2674 = vmatprep.subr.bf16.mxu0 0
  %2675 = vmatpush1.bf16.msra.mxu0 0
  %2676 = vmatprep.subr.bf16.mxu0 0
  %2677 = vmatpush1.bf16.msra.mxu0 0
  %2678 = vmatprep.subr.bf16.mxu0 0
  %2679 = vmatpush1.bf16.msra.mxu0 0
  %2680 = vmatprep.subr.bf16.mxu0 0
  %2681 = vmatpush1.bf16.msra.mxu0 0
  %2682 = vmatprep.subr.bf16.mxu0 0
  %2683 = vmatpush1.bf16.msra.mxu0 0
  %2684 = vmatprep.subr.bf16.mxu0 0
  %2685 = vmatpush1.bf16.msra.mxu0 0
  %2686 = vmatprep.mubr.bf16.mxu0 0
  %2687 = vmatmul.mubr.bf16.gmra.mrb[0].mxu0 %v2652
  %v2688 = vpop.f32.mrb[0].mxu0
  %v2689 = vadd.f32 0.0, %v2688
  %v2690 = vpop.f32.mrb[0].mxu0
  %v2691 = vpop.f32.mrb[0].mxu0
  %v2692 = vpop.f32.mrb[0].mxu0
  %2693 = vdwg.mxu0
  %v2694 = vadd.f32 %v2649, %v2689
  %v2695 = vxor.u32 %v2694, 2147483648
  %v2696 = vmul.f32 %v2695, 1.442695
  %v2697 = vpow.pop %v2696
  %v2698 = vadd.f32 %v2697, 1.0
  %v2699 = vrcp.pop %v2698
  %v2700 = vmul.f32 1.0, %v2699
  %v2701 = vtanh.pop %v2694
  %2703 = vrot.lane.b32.xlu0 %v2646, 32
  %v2704 = vpop.permute.xlu0 %2703
  %v2706 = vmul.f32 %v2700, %v2704
  %2708 = vrot.lane.b32.xlu0 %v2701, 32
  %v2709 = vpop.permute.xlu0 %2708
  %v2711 = vmul.f32 %v2700, %v2709
  %2713 = vrot.lane.b32.xlu0 %v2711, 32
  %v2714 = vpop.permute.xlu0 %2713
  %v2716 = vadd.f32 %v2706, %v2714
  %v2717 = vtanh.pop %v2716
  %2719 = vrot.lane.b32.xlu0 %v2717, 32
  %v2720 = vpop.permute.xlu0 %2719
  %v2722 = vmul.f32 %v2700, %v2720
  %2724 = vrot.lane.b32.xlu0 %v2722, 64
  %v2725 = vpop.permute.xlu0 %2724
  %v2727 = vsel %vm1198, %v2725, %v2645
  %2728 = vst.msk [vmem:[#allocation7] sm:$0xff] %vm45, %v2727
  %2730 = vrot.lane.b32.xlu0 %v2716, 96
  %v2731 = vpop.permute.xlu0 %2730
  %v2733 = vsel %vm1198, %v2731, %v2646
  %2734 = vst.msk [vmem:[#allocation8] sm:$0xff] %vm45, %v2733
  %v2735 = vsel %vm1198, %v2725, 0.0
  %2736 = vst.msk [vmem:[%s1212] sm:$0xff] %vm808, %v2735
  %2738 = vrot.lane.b32.xlu0 %v2735, 112
  %v2739 = vpop.permute.xlu0 %2738
  %2741 = vst.msk [vmem:[%s1218] sm:$0xff] %vm808, %v2739
  %v2742 = vld [vmem:[#allocation7] sm:$0xff]
  %v2743 = vld [vmem:[#allocation8] sm:$0xff]
  %v2744 = vld [vmem:[%s530] sm:$0xff]
  %v2745 = vld [vmem:[%s289] sm:$0xff]
  %v2746 = vadd.f32 %v2744, %v2745
  %v2747 = vpack.c.bf16 %v2742, %v2742
  %v2749 = vsel %vm45, %v2747, 0
  %2751 = vmatprep.subr.bf16.mxu0 0
  %2752 = vmatpush1.bf16.msra.mxu0 %v2259
  %2753 = vmatprep.subr.bf16.mxu0 0
  %2754 = vmatpush1.bf16.msra.mxu0 %v2260
  %2755 = vmatprep.subr.bf16.mxu0 0
  %2756 = vmatpush1.bf16.msra.mxu0 0
  %2757 = vmatprep.subr.bf16.mxu0 0
  %2758 = vmatpush1.bf16.msra.mxu0 0
  %2759 = vmatprep.subr.bf16.mxu0 0
  %2760 = vmatpush1.bf16.msra.mxu0 0
  %2761 = vmatprep.subr.bf16.mxu0 0
  %2762 = vmatpush1.bf16.msra.mxu0 0
  %2763 = vmatprep.subr.bf16.mxu0 0
  %2764 = vmatpush1.bf16.msra.mxu0 0
  %2765 = vmatprep.subr.bf16.mxu0 0
  %2766 = vmatpush1.bf16.msra.mxu0 0
  %2767 = vmatprep.subr.bf16.mxu0 0
  %2768 = vmatpush1.bf16.msra.mxu0 0
  %2769 = vmatprep.subr.bf16.mxu0 0
  %2770 = vmatpush1.bf16.msra.mxu0 0
  %2771 = vmatprep.subr.bf16.mxu0 0
  %2772 = vmatpush1.bf16.msra.mxu0 0
  %2773 = vmatprep.subr.bf16.mxu0 0
  %2774 = vmatpush1.bf16.msra.mxu0 0
  %2775 = vmatprep.subr.bf16.mxu0 0
  %2776 = vmatpush1.bf16.msra.mxu0 0
  %2777 = vmatprep.subr.bf16.mxu0 0
  %2778 = vmatpush1.bf16.msra.mxu0 0
  %2779 = vmatprep.subr.bf16.mxu0 0
  %2780 = vmatpush1.bf16.msra.mxu0 0
  %2781 = vmatprep.subr.bf16.mxu0 0
  %2782 = vmatpush1.bf16.msra.mxu0 0
  %2783 = vmatprep.mubr.bf16.mxu0 0
  %2784 = vmatmul.mubr.bf16.gmra.mrb[0].mxu0 %v2749
  %v2785 = vpop.f32.mrb[0].mxu0
  %v2786 = vadd.f32 0.0, %v2785
  %v2787 = vpop.f32.mrb[0].mxu0
  %v2788 = vpop.f32.mrb[0].mxu0
  %v2789 = vpop.f32.mrb[0].mxu0
  %2790 = vdwg.mxu0
  %v2791 = vadd.f32 %v2746, %v2786
  %v2792 = vxor.u32 %v2791, 2147483648
  %v2793 = vmul.f32 %v2792, 1.442695
  %v2794 = vpow.pop %v2793
  %v2795 = vadd.f32 %v2794, 1.0
  %v2796 = vrcp.pop %v2795
  %v2797 = vmul.f32 1.0, %v2796
  %v2798 = vtanh.pop %v2791
  %2800 = vrot.lane.b32.xlu0 %v2743, 32
  %v2801 = vpop.permute.xlu0 %2800
  %v2803 = vmul.f32 %v2797, %v2801
  %2805 = vrot.lane.b32.xlu0 %v2798, 32
  %v2806 = vpop.permute.xlu0 %2805
  %v2808 = vmul.f32 %v2797, %v2806
  %2810 = vrot.lane.b32.xlu0 %v2808, 32
  %v2811 = vpop.permute.xlu0 %2810
  %v2813 = vadd.f32 %v2803, %v2811
  %v2814 = vtanh.pop %v2813
  %2816 = vrot.lane.b32.xlu0 %v2814, 32
  %v2817 = vpop.permute.xlu0 %2816
  %v2819 = vmul.f32 %v2797, %v2817
  %2821 = vrot.lane.b32.xlu0 %v2819, 64
  %v2822 = vpop.permute.xlu0 %2821
  %v2824 = vsel %vm1299, %v2822, %v2742
  %2825 = vst.msk [vmem:[#allocation7] sm:$0xff] %vm45, %v2824
  %2827 = vrot.lane.b32.xlu0 %v2813, 96
  %v2828 = vpop.permute.xlu0 %2827
  %v2830 = vsel %vm1299, %v2828, %v2743
  %2831 = vst.msk [vmem:[#allocation8] sm:$0xff] %vm45, %v2830
  %v2832 = vsel %vm1299, %v2822, 0.0
  %2833 = vst.msk [vmem:[%s1313] sm:$0xff] %vm808, %v2832
  %2835 = vrot.lane.b32.xlu0 %v2832, 112
  %v2836 = vpop.permute.xlu0 %2835
  %2838 = vst.msk [vmem:[%s1319] sm:$0xff] %vm808, %v2836
  %v2839 = vld [vmem:[#allocation7] sm:$0xff]
  %v2840 = vld [vmem:[#allocation8] sm:$0xff]
  %v2841 = vld [vmem:[%s611] sm:$0xff]
  %v2842 = vld [vmem:[%s208] sm:$0xff]
  %v2843 = vadd.f32 %v2841, %v2842
  %v2844 = vpack.c.bf16 %v2839, %v2839
  %v2846 = vsel %vm45, %v2844, 0
  %2848 = vmatprep.subr.bf16.mxu0 0
  %2849 = vmatpush1.bf16.msra.mxu0 %v2259
  %2850 = vmatprep.subr.bf16.mxu0 0
  %2851 = vmatpush1.bf16.msra.mxu0 %v2260
  %2852 = vmatprep.subr.bf16.mxu0 0
  %2853 = vmatpush1.bf16.msra.mxu0 0
  %2854 = vmatprep.subr.bf16.mxu0 0
  %2855 = vmatpush1.bf16.msra.mxu0 0
  %2856 = vmatprep.subr.bf16.mxu0 0
  %2857 = vmatpush1.bf16.msra.mxu0 0
  %2858 = vmatprep.subr.bf16.mxu0 0
  %2859 = vmatpush1.bf16.msra.mxu0 0
  %2860 = vmatprep.subr.bf16.mxu0 0
  %2861 = vmatpush1.bf16.msra.mxu0 0
  %2862 = vmatprep.subr.bf16.mxu0 0
  %2863 = vmatpush1.bf16.msra.mxu0 0
  %2864 = vmatprep.subr.bf16.mxu0 0
  %2865 = vmatpush1.bf16.msra.mxu0 0
  %2866 = vmatprep.subr.bf16.mxu0 0
  %2867 = vmatpush1.bf16.msra.mxu0 0
  %2868 = vmatprep.subr.bf16.mxu0 0
  %2869 = vmatpush1.bf16.msra.mxu0 0
  %2870 = vmatprep.subr.bf16.mxu0 0
  %2871 = vmatpush1.bf16.msra.mxu0 0
  %2872 = vmatprep.subr.bf16.mxu0 0
  %2873 = vmatpush1.bf16.msra.mxu0 0
  %2874 = vmatprep.subr.bf16.mxu0 0
  %2875 = vmatpush1.bf16.msra.mxu0 0
  %2876 = vmatprep.subr.bf16.mxu0 0
  %2877 = vmatpush1.bf16.msra.mxu0 0
  %2878 = vmatprep.subr.bf16.mxu0 0
  %2879 = vmatpush1.bf16.msra.mxu0 0
  %2880 = vmatprep.mubr.bf16.mxu0 0
  %2881 = vmatmul.mubr.bf16.gmra.mrb[0].mxu0 %v2846
  %v2882 = vpop.f32.mrb[0].mxu0
  %v2883 = vadd.f32 0.0, %v2882
  %v2884 = vpop.f32.mrb[0].mxu0
  %v2885 = vpop.f32.mrb[0].mxu0
  %v2886 = vpop.f32.mrb[0].mxu0
  %2887 = vdwg.mxu0
  %v2888 = vadd.f32 %v2843, %v2883
  %v2889 = vxor.u32 %v2888, 2147483648
  %v2890 = vmul.f32 %v2889, 1.442695
  %v2891 = vpow.pop %v2890
  %v2892 = vadd.f32 %v2891, 1.0
  %v2893 = vrcp.pop %v2892
  %v2894 = vmul.f32 1.0, %v2893
  %v2895 = vtanh.pop %v2888
  %2897 = vrot.lane.b32.xlu0 %v2840, 32
  %v2898 = vpop.permute.xlu0 %2897
  %v2900 = vmul.f32 %v2894, %v2898
  %2902 = vrot.lane.b32.xlu0 %v2895, 32
  %v2903 = vpop.permute.xlu0 %2902
  %v2905 = vmul.f32 %v2894, %v2903
  %2907 = vrot.lane.b32.xlu0 %v2905, 32
  %v2908 = vpop.permute.xlu0 %2907
  %v2910 = vadd.f32 %v2900, %v2908
  %v2911 = vtanh.pop %v2910
  %2913 = vrot.lane.b32.xlu0 %v2911, 32
  %v2914 = vpop.permute.xlu0 %2913
  %v2916 = vmul.f32 %v2894, %v2914
  %2918 = vrot.lane.b32.xlu0 %v2916, 64
  %v2919 = vpop.permute.xlu0 %2918
  %v2921 = vsel %vm1400, %v2919, %v2839
  %2922 = vst.msk [vmem:[#allocation7] sm:$0xff] %vm45, %v2921
  %2924 = vrot.lane.b32.xlu0 %v2910, 96
  %v2925 = vpop.permute.xlu0 %2924
  %v2927 = vsel %vm1400, %v2925, %v2840
  %2928 = vst.msk [vmem:[#allocation8] sm:$0xff] %vm45, %v2927
  %v2929 = vsel %vm1400, %v2919, 0.0
  %2930 = vst.msk [vmem:[%s1414] sm:$0xff] %vm808, %v2929
  %2932 = vrot.lane.b32.xlu0 %v2929, 112
  %v2933 = vpop.permute.xlu0 %2932
  %2935 = vst.msk [vmem:[%s1420] sm:$0xff] %vm808, %v2933
  %v2936 = vld [vmem:[#allocation7] sm:$0xff]
  %v2937 = vld [vmem:[#allocation8] sm:$0xff]
  %v2938 = vld [vmem:[%s692] sm:$0xff]
  %v2939 = vld [vmem:[#allocation3] sm:$0xff]
  %v2940 = vadd.f32 %v2938, %v2939
  %v2941 = vpack.c.bf16 %v2936, %v2936
  %v2943 = vsel %vm45, %v2941, 0
  %2945 = vmatprep.subr.bf16.mxu0 0
  %2946 = vmatpush1.bf16.msra.mxu0 %v2259
  %2947 = vmatprep.subr.bf16.mxu0 0
  %2948 = vmatpush1.bf16.msra.mxu0 %v2260
  %2949 = vmatprep.subr.bf16.mxu0 0
  %2950 = vmatpush1.bf16.msra.mxu0 0
  %2951 = vmatprep.subr.bf16.mxu0 0
  %2952 = vmatpush1.bf16.msra.mxu0 0
  %2953 = vmatprep.subr.bf16.mxu0 0
  %2954 = vmatpush1.bf16.msra.mxu0 0
  %2955 = vmatprep.subr.bf16.mxu0 0
  %2956 = vmatpush1.bf16.msra.mxu0 0
  %2957 = vmatprep.subr.bf16.mxu0 0
  %2958 = vmatpush1.bf16.msra.mxu0 0
  %2959 = vmatprep.subr.bf16.mxu0 0
  %2960 = vmatpush1.bf16.msra.mxu0 0
  %2961 = vmatprep.subr.bf16.mxu0 0
  %2962 = vmatpush1.bf16.msra.mxu0 0
  %2963 = vmatprep.subr.bf16.mxu0 0
  %2964 = vmatpush1.bf16.msra.mxu0 0
  %2965 = vmatprep.subr.bf16.mxu0 0
  %2966 = vmatpush1.bf16.msra.mxu0 0
  %2967 = vmatprep.subr.bf16.mxu0 0
  %2968 = vmatpush1.bf16.msra.mxu0 0
  %2969 = vmatprep.subr.bf16.mxu0 0
  %2970 = vmatpush1.bf16.msra.mxu0 0
  %2971 = vmatprep.subr.bf16.mxu0 0
  %2972 = vmatpush1.bf16.msra.mxu0 0
  %2973 = vmatprep.subr.bf16.mxu0 0
  %2974 = vmatpush1.bf16.msra.mxu0 0
  %2975 = vmatprep.subr.bf16.mxu0 0
  %2976 = vmatpush1.bf16.msra.mxu0 0
  %2977 = vmatprep.mubr.bf16.mxu0 0
  %2978 = vmatmul.mubr.bf16.gmra.mrb[0].mxu0 %v2943
  %v2979 = vpop.f32.mrb[0].mxu0
  %v2980 = vadd.f32 0.0, %v2979
  %v2981 = vpop.f32.mrb[0].mxu0
  %v2982 = vpop.f32.mrb[0].mxu0
  %v2983 = vpop.f32.mrb[0].mxu0
  %2984 = vdwg.mxu0
  %v2985 = vadd.f32 %v2940, %v2980
  %v2986 = vxor.u32 %v2985, 2147483648
  %v2987 = vmul.f32 %v2986, 1.442695
  %v2988 = vpow.pop %v2987
  %v2989 = vadd.f32 %v2988, 1.0
  %v2990 = vrcp.pop %v2989
  %v2991 = vmul.f32 1.0, %v2990
  %v2992 = vtanh.pop %v2985
  %2994 = vrot.lane.b32.xlu0 %v2937, 32
  %v2995 = vpop.permute.xlu0 %2994
  %v2997 = vmul.f32 %v2991, %v2995
  %2999 = vrot.lane.b32.xlu0 %v2992, 32
  %v3000 = vpop.permute.xlu0 %2999
  %v3002 = vmul.f32 %v2991, %v3000
  %3004 = vrot.lane.b32.xlu0 %v3002, 32
  %v3005 = vpop.permute.xlu0 %3004
  %v3007 = vadd.f32 %v2997, %v3005
  %v3008 = vtanh.pop %v3007
  %3010 = vrot.lane.b32.xlu0 %v3008, 32
  %v3011 = vpop.permute.xlu0 %3010
  %v3013 = vmul.f32 %v2991, %v3011
  %3015 = vrot.lane.b32.xlu0 %v3013, 64
  %v3016 = vpop.permute.xlu0 %3015
  %v3018 = vsel %vm1501, %v3016, %v2936
  %3019 = vst.msk [vmem:[#allocation7] sm:$0xff] %vm45, %v3018
  %3021 = vrot.lane.b32.xlu0 %v3007, 96
  %v3022 = vpop.permute.xlu0 %3021
  %v3024 = vsel %vm1501, %v3022, %v2937
  %3025 = vst.msk [vmem:[#allocation8] sm:$0xff] %vm45, %v3024
  %v3026 = vsel %vm1501, %v3016, 0.0
  %3027 = vst.msk [vmem:[%s1515] sm:$0xff] %vm808, %v3026
  %3029 = vrot.lane.b32.xlu0 %v3026, 112
  %v3030 = vpop.permute.xlu0 %3029
  %3032 = vst.msk [vmem:[#allocation6] sm:$0xff] %vm808, %v3030
  %v3033 = vld [vmem:[#allocation5] sm:$0xff]
  %v3034 = vld [vmem:[#allocation5 + $0x8] sm:$0xff]
  %v3035 = vld [vmem:[#allocation5 + $0x10] sm:$0xff]
  %v3036 = vld [vmem:[#allocation5 + $0x18] sm:$0xff]
  %v3037 = vld [vmem:[#allocation5 + $0x20] sm:$0xff]
  %v3038 = vld [vmem:[#allocation5 + $0x28] sm:$0xff]
  %v3039 = vld [vmem:[#allocation5 + $0x30] sm:$0xff]
  %v3040 = vld [vmem:[#allocation5 + $0x38] sm:$0xff]
  %v3041 = vld [vmem:[#allocation6] sm:$0xff]
  %v3042 = vld [vmem:[#allocation6 + $0x8] sm:$0xff]
  %v3043 = vld [vmem:[#allocation6 + $0x10] sm:$0xff]
  %v3044 = vld [vmem:[#allocation6 + $0x18] sm:$0xff]
  %v3045 = vld [vmem:[#allocation6 + $0x20] sm:$0xff]
  %v3046 = vld [vmem:[#allocation6 + $0x28] sm:$0xff]
  %v3047 = vld [vmem:[#allocation6 + $0x30] sm:$0xff]
  %v3048 = vld [vmem:[#allocation6 + $0x38] sm:$0xff]
  %3057 = vrot.lane.b32.xlu0 %v3041, 16
  %v3058 = vpop.permute.xlu0 %3057
  %3059 = vrot.lane.b32.xlu0 %v3042, 16
  %v3060 = vpop.permute.xlu0 %3059
  %3061 = vrot.lane.b32.xlu0 %v3043, 16
  %v3062 = vpop.permute.xlu0 %3061
  %3063 = vrot.lane.b32.xlu0 %v3044, 16
  %v3064 = vpop.permute.xlu0 %3063
  %3065 = vrot.lane.b32.xlu0 %v3045, 16
  %v3066 = vpop.permute.xlu0 %3065
  %3067 = vrot.lane.b32.xlu0 %v3046, 16
  %v3068 = vpop.permute.xlu0 %3067
  %3069 = vrot.lane.b32.xlu0 %v3047, 16
  %v3070 = vpop.permute.xlu0 %3069
  %3071 = vrot.lane.b32.xlu0 %v3048, 16
  %v3072 = vpop.permute.xlu0 %3071
  %v3081 = vsel %vm808, %v3033, %v3058
  %v3082 = vsel %vm808, %v3034, %v3060
  %v3083 = vsel %vm808, %v3035, %v3062
  %v3084 = vsel %vm808, %v3036, %v3064
  %v3085 = vsel %vm808, %v3037, %v3066
  %v3086 = vsel %vm808, %v3038, %v3068
  %v3087 = vsel %vm808, %v3039, %v3070
  %v3088 = vsel %vm808, %v3040, %v3072
  %3089 = vst.msk [vmem:[%s7] sm:$0xff] %vm45, %v3081
  %3090 = vst.msk [vmem:[%s7 + $0x8] sm:$0xff] %vm45, %v3082
  %3091 = vst.msk [vmem:[%s7 + $0x10] sm:$0xff] %vm45, %v3083
  %3092 = vst.msk [vmem:[%s7 + $0x18] sm:$0xff] %vm45, %v3084
  %3093 = vst.msk [vmem:[%s7 + $0x20] sm:$0xff] %vm45, %v3085
  %3094 = vst.msk [vmem:[%s7 + $0x28] sm:$0xff] %vm45, %v3086
  %3095 = vst.msk [vmem:[%s7 + $0x30] sm:$0xff] %vm45, %v3087
  %3096 = vst.msk [vmem:[%s7 + $0x38] sm:$0xff] %vm45, %v3088
  // Predicated region
  $region30: #{_device_forward.1} parent=0 // pred_check
    _
  $region31: #{_device_forward.1} parent=0 // pred_check_branch
    %3098 = sbr.rel (0) target = $region33
  $region32: #{_device_forward.1} parent=0 // pred_region
    _
  $region33: #{_device_forward.1} parent=0 // pred_fallthru
    _
  // Predicated region
  $region34: #{_device_forward.1} parent=0 // pred_check
    _
  $region35: #{_device_forward.1} parent=0 // pred_check_branch
    %3100 = sbr.rel (0) target = $region37
  $region36: #{_device_forward.1} parent=0 // pred_region
    _
  $region37: #{_device_forward.1} parent=0 // pred_fallthru
    _

</llo_original>
